<compile_context>
chip_gen: v7x
topology: tpu7x:2x2x1
jax: 0.10.0
libtpu: 0.0.40
codegen_flags: <defaults>
</compile_context>

<pallas_src>
import functools

import jax
import jax.numpy as jnp
from jax import lax
from jax.experimental import pallas as pl
from jax.experimental.pallas import tpu as pltpu


# ---------------------------------------------------------------------------
# Kernels
# ---------------------------------------------------------------------------
def _make_conv_stats_kernel(c_in, c_out, ho, wo, stride):
    """3x3 conv (pad=1, no bias) + per-image BN partial stats, one image/step."""
    p = ho * wo

    def kernel(xp_ref, w_ref, y_ref, sum_ref, ssq_ref):
        # xp_ref : (1, c_in, H+2, W+2)  bf16, ReLU already applied, zero-padded
        # w_ref  : (9, c_out, c_in)     bf16, tap-major (t = kh*3 + kw)
        # y_ref  : (1, c_out, ho*wo)    bf16 conv output (lane dim = ho*wo)
        # sum_ref/ssq_ref : (1, c_out, 1) f32 per-image partial stats
        acc = jnp.zeros((c_out, p), jnp.float32)
        for kh in range(3):
            for kw in range(3):
                if stride == 1:
                    view = xp_ref[0, :, pl.ds(kh, ho), pl.ds(kw, wo)]
                else:
                    view = xp_ref[0, :, pl.ds(kh, ho, stride),
                                  pl.ds(kw, wo, stride)]
                view = view.reshape(c_in, p)                      # (c_in, P)
                acc = acc + jnp.dot(w_ref[kh * 3 + kw], view,
                                    preferred_element_type=jnp.float32)
        y_ref[0] = acc.astype(y_ref.dtype)
        # Stats from the f32 accumulator (before the bf16 cast).
        sum_ref[0] = jnp.sum(acc, axis=1, keepdims=True)
        ssq_ref[0] = jnp.sum(acc * acc, axis=1, keepdims=True)

    return kernel


def _bn_apply_kernel(y_ref, scale_ref, shift_ref, o_ref):
    # y: (1, C, P) bf16 ; scale/shift: (1, C, 1) f32 ; o: (1, C, P) f32
    o_ref[...] = y_ref[...].astype(jnp.float32) * scale_ref[...] + shift_ref[...]


# ---------------------------------------------------------------------------
# Wrapper
# ---------------------------------------------------------------------------
@functools.partial(jax.jit, static_argnames=("stride", "eps"))
def preprocess_block(x_nchw, conv_w, gamma, beta, *, stride=1, eps=1e-5):
    """bn(conv3x3(relu(x))), training-mode BN (batch stats), bias-free conv."""
    x_nchw = x_nchw.astype(jnp.float32)
    N, C_in, H, W = x_nchw.shape
    C_out = conv_w.shape[0]
    Ho = (H + 2 - 3) // stride + 1
    Wo = (W + 2 - 3) // stride + 1
    P = Ho * Wo
    Hin, Win = H + 2, W + 2
    M = N * P

    # ReLU once + bf16 cast + spatial zero-pad (XLA-fused elementwise glue).
    # Layout stays NCHW: no input-side transpose.
    xp = jnp.pad(jnp.maximum(x_nchw, 0.0).astype(jnp.bfloat16),
                 ((0, 0), (0, 0), (1, 1), (1, 1)))

    # (C_out, C_in, 3, 3) -> (9, C_out, C_in), tap-major (t = kh*3 + kw).
    wt = jnp.transpose(conv_w.astype(jnp.float32), (2, 3, 0, 1))
    wt = wt.reshape(9, C_out, C_in).astype(jnp.bfloat16)

    conv_kernel = _make_conv_stats_kernel(C_in, C_out, Ho, Wo, stride)

    bytes_accessed = (N * C_in * Hin * Win * 2        # xp (bf16)
                      + 9 * C_out * C_in * 2          # weights (bf16)
                      + N * C_out * P * 2             # y (bf16)
                      + 2 * N * C_out * 4)            # stats (f32)

    # ---- kernel 1: direct 9-tap conv + fused per-image BN partial stats ----
    y, s_part, q_part = pl.pallas_call(
        conv_kernel,
        out_shape=(
            jax.ShapeDtypeStruct((N, C_out, P), jnp.bfloat16),
            jax.ShapeDtypeStruct((N, C_out, 1), jnp.float32),
            jax.ShapeDtypeStruct((N, C_out, 1), jnp.float32),
        ),
        grid=(N,),
        in_specs=[
            pl.BlockSpec((1, C_in, Hin, Win), lambda n: (n, 0, 0, 0)),
            pl.BlockSpec((9, C_out, C_in), lambda n: (0, 0, 0)),
        ],
        out_specs=(
            pl.BlockSpec((1, C_out, P), lambda n: (n, 0, 0)),
            pl.BlockSpec((1, C_out, 1), lambda n: (n, 0, 0)),
            pl.BlockSpec((1, C_out, 1), lambda n: (n, 0, 0)),
        ),
        compiler_params=pltpu.CompilerParams(
            dimension_semantics=("parallel",)),
        cost_estimate=pl.CostEstimate(
            flops=2 * M * 9 * C_in * C_out,
            transcendentals=0,
            bytes_accessed=bytes_accessed),
    )(xp, wt)

    # ---- tiny cross-image reduction + scale/shift (biased batch variance) ----
    sums = jnp.sum(s_part[:, :, 0], axis=0)                      # (C_out,)
    ssqs = jnp.sum(q_part[:, :, 0], axis=0)                      # (C_out,)
    mean = sums / M
    # E[y^2]-E[y]^2 in f32 can go slightly negative under cancellation: clamp.
    var = jnp.maximum(ssqs / M - mean * mean, 0.0)
    scale = gamma.astype(jnp.float32) * lax.rsqrt(var + eps)
    shift = beta.astype(jnp.float32) - mean * scale
    scale = scale.reshape(1, C_out, 1)
    shift = shift.reshape(1, C_out, 1)

    # ---- kernel 2: elementwise normalize + affine, lane-dense f32 output ----
    out = pl.pallas_call(
        _bn_apply_kernel,
        out_shape=jax.ShapeDtypeStruct((N, C_out, P), jnp.float32),
        grid=(N,),
        in_specs=[
            pl.BlockSpec((1, C_out, P), lambda n: (n, 0, 0)),
            pl.BlockSpec((1, C_out, 1), lambda n: (0, 0, 0)),
            pl.BlockSpec((1, C_out, 1), lambda n: (0, 0, 0)),
        ],
        out_specs=pl.BlockSpec((1, C_out, P), lambda n: (n, 0, 0)),
        compiler_params=pltpu.CompilerParams(
            dimension_semantics=("parallel",)),
    )(y, scale, shift)

    # Free row-major split of the lane dim; no transpose on the output path.
    return out.reshape(N, C_out, Ho, Wo)


# ---------------------------------------------------------------------------
# Pure-JAX reference (correctness check only)
# ---------------------------------------------------------------------------
def preprocess_block_ref(x, conv_w, gamma, beta, *, stride=1, eps=1e-5):
    xr = jnp.maximum(x, 0.0)
    y = lax.conv_general_dilated(
        xr, conv_w,
        window_strides=(stride, stride),
        padding=((1, 1), (1, 1)),
        dimension_numbers=("NCHW", "OIHW", "NCHW"),
    )
    mean = jnp.mean(y, axis=(0, 2, 3), keepdims=True)
    var = jnp.mean((y - mean) ** 2, axis=(0, 2, 3), keepdims=True)
    g = gamma.reshape(1, -1, 1, 1)
    b = beta.reshape(1, -1, 1, 1)
    return (y - mean) * lax.rsqrt(var + eps) * g + b


# ---------------------------------------------------------------------------
if __name__ == "__main__":
    key = jax.random.PRNGKey(0)
    k_x, k_w, k_g, k_b = jax.random.split(key, 4)

    N, C_in, H, W = 2, 4, 16, 16
    C_out, stride = 8, 1

    x = jax.random.normal(k_x, (N, C_in, H, W), dtype=jnp.float32)
    conv_w = 0.1 * jax.random.normal(k_w, (C_out, C_in, 3, 3), dtype=jnp.float32)
    gamma = 1.0 + 0.1 * jax.random.normal(k_g, (C_out,), dtype=jnp.float32)
    beta = 0.1 * jax.random.normal(k_b, (C_out,), dtype=jnp.float32)

    out = jax.block_until_ready(
        preprocess_block(x, conv_w, gamma, beta, stride=stride))
    ref = jax.block_until_ready(
        preprocess_block_ref(x, conv_w, gamma, beta, stride=stride))

    assert out.shape == (N, C_out, H // stride, W // stride), out.shape
    max_err = float(jnp.max(jnp.abs(out - ref)))
    # bf16 matmul operands / bf16 y intermediate, f32 accumulation & stats.
    assert jnp.allclose(out, ref, atol=5e-2, rtol=5e-2), max_err
    print("KERNEL_OK")
</pallas_src>

<mosaic_0001>
module attributes {stable_mosaic.version = 11 : i64} {
  func.func @_bn_apply_kernel(%arg0: i32, %arg1: memref<1x8x256xbf16, #tpu.memory_space<vmem>>, %arg2: memref<1x8x1xf32, #tpu.memory_space<vmem>>, %arg3: memref<1x8x1xf32, #tpu.memory_space<vmem>>, %arg4: memref<1x8x256xf32, #tpu.memory_space<vmem>>) attributes {dimension_semantics = [#tpu.dimension_semantics<parallel>], iteration_bounds = array<i64: 2>, scalar_prefetch = 0 : i64, scratch_operands = 0 : i64, tpu.core_type = #tpu.core_type<tc>, window_params = [{transform_indices = @transform_0, window_bounds = array<i64: 1, 8, 256>}, {pipeline_mode = #tpu.pipeline_mode<synchronous>, transform_indices = @transform_1, window_bounds = array<i64: 1, 8, 1>}, {pipeline_mode = #tpu.pipeline_mode<synchronous>, transform_indices = @transform_2, window_bounds = array<i64: 1, 8, 1>}, {transform_indices = @transform_3, window_bounds = array<i64: 1, 8, 256>}]} {
    %c0 = arith.constant 0 : index
    %c0_0 = arith.constant 0 : index
    %c0_1 = arith.constant 0 : index
    %0 = vector.load %arg1[%c0, %c0_0, %c0_1] : memref<1x8x256xbf16, #tpu.memory_space<vmem>>, vector<1x8x256xbf16>
    %1 = arith.extf %0 : vector<1x8x256xbf16> to vector<1x8x256xf32>
    %c0_2 = arith.constant 0 : index
    %c0_3 = arith.constant 0 : index
    %c0_4 = arith.constant 0 : index
    %2 = vector.load %arg2[%c0_2, %c0_3, %c0_4] : memref<1x8x1xf32, #tpu.memory_space<vmem>>, vector<1x8x1xf32>
    %3 = vector.broadcast %2 : vector<1x8x1xf32> to vector<1x8x256xf32>
    %4 = arith.mulf %1, %3 : vector<1x8x256xf32>
    %c0_5 = arith.constant 0 : index
    %c0_6 = arith.constant 0 : index
    %c0_7 = arith.constant 0 : index
    %5 = vector.load %arg3[%c0_5, %c0_6, %c0_7] : memref<1x8x1xf32, #tpu.memory_space<vmem>>, vector<1x8x1xf32>
    %6 = vector.broadcast %5 : vector<1x8x1xf32> to vector<1x8x256xf32>
    %7 = arith.addf %4, %6 : vector<1x8x256xf32>
    %c0_8 = arith.constant 0 : index
    %c0_9 = arith.constant 0 : index
    %c0_10 = arith.constant 0 : index
    %8 = vector.load %arg4[%c0_8, %c0_9, %c0_10] : memref<1x8x256xf32, #tpu.memory_space<vmem>>, vector<1x8x256xf32>
    tpu.vector_store %arg4[%c0_8, %c0_9, %c0_10], %7 {strides = array<i32>} : memref<1x8x256xf32, #tpu.memory_space<vmem>>, vector<1x8x256xf32>,
    return
  }
  func.func @transform_0(%arg0: i32) -> (i32, i32, i32) {
    %c0_i32 = arith.constant 0 : i32
    %c0_i32_0 = arith.constant 0 : i32
    %c0_i32_1 = arith.constant 0 : i32
    return %arg0, %c0_i32, %c0_i32_0 : i32, i32, i32
  }
  func.func @transform_1(%arg0: i32) -> (i32, i32, i32) {
    %c0_i32 = arith.constant 0 : i32
    %c0_i32_0 = arith.constant 0 : i32
    %c0_i32_1 = arith.constant 0 : i32
    %c0_i32_2 = arith.constant 0 : i32
    return %c0_i32, %c0_i32_0, %c0_i32_1 : i32, i32, i32
  }
  func.func @transform_2(%arg0: i32) -> (i32, i32, i32) {
    %c0_i32 = arith.constant 0 : i32
    %c0_i32_0 = arith.constant 0 : i32
    %c0_i32_1 = arith.constant 0 : i32
    %c0_i32_2 = arith.constant 0 : i32
    return %c0_i32, %c0_i32_0, %c0_i32_1 : i32, i32, i32
  }
  func.func @transform_3(%arg0: i32) -> (i32, i32, i32) {
    %c0_i32 = arith.constant 0 : i32
    %c0_i32_0 = arith.constant 0 : i32
    %c0_i32_1 = arith.constant 0 : i32
    return %arg0, %c0_i32, %c0_i32_0 : i32, i32, i32
  }
}

module attributes {stable_mosaic.version = 11 : i64} {
  func.func @kernel(%arg0: i32, %arg1: memref<1x4x18x18xbf16, #tpu.memory_space<vmem>>, %arg2: memref<9x8x4xbf16, #tpu.memory_space<vmem>>, %arg3: memref<1x8x256xbf16, #tpu.memory_space<vmem>>, %arg4: memref<1x8x1xf32, #tpu.memory_space<vmem>>, %arg5: memref<1x8x1xf32, #tpu.memory_space<vmem>>) attributes {dimension_semantics = [#tpu.dimension_semantics<parallel>], iteration_bounds = array<i64: 2>, scalar_prefetch = 0 : i64, scratch_operands = 0 : i64, tpu.core_type = #tpu.core_type<tc>, window_params = [{transform_indices = @transform_0, window_bounds = array<i64: 1, 4, 18, 18>}, {pipeline_mode = #tpu.pipeline_mode<synchronous>, transform_indices = @transform_1, window_bounds = array<i64: 9, 8, 4>}, {transform_indices = @transform_2, window_bounds = array<i64: 1, 8, 256>}, {transform_indices = @transform_3, window_bounds = array<i64: 1, 8, 1>}, {transform_indices = @transform_4, window_bounds = array<i64: 1, 8, 1>}]} {
    %cst = arith.constant 0.000000e+00 : f32
    %0 = vector.broadcast %cst : f32 to vector<8x256xf32>
    %c0 = arith.constant 0 : index
    %c0_0 = arith.constant 0 : index
    %c0_1 = arith.constant 0 : index
    %c0_2 = arith.constant 0 : index
    %1 = vector.load %arg1[%c0, %c0_0, %c0_1, %c0_2] : memref<1x4x18x18xbf16, #tpu.memory_space<vmem>>, vector<1x4x16x16xbf16>
    %2 = vector.shape_cast %1 : vector<1x4x16x16xbf16> to vector<4x16x16xbf16>
    %3 = vector.shape_cast %2 : vector<4x16x16xbf16> to vector<4x256xbf16>
    %c0_3 = arith.constant 0 : index
    %c0_4 = arith.constant 0 : index
    %c0_5 = arith.constant 0 : index
    %4 = vector.load %arg2[%c0_3, %c0_4, %c0_5] : memref<9x8x4xbf16, #tpu.memory_space<vmem>>, vector<1x8x4xbf16>
    %5 = vector.shape_cast %4 : vector<1x8x4xbf16> to vector<8x4xbf16>
    %cst_6 = arith.constant dense<0.000000e+00> : vector<8x256xf32>
    %6 = tpu.matmul %5, %3, %cst_6 {dimension_numbers = #tpu.dot_dimension_numbers<[1], [0], [0], [1], [0, 0, 1, 1], [], []>} : vector<8x4xbf16>, vector<4x256xbf16>, vector<8x256xf32> -> vector<8x256xf32>
    %7 = arith.addf %0, %6 : vector<8x256xf32>
    %c0_7 = arith.constant 0 : index
    %c0_8 = arith.constant 0 : index
    %c0_9 = arith.constant 0 : index
    %c1 = arith.constant 1 : index
    %8 = vector.load %arg1[%c0_7, %c0_8, %c0_9, %c1] : memref<1x4x18x18xbf16, #tpu.memory_space<vmem>>, vector<1x4x16x16xbf16>
    %9 = vector.shape_cast %8 : vector<1x4x16x16xbf16> to vector<4x16x16xbf16>
    %10 = vector.shape_cast %9 : vector<4x16x16xbf16> to vector<4x256xbf16>
    %c1_10 = arith.constant 1 : index
    %c0_11 = arith.constant 0 : index
    %c0_12 = arith.constant 0 : index
    %11 = vector.load %arg2[%c1_10, %c0_11, %c0_12] : memref<9x8x4xbf16, #tpu.memory_space<vmem>>, vector<1x8x4xbf16>
    %12 = vector.shape_cast %11 : vector<1x8x4xbf16> to vector<8x4xbf16>
    %cst_13 = arith.constant dense<0.000000e+00> : vector<8x256xf32>
    %13 = tpu.matmul %12, %10, %cst_13 {dimension_numbers = #tpu.dot_dimension_numbers<[1], [0], [0], [1], [0, 0, 1, 1], [], []>} : vector<8x4xbf16>, vector<4x256xbf16>, vector<8x256xf32> -> vector<8x256xf32>
    %14 = arith.addf %7, %13 : vector<8x256xf32>
    %c0_14 = arith.constant 0 : index
    %c0_15 = arith.constant 0 : index
    %c0_16 = arith.constant 0 : index
    %c2 = arith.constant 2 : index
    %15 = vector.load %arg1[%c0_14, %c0_15, %c0_16, %c2] : memref<1x4x18x18xbf16, #tpu.memory_space<vmem>>, vector<1x4x16x16xbf16>
    %16 = vector.shape_cast %15 : vector<1x4x16x16xbf16> to vector<4x16x16xbf16>
    %17 = vector.shape_cast %16 : vector<4x16x16xbf16> to vector<4x256xbf16>
    %c2_17 = arith.constant 2 : index
    %c0_18 = arith.constant 0 : index
    %c0_19 = arith.constant 0 : index
    %18 = vector.load %arg2[%c2_17, %c0_18, %c0_19] : memref<9x8x4xbf16, #tpu.memory_space<vmem>>, vector<1x8x4xbf16>
    %19 = vector.shape_cast %18 : vector<1x8x4xbf16> to vector<8x4xbf16>
    %cst_20 = arith.constant dense<0.000000e+00> : vector<8x256xf32>
    %20 = tpu.matmul %19, %17, %cst_20 {dimension_numbers = #tpu.dot_dimension_numbers<[1], [0], [0], [1], [0, 0, 1, 1], [], []>} : vector<8x4xbf16>, vector<4x256xbf16>, vector<8x256xf32> -> vector<8x256xf32>
    %21 = arith.addf %14, %20 : vector<8x256xf32>
    %c0_21 = arith.constant 0 : index
    %c0_22 = arith.constant 0 : index
    %c1_23 = arith.constant 1 : index
    %c0_24 = arith.constant 0 : index
    %22 = vector.load %arg1[%c0_21, %c0_22, %c1_23, %c0_24] : memref<1x4x18x18xbf16, #tpu.memory_space<vmem>>, vector<1x4x16x16xbf16>
    %23 = vector.shape_cast %22 : vector<1x4x16x16xbf16> to vector<4x16x16xbf16>
    %24 = vector.shape_cast %23 : vector<4x16x16xbf16> to vector<4x256xbf16>
    %c3 = arith.constant 3 : index
    %c0_25 = arith.constant 0 : index
    %c0_26 = arith.constant 0 : index
    %25 = vector.load %arg2[%c3, %c0_25, %c0_26] : memref<9x8x4xbf16, #tpu.memory_space<vmem>>, vector<1x8x4xbf16>
    %26 = vector.shape_cast %25 : vector<1x8x4xbf16> to vector<8x4xbf16>
    %cst_27 = arith.constant dense<0.000000e+00> : vector<8x256xf32>
    %27 = tpu.matmul %26, %24, %cst_27 {dimension_numbers = #tpu.dot_dimension_numbers<[1], [0], [0], [1], [0, 0, 1, 1], [], []>} : vector<8x4xbf16>, vector<4x256xbf16>, vector<8x256xf32> -> vector<8x256xf32>
    %28 = arith.addf %21, %27 : vector<8x256xf32>
    %c0_28 = arith.constant 0 : index
    %c0_29 = arith.constant 0 : index
    %c1_30 = arith.constant 1 : index
    %c1_31 = arith.constant 1 : index
    %29 = vector.load %arg1[%c0_28, %c0_29, %c1_30, %c1_31] : memref<1x4x18x18xbf16, #tpu.memory_space<vmem>>, vector<1x4x16x16xbf16>
    %30 = vector.shape_cast %29 : vector<1x4x16x16xbf16> to vector<4x16x16xbf16>
    %31 = vector.shape_cast %30 : vector<4x16x16xbf16> to vector<4x256xbf16>
    %c4 = arith.constant 4 : index
    %c0_32 = arith.constant 0 : index
    %c0_33 = arith.constant 0 : index
    %32 = vector.load %arg2[%c4, %c0_32, %c0_33] : memref<9x8x4xbf16, #tpu.memory_space<vmem>>, vector<1x8x4xbf16>
    %33 = vector.shape_cast %32 : vector<1x8x4xbf16> to vector<8x4xbf16>
    %cst_34 = arith.constant dense<0.000000e+00> : vector<8x256xf32>
    %34 = tpu.matmul %33, %31, %cst_34 {dimension_numbers = #tpu.dot_dimension_numbers<[1], [0], [0], [1], [0, 0, 1, 1], [], []>} : vector<8x4xbf16>, vector<4x256xbf16>, vector<8x256xf32> -> vector<8x256xf32>
    %35 = arith.addf %28, %34 : vector<8x256xf32>
    %c0_35 = arith.constant 0 : index
    %c0_36 = arith.constant 0 : index
    %c1_37 = arith.constant 1 : index
    %c2_38 = arith.constant 2 : index
    %36 = vector.load %arg1[%c0_35, %c0_36, %c1_37, %c2_38] : memref<1x4x18x18xbf16, #tpu.memory_space<vmem>>, vector<1x4x16x16xbf16>
    %37 = vector.shape_cast %36 : vector<1x4x16x16xbf16> to vector<4x16x16xbf16>
    %38 = vector.shape_cast %37 : vector<4x16x16xbf16> to vector<4x256xbf16>
    %c5 = arith.constant 5 : index
    %c0_39 = arith.constant 0 : index
    %c0_40 = arith.constant 0 : index
    %39 = vector.load %arg2[%c5, %c0_39, %c0_40] : memref<9x8x4xbf16, #tpu.memory_space<vmem>>, vector<1x8x4xbf16>
    %40 = vector.shape_cast %39 : vector<1x8x4xbf16> to vector<8x4xbf16>
    %cst_41 = arith.constant dense<0.000000e+00> : vector<8x256xf32>
    %41 = tpu.matmul %40, %38, %cst_41 {dimension_numbers = #tpu.dot_dimension_numbers<[1], [0], [0], [1], [0, 0, 1, 1], [], []>} : vector<8x4xbf16>, vector<4x256xbf16>, vector<8x256xf32> -> vector<8x256xf32>
    %42 = arith.addf %35, %41 : vector<8x256xf32>
    %c0_42 = arith.constant 0 : index
    %c0_43 = arith.constant 0 : index
    %c2_44 = arith.constant 2 : index
    %c0_45 = arith.constant 0 : index
    %43 = vector.load %arg1[%c0_42, %c0_43, %c2_44, %c0_45] : memref<1x4x18x18xbf16, #tpu.memory_space<vmem>>, vector<1x4x16x16xbf16>
    %44 = vector.shape_cast %43 : vector<1x4x16x16xbf16> to vector<4x16x16xbf16>
    %45 = vector.shape_cast %44 : vector<4x16x16xbf16> to vector<4x256xbf16>
    %c6 = arith.constant 6 : index
    %c0_46 = arith.constant 0 : index
    %c0_47 = arith.constant 0 : index
    %46 = vector.load %arg2[%c6, %c0_46, %c0_47] : memref<9x8x4xbf16, #tpu.memory_space<vmem>>, vector<1x8x4xbf16>
    %47 = vector.shape_cast %46 : vector<1x8x4xbf16> to vector<8x4xbf16>
    %cst_48 = arith.constant dense<0.000000e+00> : vector<8x256xf32>
    %48 = tpu.matmul %47, %45, %cst_48 {dimension_numbers = #tpu.dot_dimension_numbers<[1], [0], [0], [1], [0, 0, 1, 1], [], []>} : vector<8x4xbf16>, vector<4x256xbf16>, vector<8x256xf32> -> vector<8x256xf32>
    %49 = arith.addf %42, %48 : vector<8x256xf32>
    %c0_49 = arith.constant 0 : index
    %c0_50 = arith.constant 0 : index
    %c2_51 = arith.constant 2 : index
    %c1_52 = arith.constant 1 : index
    %50 = vector.load %arg1[%c0_49, %c0_50, %c2_51, %c1_52] : memref<1x4x18x18xbf16, #tpu.memory_space<vmem>>, vector<1x4x16x16xbf16>
    %51 = vector.shape_cast %50 : vector<1x4x16x16xbf16> to vector<4x16x16xbf16>
    %52 = vector.shape_cast %51 : vector<4x16x16xbf16> to vector<4x256xbf16>
    %c7 = arith.constant 7 : index
    %c0_53 = arith.constant 0 : index
    %c0_54 = arith.constant 0 : index
    %53 = vector.load %arg2[%c7, %c0_53, %c0_54] : memref<9x8x4xbf16, #tpu.memory_space<vmem>>, vector<1x8x4xbf16>
    %54 = vector.shape_cast %53 : vector<1x8x4xbf16> to vector<8x4xbf16>
    %cst_55 = arith.constant dense<0.000000e+00> : vector<8x256xf32>
    %55 = tpu.matmul %54, %52, %cst_55 {dimension_numbers = #tpu.dot_dimension_numbers<[1], [0], [0], [1], [0, 0, 1, 1], [], []>} : vector<8x4xbf16>, vector<4x256xbf16>, vector<8x256xf32> -> vector<8x256xf32>
    %56 = arith.addf %49, %55 : vector<8x256xf32>
    %c0_56 = arith.constant 0 : index
    %c0_57 = arith.constant 0 : index
    %c2_58 = arith.constant 2 : index
    %c2_59 = arith.constant 2 : index
    %57 = vector.load %arg1[%c0_56, %c0_57, %c2_58, %c2_59] : memref<1x4x18x18xbf16, #tpu.memory_space<vmem>>, vector<1x4x16x16xbf16>
    %58 = vector.shape_cast %57 : vector<1x4x16x16xbf16> to vector<4x16x16xbf16>
    %59 = vector.shape_cast %58 : vector<4x16x16xbf16> to vector<4x256xbf16>
    %c8 = arith.constant 8 : index
    %c0_60 = arith.constant 0 : index
    %c0_61 = arith.constant 0 : index
    %60 = vector.load %arg2[%c8, %c0_60, %c0_61] : memref<9x8x4xbf16, #tpu.memory_space<vmem>>, vector<1x8x4xbf16>
    %61 = vector.shape_cast %60 : vector<1x8x4xbf16> to vector<8x4xbf16>
    %cst_62 = arith.constant dense<0.000000e+00> : vector<8x256xf32>
    %62 = tpu.matmul %61, %59, %cst_62 {dimension_numbers = #tpu.dot_dimension_numbers<[1], [0], [0], [1], [0, 0, 1, 1], [], []>} : vector<8x4xbf16>, vector<4x256xbf16>, vector<8x256xf32> -> vector<8x256xf32>
    %63 = arith.addf %56, %62 : vector<8x256xf32>
    %64 = arith.truncf %63 : vector<8x256xf32> to vector<8x256xbf16>
    %c0_63 = arith.constant 0 : index
    %c0_64 = arith.constant 0 : index
    %c0_65 = arith.constant 0 : index
    %65 = vector.load %arg3[%c0_63, %c0_64, %c0_65] : memref<1x8x256xbf16, #tpu.memory_space<vmem>>, vector<1x8x256xbf16>
    %66 = vector.shape_cast %65 : vector<1x8x256xbf16> to vector<8x256xbf16>
    %67 = vector.shape_cast %64 : vector<8x256xbf16> to vector<1x8x256xbf16>
    tpu.vector_store %arg3[%c0_63, %c0_64, %c0_65], %67 {strides = array<i32>} : memref<1x8x256xbf16, #tpu.memory_space<vmem>>, vector<1x8x256xbf16>,
    %cst_66 = arith.constant dense<0.000000e+00> : vector<8xf32>
    %68 = vector.multi_reduction <add>, %63, %cst_66 [1] : vector<8x256xf32> to vector<8xf32>
    %69 = vector.shape_cast %68 : vector<8xf32> to vector<8x1xf32>
    %c0_67 = arith.constant 0 : index
    %c0_68 = arith.constant 0 : index
    %c0_69 = arith.constant 0 : index
    %70 = vector.load %arg4[%c0_67, %c0_68, %c0_69] : memref<1x8x1xf32, #tpu.memory_space<vmem>>, vector<1x8x1xf32>
    %71 = vector.shape_cast %70 : vector<1x8x1xf32> to vector<8x1xf32>
    %72 = vector.shape_cast %69 : vector<8x1xf32> to vector<1x8x1xf32>
    tpu.vector_store %arg4[%c0_67, %c0_68, %c0_69], %72 {strides = array<i32>} : memref<1x8x1xf32, #tpu.memory_space<vmem>>, vector<1x8x1xf32>,
    %73 = arith.mulf %63, %63 : vector<8x256xf32>
    %cst_70 = arith.constant dense<0.000000e+00> : vector<8xf32>
    %74 = vector.multi_reduction <add>, %73, %cst_70 [1] : vector<8x256xf32> to vector<8xf32>
    %75 = vector.shape_cast %74 : vector<8xf32> to vector<8x1xf32>
    %c0_71 = arith.constant 0 : index
    %c0_72 = arith.constant 0 : index
    %c0_73 = arith.constant 0 : index
    %76 = vector.load %arg5[%c0_71, %c0_72, %c0_73] : memref<1x8x1xf32, #tpu.memory_space<vmem>>, vector<1x8x1xf32>
    %77 = vector.shape_cast %76 : vector<1x8x1xf32> to vector<8x1xf32>
    %78 = vector.shape_cast %75 : vector<8x1xf32> to vector<1x8x1xf32>
    tpu.vector_store %arg5[%c0_71, %c0_72, %c0_73], %78 {strides = array<i32>} : memref<1x8x1xf32, #tpu.memory_space<vmem>>, vector<1x8x1xf32>,
    return
  }
  func.func @transform_0(%arg0: i32) -> (i32, i32, i32, i32) {
    %c0_i32 = arith.constant 0 : i32
    %c0_i32_0 = arith.constant 0 : i32
    %c0_i32_1 = arith.constant 0 : i32
    %c0_i32_2 = arith.constant 0 : i32
    return %arg0, %c0_i32, %c0_i32_0, %c0_i32_1 : i32, i32, i32, i32
  }
  func.func @transform_1(%arg0: i32) -> (i32, i32, i32) {
    %c0_i32 = arith.constant 0 : i32
    %c0_i32_0 = arith.constant 0 : i32
    %c0_i32_1 = arith.constant 0 : i32
    %c0_i32_2 = arith.constant 0 : i32
    return %c0_i32, %c0_i32_0, %c0_i32_1 : i32, i32, i32
  }
  func.func @transform_2(%arg0: i32) -> (i32, i32, i32) {
    %c0_i32 = arith.constant 0 : i32
    %c0_i32_0 = arith.constant 0 : i32
    %c0_i32_1 = arith.constant 0 : i32
    return %arg0, %c0_i32, %c0_i32_0 : i32, i32, i32
  }
  func.func @transform_3(%arg0: i32) -> (i32, i32, i32) {
    %c0_i32 = arith.constant 0 : i32
    %c0_i32_0 = arith.constant 0 : i32
    %c0_i32_1 = arith.constant 0 : i32
    return %arg0, %c0_i32, %c0_i32_0 : i32, i32, i32
  }
  func.func @transform_4(%arg0: i32) -> (i32, i32, i32) {
    %c0_i32 = arith.constant 0 : i32
    %c0_i32_0 = arith.constant 0 : i32
    %c0_i32_1 = arith.constant 0 : i32
    return %arg0, %c0_i32, %c0_i32_0 : i32, i32, i32
  }
}

</mosaic_0001>

<llo_original>
// kernel: preprocess_block.3
$region0: #{preprocess_block.3}
  #allocation0 [shape = 'u32[]', space=smem, size = 0x4, offset = 0x4, fixed_abs, tag = 'smem constant byte address 0x4 - core index']
  #allocation1 [shape = 'u32[144,128]{1,0:T(1,128)}', space=vmem, size = 0x12000, scoped, tag = 'internal scratch']
  %s0 = inlined_call_operand.vmem [shape: bf16[2,8,256], index: 0, kind: input, shape index: {}]
  %s1 = inlined_call_operand.vmem [shape: f32[1,8,1], index: 1, kind: input, shape index: {}]
  %s2 = inlined_call_operand.vmem [shape: f32[1,8,1], index: 2, kind: input, shape index: {}]
  %s3 = inlined_call_operand.vmem [shape: f32[2,8,256], index: 3, kind: output, shape index: {}]
  %s4 = sld [smem:[#allocation0]]
  $region45: #{preprocess_block.3} parent=0
    _
  %s6 = ssub.s32 1, %s4
  %s7 = scalar_select 0, %s6, %s4
  loop: start=0, step=1, limit=4
  $region2: #{preprocess_block.3} parent=0 // loop_pre_header
    _
  $region3: #{preprocess_block.3} parent=0 // loop_header
    %s9 = sphi 0, %s13
    %p10 = scmp.ge.s32.totalorder %s9, 4
    %s19 = sphi 0, %s21
    %s22 = sphi 0, %s19
    %s23 = sphi 0, %s22
    %s39 = sphi 0, %s23
    %s43 = sphi 0, %s43
    %s45 = sphi 0, %s43
    %s46 = sphi 0, %s45
    %s60 = sphi 0, %s46
    %s64 = sphi 0, %s64
    %s66 = sphi 0, %s64
    %s67 = sphi 0, %s66
    %s81 = sphi 0, %s67
    %s87 = sphi 0, %s89
    %s90 = sphi 0, %s87
    %s91 = sphi 0, %s90
    %s107 = sphi 0, %s91
  $region4: #{preprocess_block.3} parent=0 // loop_header_branch
    %12 = sbr.rel (%p10) target = $region8
  $region5: #{preprocess_block.3} parent=0 // loop_body
    %s14 = ssub.s32 %s9, 1
    %s15 = ssub.s32 %s9, 2
    %s16 = sadd.s32 %s9, 1
    %s17 = ssub.s32 %s9, %s16
    %p18 = scmp.eq.s32.totalorder %s17, 0
    %s20 = sadd.s32 %s19, 1
    %s21 = scalar_select %p18, %s19, %s20
    %p24 = pneg %p18
    %p25 = scmp.eq.s32.totalorder %s9, 1
    %p26 = por %p24, %p25
    %p27 = scmp.ne.s32.totalorder %s19, %s22
    %p28 = scmp.eq.s32.totalorder %s9, 0
    %p29 = por %p27, %p28
    %p30 = scmp.ne.s32.totalorder %s19, %s22
    %p31 = scmp.eq.s32.totalorder %s14, 1
    %p32 = por %p30, %p31
    %p33 = scmp.ne.s32.totalorder %s22, %s23
    %p34 = scmp.eq.s32.totalorder %s14, 0
    %p35 = por %p33, %p34
    %p36 = scmp.ne.s32.totalorder %s22, %s23
    %p37 = scmp.eq.s32.totalorder %s15, 1
    %p38 = por %p36, %p37
    %p40 = scmp.ne.s32.totalorder %s23, %s39
    %p41 = scmp.eq.s32.totalorder %s15, 0
    %p42 = por %p40, %p41
    %s44 = sadd.s32 %s43, 1
    %p47 = scmp.eq.s32.totalorder %s9, 1
    %p48 = scmp.ne.s32.totalorder %s43, %s45
    %p49 = scmp.eq.s32.totalorder %s9, 0
    %p50 = por %p48, %p49
    %p51 = scmp.ne.s32.totalorder %s43, %s45
    %p52 = scmp.eq.s32.totalorder %s14, 1
    %p53 = por %p51, %p52
    %p54 = scmp.ne.s32.totalorder %s45, %s46
    %p55 = scmp.eq.s32.totalorder %s14, 0
    %p56 = por %p54, %p55
    %p57 = scmp.ne.s32.totalorder %s45, %s46
    %p58 = scmp.eq.s32.totalorder %s15, 1
    %p59 = por %p57, %p58
    %p61 = scmp.ne.s32.totalorder %s46, %s60
    %p62 = scmp.eq.s32.totalorder %s15, 0
    %p63 = por %p61, %p62
    %s65 = sadd.s32 %s64, 1
    %p68 = scmp.eq.s32.totalorder %s9, 1
    %p69 = scmp.ne.s32.totalorder %s64, %s66
    %p70 = scmp.eq.s32.totalorder %s9, 0
    %p71 = por %p69, %p70
    %p72 = scmp.ne.s32.totalorder %s64, %s66
    %p73 = scmp.eq.s32.totalorder %s14, 1
    %p74 = por %p72, %p73
    %p75 = scmp.ne.s32.totalorder %s66, %s67
    %p76 = scmp.eq.s32.totalorder %s14, 0
    %p77 = por %p75, %p76
    %p78 = scmp.ne.s32.totalorder %s66, %s67
    %p79 = scmp.eq.s32.totalorder %s15, 1
    %p80 = por %p78, %p79
    %p82 = scmp.ne.s32.totalorder %s67, %s81
    %p83 = scmp.eq.s32.totalorder %s15, 0
    %p84 = por %p82, %p83
    %s85 = ssub.s32 %s9, %s16
    %p86 = scmp.eq.s32.totalorder %s85, 0
    %s88 = sadd.s32 %s87, 1
    %s89 = scalar_select %p86, %s87, %s88
    %p92 = pneg %p86
    %p93 = scmp.eq.s32.totalorder %s9, 1
    %p94 = por %p92, %p93
    %p95 = scmp.ne.s32.totalorder %s87, %s90
    %p96 = scmp.eq.s32.totalorder %s9, 0
    %p97 = por %p95, %p96
    %p98 = scmp.ne.s32.totalorder %s87, %s90
    %p99 = scmp.eq.s32.totalorder %s14, 1
    %p100 = por %p98, %p99
    %p101 = scmp.ne.s32.totalorder %s90, %s91
    %p102 = scmp.eq.s32.totalorder %s14, 0
    %p103 = por %p101, %p102
    %p104 = scmp.ne.s32.totalorder %s90, %s91
    %p105 = scmp.eq.s32.totalorder %s15, 1
    %p106 = por %p104, %p105
    %p108 = scmp.ne.s32.totalorder %s91, %s107
    %p109 = scmp.eq.s32.totalorder %s15, 0
    %p110 = por %p108, %p109
    %p111 = scmp.le.s32.totalorder 1, %s9
    %p112 = scmp.lt.s32.totalorder %s9, 3
    %p113 = pnand %p111, %p112
    %p114 = pneg %p113
    // Predicated region
    $region9: #{preprocess_block.3} parent=5 // pred_check
      _
    $region10: #{preprocess_block.3} parent=5 // pred_check_branch
      %116 = sbr.rel (%p113) target = $region12
    $region11: #{preprocess_block.3} parent=5 // pred_region
      %s117 = ssub.s32 %s9, 1
      // Predicated region
      $region13: #{preprocess_block.3} parent=11 // pred_check
        %p118 = pneg %p56
      $region14: #{preprocess_block.3} parent=11 // pred_check_branch
        %120 = sbr.rel (%p118) target = $region16
      $region15: #{preprocess_block.3} parent=11 // pred_region
        _
      $region16: #{preprocess_block.3} parent=11 // pred_fallthru
        _
      // Predicated region
      $region17: #{preprocess_block.3} parent=11 // pred_check
        %p121 = pneg %p77
      $region18: #{preprocess_block.3} parent=11 // pred_check_branch
        %123 = sbr.rel (%p121) target = $region20
      $region19: #{preprocess_block.3} parent=11 // pred_region
        _
      $region20: #{preprocess_block.3} parent=11 // pred_fallthru
        _
    $region12: #{preprocess_block.3} parent=5 // pred_fallthru
      _
    %p124 = scmp.lt.s32.totalorder %s9, 2
    // Predicated region
    $region21: #{preprocess_block.3} parent=5 // pred_check
      %p125 = pneg %p124
    $region22: #{preprocess_block.3} parent=5 // pred_check_branch
      %127 = sbr.rel (%p125) target = $region24
    $region23: #{preprocess_block.3} parent=5 // pred_region
      // Predicated region
      $region25: #{preprocess_block.3} parent=23 // pred_check
        %p128 = pneg %p29
      $region26: #{preprocess_block.3} parent=23 // pred_check_branch
        %130 = sbr.rel (%p128) target = $region28
      $region27: #{preprocess_block.3} parent=23 // pred_region
        %p131 = scmp.lt.s32.totalorder %s9, 1
        %s132 = scalar_select %p131, %s9, 1
        %s133 = smul.addr %s132, 2
        %s134 = smul.addr %s133, 4
        %s135 = scalar_lea.vmem %s0, %s134
      $region28: #{preprocess_block.3} parent=23 // pred_fallthru
        _
    $region24: #{preprocess_block.3} parent=5 // pred_fallthru
      _
    %p136 = scmp.le.s32.totalorder 1, %s9
    %p137 = scmp.lt.s32.totalorder %s9, 3
    %p138 = pnand %p136, %p137
    %p139 = pneg %p138
    // Predicated region
    $region29: #{preprocess_block.3} parent=5 // pred_check
      _
    $region30: #{preprocess_block.3} parent=5 // pred_check_branch
      %141 = sbr.rel (%p138) target = $region32
    $region31: #{preprocess_block.3} parent=5 // pred_region
      %s142 = ssub.s32 %s9, 1
      %p143 = scmp.lt.s32.totalorder %s14, 1
      %s144 = scalar_select %p143, %s14, 1
      %s145 = smul.addr %s144, 2
      %s146 = smul.addr %s145, 4
      %s147 = scalar_lea.vmem %s0, %s146
      %p148 = pneg %p35
      %p149 = pneg %p32
      %p150 = pneg %p56
      %p151 = pneg %p53
      %p152 = pneg %p77
      %p153 = pneg %p74
      %p154 = pneg %p103
      %p155 = pneg %p100
      %p156 = scmp.lt.s32.totalorder %s14, 1
      %s157 = scalar_select %p156, %s14, 1
      %s158 = smul.addr %s157, 2
      %s159 = smul.addr %s158, 8
      %s160 = scalar_lea.vmem %s3, %s159
      %p161 = scmp.lt.s32.totalorder %s14, 1
      %s162 = scalar_select %p161, %s14, 1
      %s163 = smul.addr %s162, 2
      %s164 = smul.addr %s163, 4
      %s165 = scalar_lea.vmem %s0, %s164
      %p166 = scmp.lt.s32.totalorder %s14, 1
      %s167 = scalar_select %p166, %s14, 1
      %s168 = smul.addr %s167, 2
      %s169 = smul.addr %s168, 8
      %s170 = scalar_lea.vmem %s3, %s169
      %v171 = vld [vmem:[%s165] sm:$0xff]
      %v172 = vunpack.c.l.bf16 %v171
      %v173 = vunpack.c.h.bf16 %v171
      %v174 = vld [vmem:[%s1] sm:$0xff]
      %176 = vset.pattern.permute.xlu0 0
      %177 = vperm.xlu0 %176, %v174
      %v178 = vpop.permute.xlu0 %177
      %v180 = vmul.f32 %v172, %v178
      %v181 = vmul.f32 %v173, %v178
      %v182 = vld [vmem:[%s2] sm:$0xff]
      %184 = vset.pattern.permute.xlu0 0
      %185 = vperm.xlu0 %184, %v182
      %v186 = vpop.permute.xlu0 %185
      %v188 = vadd.f32 %v180, %v186
      %v189 = vadd.f32 %v181, %v186
      %190 = vst [vmem:[%s170] sm:$0xff] %v188
      %191 = vst [vmem:[%s170 + $0x8] sm:$0xff] %v189
      %p192 = scmp.lt.s32.totalorder %s14, 1
      %s193 = scalar_select %p192, %s14, 1
      %s194 = smul.addr %s193, 2
      %s195 = smul.addr %s194, 8
      %s196 = scalar_lea.vmem %s3, %s195
      // Predicated region
      $region33: #{preprocess_block.3} parent=31 // pred_check
        %p197 = pneg %p100
      $region34: #{preprocess_block.3} parent=31 // pred_check_branch
        %199 = sbr.rel (%p197) target = $region36
      $region35: #{preprocess_block.3} parent=31 // pred_region
        _
      $region36: #{preprocess_block.3} parent=31 // pred_fallthru
        _
    $region32: #{preprocess_block.3} parent=5 // pred_fallthru
      _
    %p200 = scmp.le.s32.totalorder 2, %s9
    // Predicated region
    $region37: #{preprocess_block.3} parent=5 // pred_check
      %p201 = pneg %p200
    $region38: #{preprocess_block.3} parent=5 // pred_check_branch
      %203 = sbr.rel (%p201) target = $region40
    $region39: #{preprocess_block.3} parent=5 // pred_region
      %s204 = ssub.s32 %s9, 2
      // Predicated region
      $region41: #{preprocess_block.3} parent=39 // pred_check
        %p205 = pneg %p106
      $region42: #{preprocess_block.3} parent=39 // pred_check_branch
        %207 = sbr.rel (%p205) target = $region44
      $region43: #{preprocess_block.3} parent=39 // pred_region
        %p208 = scmp.lt.s32.totalorder %s15, 1
        %s209 = scalar_select %p208, %s15, 1
        %s210 = smul.addr %s209, 2
        %s211 = smul.addr %s210, 8
        %s212 = scalar_lea.vmem %s3, %s211
      $region44: #{preprocess_block.3} parent=39 // pred_fallthru
        _
    $region40: #{preprocess_block.3} parent=5 // pred_fallthru
      _
  $region6: #{preprocess_block.3} parent=0 // loop_footer
    %s13 = sadd.s32 1, %s9
  $region7: #{preprocess_block.3} parent=0 // loop_footer_branch
    %8 = sbr.rel target = $region3
  $region8: #{preprocess_block.3} parent=0 // loop_exit
    _

// kernel: preprocess_block.2
$region0: #{preprocess_block.2}
  #allocation0 [shape = 'u32[]', space=smem, size = 0x4, offset = 0x4, fixed_abs, tag = 'smem constant byte address 0x4 - core index']
  #allocation1 [shape = 'u32[144,128]{1,0:T(1,128)}', space=vmem, size = 0x12000, scoped, tag = 'internal scratch']
  %s0 = inlined_call_operand.vmem [shape: bf16[2,4,18,18], index: 0, kind: input, shape index: {}]
  %s1 = inlined_call_operand.vmem [shape: bf16[9,8,4], index: 1, kind: input, shape index: {}]
  %s2 = inlined_call_operand.vmem [shape: bf16[2,8,256], index: 2, kind: output, shape index: {0}]
  %s3 = inlined_call_operand.vmem [shape: f32[2,8,1], index: 3, kind: output, shape index: {1}]
  %s4 = inlined_call_operand.vmem [shape: f32[2,8,1], index: 4, kind: output, shape index: {2}]
  %5 = xla_tuple %s2, %s3, %s4
  %s6 = sld [smem:[#allocation0]]
  $region57: #{preprocess_block.2} parent=0
    _
  %s8 = ssub.s32 1, %s6
  %s9 = scalar_select 0, %s8, %s6
  loop: start=0, step=1, limit=4
  $region2: #{preprocess_block.2} parent=0 // loop_pre_header
    _
  $region3: #{preprocess_block.2} parent=0 // loop_header
    %s11 = sphi 0, %s15
    %p12 = scmp.ge.s32.totalorder %s11, 4
    %s21 = sphi 0, %s23
    %s24 = sphi 0, %s21
    %s25 = sphi 0, %s24
    %s41 = sphi 0, %s25
    %s45 = sphi 0, %s45
    %s47 = sphi 0, %s45
    %s48 = sphi 0, %s47
    %s62 = sphi 0, %s48
    %s68 = sphi 0, %s70
    %s71 = sphi 0, %s68
    %s72 = sphi 0, %s71
    %s88 = sphi 0, %s72
    %s94 = sphi 0, %s96
    %s97 = sphi 0, %s94
    %s98 = sphi 0, %s97
    %s114 = sphi 0, %s98
    %s120 = sphi 0, %s122
    %s123 = sphi 0, %s120
    %s124 = sphi 0, %s123
    %s140 = sphi 0, %s124
  $region4: #{preprocess_block.2} parent=0 // loop_header_branch
    %14 = sbr.rel (%p12) target = $region8
  $region5: #{preprocess_block.2} parent=0 // loop_body
    %s16 = ssub.s32 %s11, 1
    %s17 = ssub.s32 %s11, 2
    %s18 = sadd.s32 %s11, 1
    %s19 = ssub.s32 %s11, %s18
    %p20 = scmp.eq.s32.totalorder %s19, 0
    %s22 = sadd.s32 %s21, 1
    %s23 = scalar_select %p20, %s21, %s22
    %p26 = pneg %p20
    %p27 = scmp.eq.s32.totalorder %s11, 1
    %p28 = por %p26, %p27
    %p29 = scmp.ne.s32.totalorder %s21, %s24
    %p30 = scmp.eq.s32.totalorder %s11, 0
    %p31 = por %p29, %p30
    %p32 = scmp.ne.s32.totalorder %s21, %s24
    %p33 = scmp.eq.s32.totalorder %s16, 1
    %p34 = por %p32, %p33
    %p35 = scmp.ne.s32.totalorder %s24, %s25
    %p36 = scmp.eq.s32.totalorder %s16, 0
    %p37 = por %p35, %p36
    %p38 = scmp.ne.s32.totalorder %s24, %s25
    %p39 = scmp.eq.s32.totalorder %s17, 1
    %p40 = por %p38, %p39
    %p42 = scmp.ne.s32.totalorder %s25, %s41
    %p43 = scmp.eq.s32.totalorder %s17, 0
    %p44 = por %p42, %p43
    %s46 = sadd.s32 %s45, 1
    %p49 = scmp.eq.s32.totalorder %s11, 1
    %p50 = scmp.ne.s32.totalorder %s45, %s47
    %p51 = scmp.eq.s32.totalorder %s11, 0
    %p52 = por %p50, %p51
    %p53 = scmp.ne.s32.totalorder %s45, %s47
    %p54 = scmp.eq.s32.totalorder %s16, 1
    %p55 = por %p53, %p54
    %p56 = scmp.ne.s32.totalorder %s47, %s48
    %p57 = scmp.eq.s32.totalorder %s16, 0
    %p58 = por %p56, %p57
    %p59 = scmp.ne.s32.totalorder %s47, %s48
    %p60 = scmp.eq.s32.totalorder %s17, 1
    %p61 = por %p59, %p60
    %p63 = scmp.ne.s32.totalorder %s48, %s62
    %p64 = scmp.eq.s32.totalorder %s17, 0
    %p65 = por %p63, %p64
    %s66 = ssub.s32 %s11, %s18
    %p67 = scmp.eq.s32.totalorder %s66, 0
    %s69 = sadd.s32 %s68, 1
    %s70 = scalar_select %p67, %s68, %s69
    %p73 = pneg %p67
    %p74 = scmp.eq.s32.totalorder %s11, 1
    %p75 = por %p73, %p74
    %p76 = scmp.ne.s32.totalorder %s68, %s71
    %p77 = scmp.eq.s32.totalorder %s11, 0
    %p78 = por %p76, %p77
    %p79 = scmp.ne.s32.totalorder %s68, %s71
    %p80 = scmp.eq.s32.totalorder %s16, 1
    %p81 = por %p79, %p80
    %p82 = scmp.ne.s32.totalorder %s71, %s72
    %p83 = scmp.eq.s32.totalorder %s16, 0
    %p84 = por %p82, %p83
    %p85 = scmp.ne.s32.totalorder %s71, %s72
    %p86 = scmp.eq.s32.totalorder %s17, 1
    %p87 = por %p85, %p86
    %p89 = scmp.ne.s32.totalorder %s72, %s88
    %p90 = scmp.eq.s32.totalorder %s17, 0
    %p91 = por %p89, %p90
    %s92 = ssub.s32 %s11, %s18
    %p93 = scmp.eq.s32.totalorder %s92, 0
    %s95 = sadd.s32 %s94, 1
    %s96 = scalar_select %p93, %s94, %s95
    %p99 = pneg %p93
    %p100 = scmp.eq.s32.totalorder %s11, 1
    %p101 = por %p99, %p100
    %p102 = scmp.ne.s32.totalorder %s94, %s97
    %p103 = scmp.eq.s32.totalorder %s11, 0
    %p104 = por %p102, %p103
    %p105 = scmp.ne.s32.totalorder %s94, %s97
    %p106 = scmp.eq.s32.totalorder %s16, 1
    %p107 = por %p105, %p106
    %p108 = scmp.ne.s32.totalorder %s97, %s98
    %p109 = scmp.eq.s32.totalorder %s16, 0
    %p110 = por %p108, %p109
    %p111 = scmp.ne.s32.totalorder %s97, %s98
    %p112 = scmp.eq.s32.totalorder %s17, 1
    %p113 = por %p111, %p112
    %p115 = scmp.ne.s32.totalorder %s98, %s114
    %p116 = scmp.eq.s32.totalorder %s17, 0
    %p117 = por %p115, %p116
    %s118 = ssub.s32 %s11, %s18
    %p119 = scmp.eq.s32.totalorder %s118, 0
    %s121 = sadd.s32 %s120, 1
    %s122 = scalar_select %p119, %s120, %s121
    %p125 = pneg %p119
    %p126 = scmp.eq.s32.totalorder %s11, 1
    %p127 = por %p125, %p126
    %p128 = scmp.ne.s32.totalorder %s120, %s123
    %p129 = scmp.eq.s32.totalorder %s11, 0
    %p130 = por %p128, %p129
    %p131 = scmp.ne.s32.totalorder %s120, %s123
    %p132 = scmp.eq.s32.totalorder %s16, 1
    %p133 = por %p131, %p132
    %p134 = scmp.ne.s32.totalorder %s123, %s124
    %p135 = scmp.eq.s32.totalorder %s16, 0
    %p136 = por %p134, %p135
    %p137 = scmp.ne.s32.totalorder %s123, %s124
    %p138 = scmp.eq.s32.totalorder %s17, 1
    %p139 = por %p137, %p138
    %p141 = scmp.ne.s32.totalorder %s124, %s140
    %p142 = scmp.eq.s32.totalorder %s17, 0
    %p143 = por %p141, %p142
    %p144 = scmp.le.s32.totalorder 1, %s11
    %p145 = scmp.lt.s32.totalorder %s11, 3
    %p146 = pnand %p144, %p145
    %p147 = pneg %p146
    // Predicated region
    $region9: #{preprocess_block.2} parent=5 // pred_check
      _
    $region10: #{preprocess_block.2} parent=5 // pred_check_branch
      %149 = sbr.rel (%p146) target = $region12
    $region11: #{preprocess_block.2} parent=5 // pred_region
      %s150 = ssub.s32 %s11, 1
      // Predicated region
      $region13: #{preprocess_block.2} parent=11 // pred_check
        %p151 = pneg %p58
      $region14: #{preprocess_block.2} parent=11 // pred_check_branch
        %153 = sbr.rel (%p151) target = $region16
      $region15: #{preprocess_block.2} parent=11 // pred_region
        _
      $region16: #{preprocess_block.2} parent=11 // pred_fallthru
        _
    $region12: #{preprocess_block.2} parent=5 // pred_fallthru
      _
    %p154 = scmp.lt.s32.totalorder %s11, 2
    // Predicated region
    $region17: #{preprocess_block.2} parent=5 // pred_check
      %p155 = pneg %p154
    $region18: #{preprocess_block.2} parent=5 // pred_check_branch
      %157 = sbr.rel (%p155) target = $region20
    $region19: #{preprocess_block.2} parent=5 // pred_region
      // Predicated region
      $region21: #{preprocess_block.2} parent=19 // pred_check
        %p158 = pneg %p31
      $region22: #{preprocess_block.2} parent=19 // pred_check_branch
        %160 = sbr.rel (%p158) target = $region24
      $region23: #{preprocess_block.2} parent=19 // pred_region
        %p161 = scmp.lt.s32.totalorder %s11, 1
        %s162 = scalar_select %p161, %s11, 1
        %s163 = smul.addr %s162, 12
        %s164 = smul.addr %s163, 4
        %s165 = scalar_lea.vmem %s0, %s164
      $region24: #{preprocess_block.2} parent=19 // pred_fallthru
        _
    $region20: #{preprocess_block.2} parent=5 // pred_fallthru
      _
    %p166 = scmp.le.s32.totalorder 1, %s11
    %p167 = scmp.lt.s32.totalorder %s11, 3
    %p168 = pnand %p166, %p167
    %p169 = pneg %p168
    // Predicated region
    $region25: #{preprocess_block.2} parent=5 // pred_check
      _
    $region26: #{preprocess_block.2} parent=5 // pred_check_branch
      %171 = sbr.rel (%p168) target = $region28
    $region27: #{preprocess_block.2} parent=5 // pred_region
      %s172 = ssub.s32 %s11, 1
      %p173 = scmp.lt.s32.totalorder %s16, 1
      %s174 = scalar_select %p173, %s16, 1
      %s175 = smul.addr %s174, 12
      %s176 = smul.addr %s175, 4
      %s177 = scalar_lea.vmem %s0, %s176
      %p178 = pneg %p37
      %p179 = pneg %p34
      %p180 = pneg %p58
      %p181 = pneg %p55
      %p182 = pneg %p84
      %p183 = pneg %p81
      %p184 = scmp.lt.s32.totalorder %s16, 1
      %s185 = scalar_select %p184, %s16, 1
      %s186 = smul.addr %s185, 2
      %s187 = smul.addr %s186, 4
      %s188 = scalar_lea.vmem %s2, %s187
      %p189 = pneg %p110
      %p190 = pneg %p107
      %p191 = scmp.lt.s32.totalorder %s16, 1
      %s192 = scalar_select %p191, %s16, 1
      %s193 = smul.addr %s192, 8
      %s194 = scalar_lea.vmem %s3, %s193
      %p195 = pneg %p136
      %p196 = pneg %p133
      %p197 = scmp.lt.s32.totalorder %s16, 1
      %s198 = scalar_select %p197, %s16, 1
      %s199 = smul.addr %s198, 8
      %s200 = scalar_lea.vmem %s4, %s199
      %p201 = scmp.lt.s32.totalorder %s16, 1
      %s202 = scalar_select %p201, %s16, 1
      %s203 = smul.addr %s202, 12
      %s204 = smul.addr %s203, 4
      %s205 = scalar_lea.vmem %s0, %s204
      %p206 = scmp.lt.s32.totalorder %s16, 1
      %s207 = scalar_select %p206, %s16, 1
      %s208 = smul.addr %s207, 2
      %s209 = smul.addr %s208, 4
      %s210 = scalar_lea.vmem %s2, %s209
      %p211 = scmp.lt.s32.totalorder %s16, 1
      %s212 = scalar_select %p211, %s16, 1
      %s213 = smul.addr %s212, 8
      %s214 = scalar_lea.vmem %s3, %s213
      %p215 = scmp.lt.s32.totalorder %s16, 1
      %s216 = scalar_select %p215, %s16, 1
      %s217 = smul.addr %s216, 8
      %s218 = scalar_lea.vmem %s4, %s217
      %v220 = vld [vmem:[%s205] sm:$0xf]
      %v221 = vld [vmem:[%s205 + $0x4] sm:$0xf]
      %v222 = vld [vmem:[%s205 + $0xc] sm:$0xf]
      %v223 = vld [vmem:[%s205 + $0x10] sm:$0xf]
      %v224 = vld [vmem:[%s205 + $0x18] sm:$0xf]
      %v225 = vld [vmem:[%s205 + $0x1c] sm:$0xf]
      %v226 = vld [vmem:[%s205 + $0x24] sm:$0xf]
      %v227 = vld [vmem:[%s205 + $0x28] sm:$0xf]
      %v230 = vpack.i.b16 %v222, %v220
      %v231 = vshrl.u32 %v220, 16
      %v232 = vshrl.u32 %v222, 16
      %v233 = vpack.i.b16 %v232, %v231
      %v236 = vpack.i.b16 %v226, %v224
      %v237 = vshrl.u32 %v224, 16
      %v238 = vshrl.u32 %v226, 16
      %v239 = vpack.i.b16 %v238, %v237
      %v242 = vpack.i.b16 %v223, %v221
      %v243 = vshrl.u32 %v221, 16
      %v244 = vshrl.u32 %v223, 16
      %v245 = vpack.i.b16 %v244, %v243
      %v248 = vpack.i.b16 %v227, %v225
      %v249 = vshrl.u32 %v225, 16
      %v250 = vshrl.u32 %v227, 16
      %v251 = vpack.i.b16 %v250, %v249
      %v254 = vunpack.c.l.s4 1983009808
      %v255 = vunpack.c.0.s8 %v254
      %v256 = vlaneseq
      %v257 = vshrl.u32 %v256, 7
      %v258 = vsub.s32 %v255, %v257
      %v259 = vrot.slane %v230, %v258
      %v262 = vunpack.c.l.s4 1983009808
      %v263 = vunpack.c.0.s8 %v262
      %v264 = vlaneseq
      %v265 = vshrl.u32 %v264, 7
      %v266 = vsub.s32 %v263, %v265
      %v267 = vrot.slane %v236, %v266
      %v268 = vcombine.low %v259, %v267
      %v269 = vcombine.high %v259, %v267
      %v271 = vunpack.c.l.s4 1934713408
      %v272 = vunpack.c.0.s8 %v271
      %v273 = vlaneseq
      %v274 = vshrl.u32 %v273, 7
      %v275 = vsub.s32 %v272, %v274
      %v276 = vrot.slane %v268, %v275
      %v278 = vunpack.c.l.s4 1934713408
      %v279 = vunpack.c.0.s8 %v278
      %v280 = vlaneseq
      %v281 = vshrl.u32 %v280, 7
      %v282 = vsub.s32 %v279, %v281
      %v283 = vrot.slane %v269, %v282
      %v284 = vcombine.high %v276, 0
      %v285 = vcombine.high %v283, 0
      %v288 = vunpack.c.l.s4 1983009808
      %v289 = vunpack.c.0.s8 %v288
      %v290 = vlaneseq
      %v291 = vshrl.u32 %v290, 7
      %v292 = vsub.s32 %v289, %v291
      %v293 = vrot.slane %v233, %v292
      %v296 = vunpack.c.l.s4 1983009808
      %v297 = vunpack.c.0.s8 %v296
      %v298 = vlaneseq
      %v299 = vshrl.u32 %v298, 7
      %v300 = vsub.s32 %v297, %v299
      %v301 = vrot.slane %v239, %v300
      %v302 = vcombine.low %v293, %v301
      %v303 = vcombine.high %v293, %v301
      %v305 = vunpack.c.l.s4 1934713408
      %v306 = vunpack.c.0.s8 %v305
      %v307 = vlaneseq
      %v308 = vshrl.u32 %v307, 7
      %v309 = vsub.s32 %v306, %v308
      %v310 = vrot.slane %v302, %v309
      %v312 = vunpack.c.l.s4 1934713408
      %v313 = vunpack.c.0.s8 %v312
      %v314 = vlaneseq
      %v315 = vshrl.u32 %v314, 7
      %v316 = vsub.s32 %v313, %v315
      %v317 = vrot.slane %v303, %v316
      %v318 = vcombine.high %v310, 0
      %v319 = vcombine.high %v317, 0
      %v322 = vunpack.c.l.s4 1983009808
      %v323 = vunpack.c.0.s8 %v322
      %v324 = vlaneseq
      %v325 = vshrl.u32 %v324, 7
      %v326 = vsub.s32 %v323, %v325
      %v327 = vrot.slane %v242, %v326
      %v330 = vunpack.c.l.s4 1983009808
      %v331 = vunpack.c.0.s8 %v330
      %v332 = vlaneseq
      %v333 = vshrl.u32 %v332, 7
      %v334 = vsub.s32 %v331, %v333
      %v335 = vrot.slane %v248, %v334
      %v336 = vcombine.low %v327, %v335
      %v337 = vcombine.high %v327, %v335
      %v339 = vunpack.c.l.s4 1934713408
      %v340 = vunpack.c.0.s8 %v339
      %v341 = vlaneseq
      %v342 = vshrl.u32 %v341, 7
      %v343 = vsub.s32 %v340, %v342
      %v344 = vrot.slane %v336, %v343
      %v346 = vunpack.c.l.s4 1934713408
      %v347 = vunpack.c.0.s8 %v346
      %v348 = vlaneseq
      %v349 = vshrl.u32 %v348, 7
      %v350 = vsub.s32 %v347, %v349
      %v351 = vrot.slane %v337, %v350
      %v352 = vcombine.high %v344, 0
      %v353 = vcombine.high %v351, 0
      %v356 = vunpack.c.l.s4 1983009808
      %v357 = vunpack.c.0.s8 %v356
      %v358 = vlaneseq
      %v359 = vshrl.u32 %v358, 7
      %v360 = vsub.s32 %v357, %v359
      %v361 = vrot.slane %v245, %v360
      %v364 = vunpack.c.l.s4 1983009808
      %v365 = vunpack.c.0.s8 %v364
      %v366 = vlaneseq
      %v367 = vshrl.u32 %v366, 7
      %v368 = vsub.s32 %v365, %v367
      %v369 = vrot.slane %v251, %v368
      %v370 = vcombine.low %v361, %v369
      %v371 = vcombine.high %v361, %v369
      %v373 = vunpack.c.l.s4 1934713408
      %v374 = vunpack.c.0.s8 %v373
      %v375 = vlaneseq
      %v376 = vshrl.u32 %v375, 7
      %v377 = vsub.s32 %v374, %v376
      %v378 = vrot.slane %v370, %v377
      %v380 = vunpack.c.l.s4 1934713408
      %v381 = vunpack.c.0.s8 %v380
      %v382 = vlaneseq
      %v383 = vshrl.u32 %v382, 7
      %v384 = vsub.s32 %v381, %v383
      %v385 = vrot.slane %v371, %v384
      %v386 = vcombine.high %v378, 0
      %v387 = vcombine.high %v385, 0
      %v389 = vunpack.c.l.b16 %v310
      %v390 = vpack.c.b16 %v389, %v389
      %391 = vrot.lane.b32.xlu0 %v390, 16
      %v392 = vpop.permute.xlu0 %391
      %v394 = vunpack.c.l.b16 %v284
      %v395 = vpack.c.b16 %v394, %v394
      %396 = vrot.lane.b32.xlu0 %v395, 32
      %v397 = vpop.permute.xlu0 %396
      %v399 = vunpack.c.l.b16 %v318
      %v400 = vpack.c.b16 %v399, %v399
      %401 = vrot.lane.b32.xlu0 %v400, 48
      %v402 = vpop.permute.xlu0 %401
      %v404 = vunpack.c.l.b16 %v283
      %v405 = vpack.c.b16 %v404, %v404
      %406 = vrot.lane.b32.xlu0 %v405, 64
      %v407 = vpop.permute.xlu0 %406
      %v409 = vunpack.c.l.b16 %v317
      %v410 = vpack.c.b16 %v409, %v409
      %411 = vrot.lane.b32.xlu0 %v410, 80
      %v412 = vpop.permute.xlu0 %411
      %v414 = vunpack.c.l.b16 %v285
      %v415 = vpack.c.b16 %v414, %v414
      %416 = vrot.lane.b32.xlu0 %v415, 96
      %v417 = vpop.permute.xlu0 %416
      %v419 = vunpack.c.l.b16 %v319
      %v420 = vpack.c.b16 %v419, %v419
      %421 = vrot.lane.b32.xlu0 %v420, 112
      %v422 = vpop.permute.xlu0 %421
      %v424 = vunpack.c.l.b16 %v378
      %v425 = vpack.c.b16 %v424, %v424
      %426 = vrot.lane.b32.xlu0 %v425, 16
      %v427 = vpop.permute.xlu0 %426
      %v429 = vunpack.c.l.b16 %v352
      %v430 = vpack.c.b16 %v429, %v429
      %431 = vrot.lane.b32.xlu0 %v430, 32
      %v432 = vpop.permute.xlu0 %431
      %v434 = vunpack.c.l.b16 %v386
      %v435 = vpack.c.b16 %v434, %v434
      %436 = vrot.lane.b32.xlu0 %v435, 48
      %v437 = vpop.permute.xlu0 %436
      %v439 = vunpack.c.l.b16 %v351
      %v440 = vpack.c.b16 %v439, %v439
      %441 = vrot.lane.b32.xlu0 %v440, 64
      %v442 = vpop.permute.xlu0 %441
      %v444 = vunpack.c.l.b16 %v385
      %v445 = vpack.c.b16 %v444, %v444
      %446 = vrot.lane.b32.xlu0 %v445, 80
      %v447 = vpop.permute.xlu0 %446
      %v449 = vunpack.c.l.b16 %v353
      %v450 = vpack.c.b16 %v449, %v449
      %451 = vrot.lane.b32.xlu0 %v450, 96
      %v452 = vpop.permute.xlu0 %451
      %v454 = vunpack.c.l.b16 %v387
      %v455 = vpack.c.b16 %v454, %v454
      %456 = vrot.lane.b32.xlu0 %v455, 112
      %v457 = vpop.permute.xlu0 %456
      %vm458 = vcmask 130048
      %v461 = vsel %vm458, %v276, %v392
      %vm462 = vcmask 261120
      %v464 = vsel %vm462, %v461, %v397
      %vm465 = vcmask 392192
      %v467 = vsel %vm465, %v464, %v402
      %vm468 = vcmask 523264
      %v470 = vsel %vm468, %v467, %v407
      %vm471 = vcmask 654336
      %v473 = vsel %vm471, %v470, %v412
      %vm474 = vcmask 785408
      %v476 = vsel %vm474, %v473, %v417
      %vm477 = vcmask 916480
      %v479 = vsel %vm477, %v476, %v422
      %v482 = vsel %vm458, %v344, %v427
      %v484 = vsel %vm462, %v482, %v432
      %v486 = vsel %vm465, %v484, %v437
      %v488 = vsel %vm468, %v486, %v442
      %v490 = vsel %vm471, %v488, %v447
      %v492 = vsel %vm474, %v490, %v452
      %v494 = vsel %vm477, %v492, %v457
      %v495 = vld [vmem:[%s1] sm:$0xf]
      %504 = vrot.lane.b32.xlu0 %v220, 127
      %v505 = vpop.permute.xlu0 %504
      %506 = vrot.lane.b32.xlu0 %v221, 127
      %v507 = vpop.permute.xlu0 %506
      %508 = vrot.lane.b32.xlu0 %v222, 127
      %v509 = vpop.permute.xlu0 %508
      %510 = vrot.lane.b32.xlu0 %v223, 127
      %v511 = vpop.permute.xlu0 %510
      %512 = vrot.lane.b32.xlu0 %v224, 127
      %v513 = vpop.permute.xlu0 %512
      %514 = vrot.lane.b32.xlu0 %v225, 127
      %v515 = vpop.permute.xlu0 %514
      %516 = vrot.lane.b32.xlu0 %v226, 127
      %v517 = vpop.permute.xlu0 %516
      %518 = vrot.lane.b32.xlu0 %v227, 127
      %v519 = vpop.permute.xlu0 %518
      %v522 = vpack.i.b16 %v509, %v505
      %v523 = vshrl.u32 %v505, 16
      %v524 = vshrl.u32 %v509, 16
      %v525 = vpack.i.b16 %v524, %v523
      %v528 = vpack.i.b16 %v517, %v513
      %v529 = vshrl.u32 %v513, 16
      %v530 = vshrl.u32 %v517, 16
      %v531 = vpack.i.b16 %v530, %v529
      %v534 = vpack.i.b16 %v511, %v507
      %v535 = vshrl.u32 %v507, 16
      %v536 = vshrl.u32 %v511, 16
      %v537 = vpack.i.b16 %v536, %v535
      %v540 = vpack.i.b16 %v519, %v515
      %v541 = vshrl.u32 %v515, 16
      %v542 = vshrl.u32 %v519, 16
      %v543 = vpack.i.b16 %v542, %v541
      %v546 = vunpack.c.l.s4 1983009808
      %v547 = vunpack.c.0.s8 %v546
      %v548 = vlaneseq
      %v549 = vshrl.u32 %v548, 7
      %v550 = vsub.s32 %v547, %v549
      %v551 = vrot.slane %v522, %v550
      %v554 = vunpack.c.l.s4 1983009808
      %v555 = vunpack.c.0.s8 %v554
      %v556 = vlaneseq
      %v557 = vshrl.u32 %v556, 7
      %v558 = vsub.s32 %v555, %v557
      %v559 = vrot.slane %v528, %v558
      %v560 = vcombine.low %v551, %v559
      %v561 = vcombine.high %v551, %v559
      %v563 = vunpack.c.l.s4 1934713408
      %v564 = vunpack.c.0.s8 %v563
      %v565 = vlaneseq
      %v566 = vshrl.u32 %v565, 7
      %v567 = vsub.s32 %v564, %v566
      %v568 = vrot.slane %v560, %v567
      %v570 = vunpack.c.l.s4 1934713408
      %v571 = vunpack.c.0.s8 %v570
      %v572 = vlaneseq
      %v573 = vshrl.u32 %v572, 7
      %v574 = vsub.s32 %v571, %v573
      %v575 = vrot.slane %v561, %v574
      %v576 = vcombine.high %v568, 0
      %v577 = vcombine.high %v575, 0
      %v580 = vunpack.c.l.s4 1983009808
      %v581 = vunpack.c.0.s8 %v580
      %v582 = vlaneseq
      %v583 = vshrl.u32 %v582, 7
      %v584 = vsub.s32 %v581, %v583
      %v585 = vrot.slane %v525, %v584
      %v588 = vunpack.c.l.s4 1983009808
      %v589 = vunpack.c.0.s8 %v588
      %v590 = vlaneseq
      %v591 = vshrl.u32 %v590, 7
      %v592 = vsub.s32 %v589, %v591
      %v593 = vrot.slane %v531, %v592
      %v594 = vcombine.low %v585, %v593
      %v595 = vcombine.high %v585, %v593
      %v597 = vunpack.c.l.s4 1934713408
      %v598 = vunpack.c.0.s8 %v597
      %v599 = vlaneseq
      %v600 = vshrl.u32 %v599, 7
      %v601 = vsub.s32 %v598, %v600
      %v602 = vrot.slane %v594, %v601
      %v604 = vunpack.c.l.s4 1934713408
      %v605 = vunpack.c.0.s8 %v604
      %v606 = vlaneseq
      %v607 = vshrl.u32 %v606, 7
      %v608 = vsub.s32 %v605, %v607
      %v609 = vrot.slane %v595, %v608
      %v610 = vcombine.high %v602, 0
      %v611 = vcombine.high %v609, 0
      %v614 = vunpack.c.l.s4 1983009808
      %v615 = vunpack.c.0.s8 %v614
      %v616 = vlaneseq
      %v617 = vshrl.u32 %v616, 7
      %v618 = vsub.s32 %v615, %v617
      %v619 = vrot.slane %v534, %v618
      %v622 = vunpack.c.l.s4 1983009808
      %v623 = vunpack.c.0.s8 %v622
      %v624 = vlaneseq
      %v625 = vshrl.u32 %v624, 7
      %v626 = vsub.s32 %v623, %v625
      %v627 = vrot.slane %v540, %v626
      %v628 = vcombine.low %v619, %v627
      %v629 = vcombine.high %v619, %v627
      %v631 = vunpack.c.l.s4 1934713408
      %v632 = vunpack.c.0.s8 %v631
      %v633 = vlaneseq
      %v634 = vshrl.u32 %v633, 7
      %v635 = vsub.s32 %v632, %v634
      %v636 = vrot.slane %v628, %v635
      %v638 = vunpack.c.l.s4 1934713408
      %v639 = vunpack.c.0.s8 %v638
      %v640 = vlaneseq
      %v641 = vshrl.u32 %v640, 7
      %v642 = vsub.s32 %v639, %v641
      %v643 = vrot.slane %v629, %v642
      %v644 = vcombine.high %v636, 0
      %v645 = vcombine.high %v643, 0
      %v648 = vunpack.c.l.s4 1983009808
      %v649 = vunpack.c.0.s8 %v648
      %v650 = vlaneseq
      %v651 = vshrl.u32 %v650, 7
      %v652 = vsub.s32 %v649, %v651
      %v653 = vrot.slane %v537, %v652
      %v656 = vunpack.c.l.s4 1983009808
      %v657 = vunpack.c.0.s8 %v656
      %v658 = vlaneseq
      %v659 = vshrl.u32 %v658, 7
      %v660 = vsub.s32 %v657, %v659
      %v661 = vrot.slane %v543, %v660
      %v662 = vcombine.low %v653, %v661
      %v663 = vcombine.high %v653, %v661
      %v665 = vunpack.c.l.s4 1934713408
      %v666 = vunpack.c.0.s8 %v665
      %v667 = vlaneseq
      %v668 = vshrl.u32 %v667, 7
      %v669 = vsub.s32 %v666, %v668
      %v670 = vrot.slane %v662, %v669
      %v672 = vunpack.c.l.s4 1934713408
      %v673 = vunpack.c.0.s8 %v672
      %v674 = vlaneseq
      %v675 = vshrl.u32 %v674, 7
      %v676 = vsub.s32 %v673, %v675
      %v677 = vrot.slane %v663, %v676
      %v678 = vcombine.high %v670, 0
      %v679 = vcombine.high %v677, 0
      %v681 = vunpack.c.l.b16 %v602
      %v682 = vpack.c.b16 %v681, %v681
      %683 = vrot.lane.b32.xlu0 %v682, 16
      %v684 = vpop.permute.xlu0 %683
      %v686 = vunpack.c.l.b16 %v576
      %v687 = vpack.c.b16 %v686, %v686
      %688 = vrot.lane.b32.xlu0 %v687, 32
      %v689 = vpop.permute.xlu0 %688
      %v691 = vunpack.c.l.b16 %v610
      %v692 = vpack.c.b16 %v691, %v691
      %693 = vrot.lane.b32.xlu0 %v692, 48
      %v694 = vpop.permute.xlu0 %693
      %v696 = vunpack.c.l.b16 %v575
      %v697 = vpack.c.b16 %v696, %v696
      %698 = vrot.lane.b32.xlu0 %v697, 64
      %v699 = vpop.permute.xlu0 %698
      %v701 = vunpack.c.l.b16 %v609
      %v702 = vpack.c.b16 %v701, %v701
      %703 = vrot.lane.b32.xlu0 %v702, 80
      %v704 = vpop.permute.xlu0 %703
      %v706 = vunpack.c.l.b16 %v577
      %v707 = vpack.c.b16 %v706, %v706
      %708 = vrot.lane.b32.xlu0 %v707, 96
      %v709 = vpop.permute.xlu0 %708
      %v711 = vunpack.c.l.b16 %v611
      %v712 = vpack.c.b16 %v711, %v711
      %713 = vrot.lane.b32.xlu0 %v712, 112
      %v714 = vpop.permute.xlu0 %713
      %v716 = vunpack.c.l.b16 %v670
      %v717 = vpack.c.b16 %v716, %v716
      %718 = vrot.lane.b32.xlu0 %v717, 16
      %v719 = vpop.permute.xlu0 %718
      %v721 = vunpack.c.l.b16 %v644
      %v722 = vpack.c.b16 %v721, %v721
      %723 = vrot.lane.b32.xlu0 %v722, 32
      %v724 = vpop.permute.xlu0 %723
      %v726 = vunpack.c.l.b16 %v678
      %v727 = vpack.c.b16 %v726, %v726
      %728 = vrot.lane.b32.xlu0 %v727, 48
      %v729 = vpop.permute.xlu0 %728
      %v731 = vunpack.c.l.b16 %v643
      %v732 = vpack.c.b16 %v731, %v731
      %733 = vrot.lane.b32.xlu0 %v732, 64
      %v734 = vpop.permute.xlu0 %733
      %v736 = vunpack.c.l.b16 %v677
      %v737 = vpack.c.b16 %v736, %v736
      %738 = vrot.lane.b32.xlu0 %v737, 80
      %v739 = vpop.permute.xlu0 %738
      %v741 = vunpack.c.l.b16 %v645
      %v742 = vpack.c.b16 %v741, %v741
      %743 = vrot.lane.b32.xlu0 %v742, 96
      %v744 = vpop.permute.xlu0 %743
      %v746 = vunpack.c.l.b16 %v679
      %v747 = vpack.c.b16 %v746, %v746
      %748 = vrot.lane.b32.xlu0 %v747, 112
      %v749 = vpop.permute.xlu0 %748
      %v752 = vsel %vm458, %v568, %v684
      %v754 = vsel %vm462, %v752, %v689
      %v756 = vsel %vm465, %v754, %v694
      %v758 = vsel %vm468, %v756, %v699
      %v760 = vsel %vm471, %v758, %v704
      %v762 = vsel %vm474, %v760, %v709
      %v764 = vsel %vm477, %v762, %v714
      %v767 = vsel %vm458, %v636, %v719
      %v769 = vsel %vm462, %v767, %v724
      %v771 = vsel %vm465, %v769, %v729
      %v773 = vsel %vm468, %v771, %v734
      %v775 = vsel %vm471, %v773, %v739
      %v777 = vsel %vm474, %v775, %v744
      %v779 = vsel %vm477, %v777, %v749
      %s780 = scalar_lea.vmem %s1, 4
      %v781 = vld [vmem:[%s780] sm:$0xf]
      %vm782 = vcmask 31744
      %v784 = vsel %vm782, %v781, 0
      %vm786 = vcmask 1041408
      %v787 = vsel %vm786, %v764, 0
      %v789 = vsel %vm786, %v779, 0
      %791 = vmatprep.subr.bf16.mxu0 %v789
      %792 = vmatpush1.bf16.msra.mxu0 %v787
      %793 = vmatprep.subr.bf16.mxu0 0
      %794 = vmatpush1.bf16.msra.mxu0 0
      %795 = vmatprep.subr.bf16.mxu0 0
      %796 = vmatpush1.bf16.msra.mxu0 0
      %797 = vmatprep.subr.bf16.mxu0 0
      %798 = vmatpush1.bf16.msra.mxu0 0
      %799 = vmatprep.subr.bf16.mxu0 0
      %800 = vmatpush1.bf16.msra.mxu0 0
      %801 = vmatprep.subr.bf16.mxu0 0
      %802 = vmatpush1.bf16.msra.mxu0 0
      %803 = vmatprep.subr.bf16.mxu0 0
      %804 = vmatpush1.bf16.msra.mxu0 0
      %805 = vmatprep.subr.bf16.mxu0 0
      %806 = vmatpush1.bf16.msra.mxu0 0
      %807 = vmatprep.subr.bf16.mxu0 0
      %808 = vmatpush1.bf16.msra.mxu0 0
      %809 = vmatprep.subr.bf16.mxu0 0
      %810 = vmatpush1.bf16.msra.mxu0 0
      %811 = vmatprep.subr.bf16.mxu0 0
      %812 = vmatpush1.bf16.msra.mxu0 0
      %813 = vmatprep.subr.bf16.mxu0 0
      %814 = vmatpush1.bf16.msra.mxu0 0
      %815 = vmatprep.subr.bf16.mxu0 0
      %816 = vmatpush1.bf16.msra.mxu0 0
      %817 = vmatprep.subr.bf16.mxu0 0
      %818 = vmatpush1.bf16.msra.mxu0 0
      %819 = vmatprep.subr.bf16.mxu0 0
      %820 = vmatpush1.bf16.msra.mxu0 0
      %821 = vmatprep.subr.bf16.mxu0 0
      %822 = vmatpush1.bf16.msra.mxu0 0
      %823 = vmatprep.mubr.bf16.mxu0 0
      %824 = vmatmul.mubr.bf16.gmra.mrb[0].mxu0 %v784
      %v825 = vpop.f32.mrb[0].mxu0
      %v826 = vadd.f32 0.0, %v825
      %v827 = vpop.f32.mrb[0].mxu0
      %v828 = vadd.f32 0.0, %v827
      %v829 = vpop.f32.mrb[0].mxu0
      %v830 = vpop.f32.mrb[0].mxu0
      %831 = vdwg.mxu0
      %v833 = vsel %vm782, %v495, 0
      %v835 = vsel %vm786, %v479, 0
      %v837 = vsel %vm786, %v494, 0
      %839 = vmatprep.subr.bf16.mxu0 %v837
      %840 = vmatpush1.bf16.msra.mxu0 %v835
      %841 = vmatprep.subr.bf16.mxu0 0
      %842 = vmatpush1.bf16.msra.mxu0 0
      %843 = vmatprep.subr.bf16.mxu0 0
      %844 = vmatpush1.bf16.msra.mxu0 0
      %845 = vmatprep.subr.bf16.mxu0 0
      %846 = vmatpush1.bf16.msra.mxu0 0
      %847 = vmatprep.subr.bf16.mxu0 0
      %848 = vmatpush1.bf16.msra.mxu0 0
      %849 = vmatprep.subr.bf16.mxu0 0
      %850 = vmatpush1.bf16.msra.mxu0 0
      %851 = vmatprep.subr.bf16.mxu0 0
      %852 = vmatpush1.bf16.msra.mxu0 0
      %853 = vmatprep.subr.bf16.mxu0 0
      %854 = vmatpush1.bf16.msra.mxu0 0
      %855 = vmatprep.subr.bf16.mxu0 0
      %856 = vmatpush1.bf16.msra.mxu0 0
      %857 = vmatprep.subr.bf16.mxu0 0
      %858 = vmatpush1.bf16.msra.mxu0 0
      %859 = vmatprep.subr.bf16.mxu0 0
      %860 = vmatpush1.bf16.msra.mxu0 0
      %861 = vmatprep.subr.bf16.mxu0 0
      %862 = vmatpush1.bf16.msra.mxu0 0
      %863 = vmatprep.subr.bf16.mxu0 0
      %864 = vmatpush1.bf16.msra.mxu0 0
      %865 = vmatprep.subr.bf16.mxu0 0
      %866 = vmatpush1.bf16.msra.mxu0 0
      %867 = vmatprep.subr.bf16.mxu0 0
      %868 = vmatpush1.bf16.msra.mxu0 0
      %869 = vmatprep.subr.bf16.mxu0 0
      %870 = vmatpush1.bf16.msra.mxu0 0
      %871 = vmatprep.mubr.bf16.mxu0 0
      %872 = vmatmul.mubr.bf16.gmra.mrb[0].mxu0 %v833
      %v873 = vpop.f32.mrb[0].mxu0
      %v874 = vadd.f32 %v826, %v873
      %v875 = vpop.f32.mrb[0].mxu0
      %v876 = vadd.f32 %v828, %v875
      %v877 = vpop.f32.mrb[0].mxu0
      %v878 = vpop.f32.mrb[0].mxu0
      %879 = vdwg.mxu0
      %v880 = vld [vmem:[%s205] sm:$0xf]
      %v881 = vld [vmem:[%s205 + $0x4] sm:$0xf]
      %v882 = vld [vmem:[%s205 + $0xc] sm:$0xf]
      %v883 = vld [vmem:[%s205 + $0x10] sm:$0xf]
      %v884 = vld [vmem:[%s205 + $0x18] sm:$0xf]
      %v885 = vld [vmem:[%s205 + $0x1c] sm:$0xf]
      %v886 = vld [vmem:[%s205 + $0x24] sm:$0xf]
      %v887 = vld [vmem:[%s205 + $0x28] sm:$0xf]
      %896 = vrot.lane.b32.xlu0 %v880, 126
      %v897 = vpop.permute.xlu0 %896
      %898 = vrot.lane.b32.xlu0 %v881, 126
      %v899 = vpop.permute.xlu0 %898
      %900 = vrot.lane.b32.xlu0 %v882, 126
      %v901 = vpop.permute.xlu0 %900
      %902 = vrot.lane.b32.xlu0 %v883, 126
      %v903 = vpop.permute.xlu0 %902
      %904 = vrot.lane.b32.xlu0 %v884, 126
      %v905 = vpop.permute.xlu0 %904
      %906 = vrot.lane.b32.xlu0 %v885, 126
      %v907 = vpop.permute.xlu0 %906
      %908 = vrot.lane.b32.xlu0 %v886, 126
      %v909 = vpop.permute.xlu0 %908
      %910 = vrot.lane.b32.xlu0 %v887, 126
      %v911 = vpop.permute.xlu0 %910
      %v914 = vpack.i.b16 %v901, %v897
      %v915 = vshrl.u32 %v897, 16
      %v916 = vshrl.u32 %v901, 16
      %v917 = vpack.i.b16 %v916, %v915
      %v920 = vpack.i.b16 %v909, %v905
      %v921 = vshrl.u32 %v905, 16
      %v922 = vshrl.u32 %v909, 16
      %v923 = vpack.i.b16 %v922, %v921
      %v926 = vpack.i.b16 %v903, %v899
      %v927 = vshrl.u32 %v899, 16
      %v928 = vshrl.u32 %v903, 16
      %v929 = vpack.i.b16 %v928, %v927
      %v932 = vpack.i.b16 %v911, %v907
      %v933 = vshrl.u32 %v907, 16
      %v934 = vshrl.u32 %v911, 16
      %v935 = vpack.i.b16 %v934, %v933
      %v938 = vunpack.c.l.s4 1983009808
      %v939 = vunpack.c.0.s8 %v938
      %v940 = vlaneseq
      %v941 = vshrl.u32 %v940, 7
      %v942 = vsub.s32 %v939, %v941
      %v943 = vrot.slane %v914, %v942
      %v946 = vunpack.c.l.s4 1983009808
      %v947 = vunpack.c.0.s8 %v946
      %v948 = vlaneseq
      %v949 = vshrl.u32 %v948, 7
      %v950 = vsub.s32 %v947, %v949
      %v951 = vrot.slane %v920, %v950
      %v952 = vcombine.low %v943, %v951
      %v953 = vcombine.high %v943, %v951
      %v955 = vunpack.c.l.s4 1934713408
      %v956 = vunpack.c.0.s8 %v955
      %v957 = vlaneseq
      %v958 = vshrl.u32 %v957, 7
      %v959 = vsub.s32 %v956, %v958
      %v960 = vrot.slane %v952, %v959
      %v962 = vunpack.c.l.s4 1934713408
      %v963 = vunpack.c.0.s8 %v962
      %v964 = vlaneseq
      %v965 = vshrl.u32 %v964, 7
      %v966 = vsub.s32 %v963, %v965
      %v967 = vrot.slane %v953, %v966
      %v968 = vcombine.high %v960, 0
      %v969 = vcombine.high %v967, 0
      %v972 = vunpack.c.l.s4 1983009808
      %v973 = vunpack.c.0.s8 %v972
      %v974 = vlaneseq
      %v975 = vshrl.u32 %v974, 7
      %v976 = vsub.s32 %v973, %v975
      %v977 = vrot.slane %v917, %v976
      %v980 = vunpack.c.l.s4 1983009808
      %v981 = vunpack.c.0.s8 %v980
      %v982 = vlaneseq
      %v983 = vshrl.u32 %v982, 7
      %v984 = vsub.s32 %v981, %v983
      %v985 = vrot.slane %v923, %v984
      %v986 = vcombine.low %v977, %v985
      %v987 = vcombine.high %v977, %v985
      %v989 = vunpack.c.l.s4 1934713408
      %v990 = vunpack.c.0.s8 %v989
      %v991 = vlaneseq
      %v992 = vshrl.u32 %v991, 7
      %v993 = vsub.s32 %v990, %v992
      %v994 = vrot.slane %v986, %v993
      %v996 = vunpack.c.l.s4 1934713408
      %v997 = vunpack.c.0.s8 %v996
      %v998 = vlaneseq
      %v999 = vshrl.u32 %v998, 7
      %v1000 = vsub.s32 %v997, %v999
      %v1001 = vrot.slane %v987, %v1000
      %v1002 = vcombine.high %v994, 0
      %v1003 = vcombine.high %v1001, 0
      %v1006 = vunpack.c.l.s4 1983009808
      %v1007 = vunpack.c.0.s8 %v1006
      %v1008 = vlaneseq
      %v1009 = vshrl.u32 %v1008, 7
      %v1010 = vsub.s32 %v1007, %v1009
      %v1011 = vrot.slane %v926, %v1010
      %v1014 = vunpack.c.l.s4 1983009808
      %v1015 = vunpack.c.0.s8 %v1014
      %v1016 = vlaneseq
      %v1017 = vshrl.u32 %v1016, 7
      %v1018 = vsub.s32 %v1015, %v1017
      %v1019 = vrot.slane %v932, %v1018
      %v1020 = vcombine.low %v1011, %v1019
      %v1021 = vcombine.high %v1011, %v1019
      %v1023 = vunpack.c.l.s4 1934713408
      %v1024 = vunpack.c.0.s8 %v1023
      %v1025 = vlaneseq
      %v1026 = vshrl.u32 %v1025, 7
      %v1027 = vsub.s32 %v1024, %v1026
      %v1028 = vrot.slane %v1020, %v1027
      %v1030 = vunpack.c.l.s4 1934713408
      %v1031 = vunpack.c.0.s8 %v1030
      %v1032 = vlaneseq
      %v1033 = vshrl.u32 %v1032, 7
      %v1034 = vsub.s32 %v1031, %v1033
      %v1035 = vrot.slane %v1021, %v1034
      %v1036 = vcombine.high %v1028, 0
      %v1037 = vcombine.high %v1035, 0
      %v1040 = vunpack.c.l.s4 1983009808
      %v1041 = vunpack.c.0.s8 %v1040
      %v1042 = vlaneseq
      %v1043 = vshrl.u32 %v1042, 7
      %v1044 = vsub.s32 %v1041, %v1043
      %v1045 = vrot.slane %v929, %v1044
      %v1048 = vunpack.c.l.s4 1983009808
      %v1049 = vunpack.c.0.s8 %v1048
      %v1050 = vlaneseq
      %v1051 = vshrl.u32 %v1050, 7
      %v1052 = vsub.s32 %v1049, %v1051
      %v1053 = vrot.slane %v935, %v1052
      %v1054 = vcombine.low %v1045, %v1053
      %v1055 = vcombine.high %v1045, %v1053
      %v1057 = vunpack.c.l.s4 1934713408
      %v1058 = vunpack.c.0.s8 %v1057
      %v1059 = vlaneseq
      %v1060 = vshrl.u32 %v1059, 7
      %v1061 = vsub.s32 %v1058, %v1060
      %v1062 = vrot.slane %v1054, %v1061
      %v1064 = vunpack.c.l.s4 1934713408
      %v1065 = vunpack.c.0.s8 %v1064
      %v1066 = vlaneseq
      %v1067 = vshrl.u32 %v1066, 7
      %v1068 = vsub.s32 %v1065, %v1067
      %v1069 = vrot.slane %v1055, %v1068
      %v1070 = vcombine.high %v1062, 0
      %v1071 = vcombine.high %v1069, 0
      %v1073 = vunpack.c.l.b16 %v994
      %v1074 = vpack.c.b16 %v1073, %v1073
      %1075 = vrot.lane.b32.xlu0 %v1074, 16
      %v1076 = vpop.permute.xlu0 %1075
      %v1078 = vunpack.c.l.b16 %v968
      %v1079 = vpack.c.b16 %v1078, %v1078
      %1080 = vrot.lane.b32.xlu0 %v1079, 32
      %v1081 = vpop.permute.xlu0 %1080
      %v1083 = vunpack.c.l.b16 %v1002
      %v1084 = vpack.c.b16 %v1083, %v1083
      %1085 = vrot.lane.b32.xlu0 %v1084, 48
      %v1086 = vpop.permute.xlu0 %1085
      %v1088 = vunpack.c.l.b16 %v967
      %v1089 = vpack.c.b16 %v1088, %v1088
      %1090 = vrot.lane.b32.xlu0 %v1089, 64
      %v1091 = vpop.permute.xlu0 %1090
      %v1093 = vunpack.c.l.b16 %v1001
      %v1094 = vpack.c.b16 %v1093, %v1093
      %1095 = vrot.lane.b32.xlu0 %v1094, 80
      %v1096 = vpop.permute.xlu0 %1095
      %v1098 = vunpack.c.l.b16 %v969
      %v1099 = vpack.c.b16 %v1098, %v1098
      %1100 = vrot.lane.b32.xlu0 %v1099, 96
      %v1101 = vpop.permute.xlu0 %1100
      %v1103 = vunpack.c.l.b16 %v1003
      %v1104 = vpack.c.b16 %v1103, %v1103
      %1105 = vrot.lane.b32.xlu0 %v1104, 112
      %v1106 = vpop.permute.xlu0 %1105
      %v1108 = vunpack.c.l.b16 %v1062
      %v1109 = vpack.c.b16 %v1108, %v1108
      %1110 = vrot.lane.b32.xlu0 %v1109, 16
      %v1111 = vpop.permute.xlu0 %1110
      %v1113 = vunpack.c.l.b16 %v1036
      %v1114 = vpack.c.b16 %v1113, %v1113
      %1115 = vrot.lane.b32.xlu0 %v1114, 32
      %v1116 = vpop.permute.xlu0 %1115
      %v1118 = vunpack.c.l.b16 %v1070
      %v1119 = vpack.c.b16 %v1118, %v1118
      %1120 = vrot.lane.b32.xlu0 %v1119, 48
      %v1121 = vpop.permute.xlu0 %1120
      %v1123 = vunpack.c.l.b16 %v1035
      %v1124 = vpack.c.b16 %v1123, %v1123
      %1125 = vrot.lane.b32.xlu0 %v1124, 64
      %v1126 = vpop.permute.xlu0 %1125
      %v1128 = vunpack.c.l.b16 %v1069
      %v1129 = vpack.c.b16 %v1128, %v1128
      %1130 = vrot.lane.b32.xlu0 %v1129, 80
      %v1131 = vpop.permute.xlu0 %1130
      %v1133 = vunpack.c.l.b16 %v1037
      %v1134 = vpack.c.b16 %v1133, %v1133
      %1135 = vrot.lane.b32.xlu0 %v1134, 96
      %v1136 = vpop.permute.xlu0 %1135
      %v1138 = vunpack.c.l.b16 %v1071
      %v1139 = vpack.c.b16 %v1138, %v1138
      %1140 = vrot.lane.b32.xlu0 %v1139, 112
      %v1141 = vpop.permute.xlu0 %1140
      %v1144 = vsel %vm458, %v960, %v1076
      %v1146 = vsel %vm462, %v1144, %v1081
      %v1148 = vsel %vm465, %v1146, %v1086
      %v1150 = vsel %vm468, %v1148, %v1091
      %v1152 = vsel %vm471, %v1150, %v1096
      %v1154 = vsel %vm474, %v1152, %v1101
      %v1156 = vsel %vm477, %v1154, %v1106
      %v1159 = vsel %vm458, %v1028, %v1111
      %v1161 = vsel %vm462, %v1159, %v1116
      %v1163 = vsel %vm465, %v1161, %v1121
      %v1165 = vsel %vm468, %v1163, %v1126
      %v1167 = vsel %vm471, %v1165, %v1131
      %v1169 = vsel %vm474, %v1167, %v1136
      %v1171 = vsel %vm477, %v1169, %v1141
      %s1172 = scalar_lea.vmem %s1, 8
      %v1173 = vld [vmem:[%s1172] sm:$0xf]
      %v1175 = vsel %vm782, %v1173, 0
      %v1177 = vsel %vm786, %v1156, 0
      %v1179 = vsel %vm786, %v1171, 0
      %1181 = vmatprep.subr.bf16.mxu0 %v1179
      %1182 = vmatpush1.bf16.msra.mxu0 %v1177
      %1183 = vmatprep.subr.bf16.mxu0 0
      %1184 = vmatpush1.bf16.msra.mxu0 0
      %1185 = vmatprep.subr.bf16.mxu0 0
      %1186 = vmatpush1.bf16.msra.mxu0 0
      %1187 = vmatprep.subr.bf16.mxu0 0
      %1188 = vmatpush1.bf16.msra.mxu0 0
      %1189 = vmatprep.subr.bf16.mxu0 0
      %1190 = vmatpush1.bf16.msra.mxu0 0
      %1191 = vmatprep.subr.bf16.mxu0 0
      %1192 = vmatpush1.bf16.msra.mxu0 0
      %1193 = vmatprep.subr.bf16.mxu0 0
      %1194 = vmatpush1.bf16.msra.mxu0 0
      %1195 = vmatprep.subr.bf16.mxu0 0
      %1196 = vmatpush1.bf16.msra.mxu0 0
      %1197 = vmatprep.subr.bf16.mxu0 0
      %1198 = vmatpush1.bf16.msra.mxu0 0
      %1199 = vmatprep.subr.bf16.mxu0 0
      %1200 = vmatpush1.bf16.msra.mxu0 0
      %1201 = vmatprep.subr.bf16.mxu0 0
      %1202 = vmatpush1.bf16.msra.mxu0 0
      %1203 = vmatprep.subr.bf16.mxu0 0
      %1204 = vmatpush1.bf16.msra.mxu0 0
      %1205 = vmatprep.subr.bf16.mxu0 0
      %1206 = vmatpush1.bf16.msra.mxu0 0
      %1207 = vmatprep.subr.bf16.mxu0 0
      %1208 = vmatpush1.bf16.msra.mxu0 0
      %1209 = vmatprep.subr.bf16.mxu0 0
      %1210 = vmatpush1.bf16.msra.mxu0 0
      %1211 = vmatprep.subr.bf16.mxu0 0
      %1212 = vmatpush1.bf16.msra.mxu0 0
      %1213 = vmatprep.mubr.bf16.mxu0 0
      %1214 = vmatmul.mubr.bf16.gmra.mrb[0].mxu0 %v1175
      %v1215 = vpop.f32.mrb[0].mxu0
      %v1216 = vadd.f32 0.0, %v1215
      %v1217 = vpop.f32.mrb[0].mxu0
      %v1218 = vadd.f32 0.0, %v1217
      %v1219 = vpop.f32.mrb[0].mxu0
      %v1220 = vpop.f32.mrb[0].mxu0
      %1221 = vdwg.mxu0
      %v1222 = vadd.f32 %v874, %v1216
      %v1223 = vadd.f32 %v876, %v1218
      %v1224 = vld [vmem:[%s205] sm:$0xf]
      %v1225 = vld [vmem:[%s205 + $0x4] sm:$0xf]
      %v1226 = vld [vmem:[%s205 + $0x8] sm:$0x1]
      %v1227 = vld [vmem:[%s205 + $0xc] sm:$0xf]
      %v1228 = vld [vmem:[%s205 + $0x10] sm:$0xf]
      %v1229 = vld [vmem:[%s205 + $0x14] sm:$0x1]
      %v1230 = vld [vmem:[%s205 + $0x18] sm:$0xf]
      %v1231 = vld [vmem:[%s205 + $0x1c] sm:$0xf]
      %v1232 = vld [vmem:[%s205 + $0x20] sm:$0x1]
      %v1233 = vld [vmem:[%s205 + $0x24] sm:$0xf]
      %v1234 = vld [vmem:[%s205 + $0x28] sm:$0xf]
      %v1235 = vld [vmem:[%s205 + $0x2c] sm:$0x1]
      %vm1236 = vsmask.f32 3328
      %vm1237 = vsmask.f32 7440
      %vm1238 = vmor %vm1236, %vm1237
      %v1240 = vshrl.u32 %v1224, 16
      %v1242 = vrot.slane %v1240, 4
      %v1243 = vshll.u32 %v1224, 16
      %v1245 = vrot.slane %v1243, 5
      %v1246 = vor.u32 %v1242, %v1245
      %v1247 = vrot.slane %v1246, 4
      %v1249 = vshll.u32 %v1225, 16
      %v1251 = vrot.slane %v1249, 5
      %v1252 = vsel %vm1238, %v1247, %v1251
      %v1253 = vshrl.u32 %v1225, 16
      %v1255 = vrot.slane %v1253, 4
      %v1256 = vor.u32 %v1255, %v1251
      %v1257 = vrot.slane %v1256, 4
      %v1259 = vshll.u32 %v1226, 16
      %v1261 = vrot.slane %v1259, 5
      %v1262 = vsel %vm1238, %v1257, %v1261
      %v1264 = vshrl.u32 %v1227, 16
      %v1266 = vrot.slane %v1264, 4
      %v1267 = vshll.u32 %v1227, 16
      %v1269 = vrot.slane %v1267, 5
      %v1270 = vor.u32 %v1266, %v1269
      %v1271 = vrot.slane %v1270, 4
      %v1273 = vshll.u32 %v1228, 16
      %v1275 = vrot.slane %v1273, 5
      %v1276 = vsel %vm1238, %v1271, %v1275
      %v1277 = vshrl.u32 %v1228, 16
      %v1279 = vrot.slane %v1277, 4
      %v1280 = vor.u32 %v1279, %v1275
      %v1281 = vrot.slane %v1280, 4
      %v1283 = vshll.u32 %v1229, 16
      %v1285 = vrot.slane %v1283, 5
      %v1286 = vsel %vm1238, %v1281, %v1285
      %v1288 = vshrl.u32 %v1230, 16
      %v1290 = vrot.slane %v1288, 4
      %v1291 = vshll.u32 %v1230, 16
      %v1293 = vrot.slane %v1291, 5
      %v1294 = vor.u32 %v1290, %v1293
      %v1295 = vrot.slane %v1294, 4
      %v1297 = vshll.u32 %v1231, 16
      %v1299 = vrot.slane %v1297, 5
      %v1300 = vsel %vm1238, %v1295, %v1299
      %v1301 = vshrl.u32 %v1231, 16
      %v1303 = vrot.slane %v1301, 4
      %v1304 = vor.u32 %v1303, %v1299
      %v1305 = vrot.slane %v1304, 4
      %v1307 = vshll.u32 %v1232, 16
      %v1309 = vrot.slane %v1307, 5
      %v1310 = vsel %vm1238, %v1305, %v1309
      %v1312 = vshrl.u32 %v1233, 16
      %v1314 = vrot.slane %v1312, 4
      %v1315 = vshll.u32 %v1233, 16
      %v1317 = vrot.slane %v1315, 5
      %v1318 = vor.u32 %v1314, %v1317
      %v1319 = vrot.slane %v1318, 4
      %v1321 = vshll.u32 %v1234, 16
      %v1323 = vrot.slane %v1321, 5
      %v1324 = vsel %vm1238, %v1319, %v1323
      %v1325 = vshrl.u32 %v1234, 16
      %v1327 = vrot.slane %v1325, 4
      %v1328 = vor.u32 %v1327, %v1323
      %v1329 = vrot.slane %v1328, 4
      %v1331 = vshll.u32 %v1235, 16
      %v1333 = vrot.slane %v1331, 5
      %v1334 = vsel %vm1238, %v1329, %v1333
      %v1337 = vpack.i.b16 %v1276, %v1252
      %v1338 = vshrl.u32 %v1252, 16
      %v1339 = vshrl.u32 %v1276, 16
      %v1340 = vpack.i.b16 %v1339, %v1338
      %v1343 = vpack.i.b16 %v1324, %v1300
      %v1344 = vshrl.u32 %v1300, 16
      %v1345 = vshrl.u32 %v1324, 16
      %v1346 = vpack.i.b16 %v1345, %v1344
      %v1349 = vpack.i.b16 %v1286, %v1262
      %v1350 = vshrl.u32 %v1262, 16
      %v1351 = vshrl.u32 %v1286, 16
      %v1352 = vpack.i.b16 %v1351, %v1350
      %v1355 = vpack.i.b16 %v1334, %v1310
      %v1356 = vshrl.u32 %v1310, 16
      %v1357 = vshrl.u32 %v1334, 16
      %v1358 = vpack.i.b16 %v1357, %v1356
      %v1361 = vunpack.c.l.s4 1983009808
      %v1362 = vunpack.c.0.s8 %v1361
      %v1363 = vlaneseq
      %v1364 = vshrl.u32 %v1363, 7
      %v1365 = vsub.s32 %v1362, %v1364
      %v1366 = vrot.slane %v1337, %v1365
      %v1369 = vunpack.c.l.s4 1983009808
      %v1370 = vunpack.c.0.s8 %v1369
      %v1371 = vlaneseq
      %v1372 = vshrl.u32 %v1371, 7
      %v1373 = vsub.s32 %v1370, %v1372
      %v1374 = vrot.slane %v1343, %v1373
      %v1375 = vcombine.low %v1366, %v1374
      %v1376 = vcombine.high %v1366, %v1374
      %v1378 = vunpack.c.l.s4 1934713408
      %v1379 = vunpack.c.0.s8 %v1378
      %v1380 = vlaneseq
      %v1381 = vshrl.u32 %v1380, 7
      %v1382 = vsub.s32 %v1379, %v1381
      %v1383 = vrot.slane %v1375, %v1382
      %v1385 = vunpack.c.l.s4 1934713408
      %v1386 = vunpack.c.0.s8 %v1385
      %v1387 = vlaneseq
      %v1388 = vshrl.u32 %v1387, 7
      %v1389 = vsub.s32 %v1386, %v1388
      %v1390 = vrot.slane %v1376, %v1389
      %v1391 = vcombine.high %v1383, 0
      %v1392 = vcombine.high %v1390, 0
      %v1395 = vunpack.c.l.s4 1983009808
      %v1396 = vunpack.c.0.s8 %v1395
      %v1397 = vlaneseq
      %v1398 = vshrl.u32 %v1397, 7
      %v1399 = vsub.s32 %v1396, %v1398
      %v1400 = vrot.slane %v1340, %v1399
      %v1403 = vunpack.c.l.s4 1983009808
      %v1404 = vunpack.c.0.s8 %v1403
      %v1405 = vlaneseq
      %v1406 = vshrl.u32 %v1405, 7
      %v1407 = vsub.s32 %v1404, %v1406
      %v1408 = vrot.slane %v1346, %v1407
      %v1409 = vcombine.low %v1400, %v1408
      %v1410 = vcombine.high %v1400, %v1408
      %v1412 = vunpack.c.l.s4 1934713408
      %v1413 = vunpack.c.0.s8 %v1412
      %v1414 = vlaneseq
      %v1415 = vshrl.u32 %v1414, 7
      %v1416 = vsub.s32 %v1413, %v1415
      %v1417 = vrot.slane %v1409, %v1416
      %v1419 = vunpack.c.l.s4 1934713408
      %v1420 = vunpack.c.0.s8 %v1419
      %v1421 = vlaneseq
      %v1422 = vshrl.u32 %v1421, 7
      %v1423 = vsub.s32 %v1420, %v1422
      %v1424 = vrot.slane %v1410, %v1423
      %v1425 = vcombine.high %v1417, 0
      %v1426 = vcombine.high %v1424, 0
      %v1429 = vunpack.c.l.s4 1983009808
      %v1430 = vunpack.c.0.s8 %v1429
      %v1431 = vlaneseq
      %v1432 = vshrl.u32 %v1431, 7
      %v1433 = vsub.s32 %v1430, %v1432
      %v1434 = vrot.slane %v1349, %v1433
      %v1437 = vunpack.c.l.s4 1983009808
      %v1438 = vunpack.c.0.s8 %v1437
      %v1439 = vlaneseq
      %v1440 = vshrl.u32 %v1439, 7
      %v1441 = vsub.s32 %v1438, %v1440
      %v1442 = vrot.slane %v1355, %v1441
      %v1443 = vcombine.low %v1434, %v1442
      %v1444 = vcombine.high %v1434, %v1442
      %v1446 = vunpack.c.l.s4 1934713408
      %v1447 = vunpack.c.0.s8 %v1446
      %v1448 = vlaneseq
      %v1449 = vshrl.u32 %v1448, 7
      %v1450 = vsub.s32 %v1447, %v1449
      %v1451 = vrot.slane %v1443, %v1450
      %v1453 = vunpack.c.l.s4 1934713408
      %v1454 = vunpack.c.0.s8 %v1453
      %v1455 = vlaneseq
      %v1456 = vshrl.u32 %v1455, 7
      %v1457 = vsub.s32 %v1454, %v1456
      %v1458 = vrot.slane %v1444, %v1457
      %v1459 = vcombine.high %v1451, 0
      %v1460 = vcombine.high %v1458, 0
      %v1463 = vunpack.c.l.s4 1983009808
      %v1464 = vunpack.c.0.s8 %v1463
      %v1465 = vlaneseq
      %v1466 = vshrl.u32 %v1465, 7
      %v1467 = vsub.s32 %v1464, %v1466
      %v1468 = vrot.slane %v1352, %v1467
      %v1471 = vunpack.c.l.s4 1983009808
      %v1472 = vunpack.c.0.s8 %v1471
      %v1473 = vlaneseq
      %v1474 = vshrl.u32 %v1473, 7
      %v1475 = vsub.s32 %v1472, %v1474
      %v1476 = vrot.slane %v1358, %v1475
      %v1477 = vcombine.low %v1468, %v1476
      %v1478 = vcombine.high %v1468, %v1476
      %v1480 = vunpack.c.l.s4 1934713408
      %v1481 = vunpack.c.0.s8 %v1480
      %v1482 = vlaneseq
      %v1483 = vshrl.u32 %v1482, 7
      %v1484 = vsub.s32 %v1481, %v1483
      %v1485 = vrot.slane %v1477, %v1484
      %v1487 = vunpack.c.l.s4 1934713408
      %v1488 = vunpack.c.0.s8 %v1487
      %v1489 = vlaneseq
      %v1490 = vshrl.u32 %v1489, 7
      %v1491 = vsub.s32 %v1488, %v1490
      %v1492 = vrot.slane %v1478, %v1491
      %v1493 = vcombine.high %v1485, 0
      %v1494 = vcombine.high %v1492, 0
      %v1496 = vunpack.c.l.b16 %v1417
      %v1497 = vpack.c.b16 %v1496, %v1496
      %1498 = vrot.lane.b32.xlu0 %v1497, 16
      %v1499 = vpop.permute.xlu0 %1498
      %v1501 = vunpack.c.l.b16 %v1391
      %v1502 = vpack.c.b16 %v1501, %v1501
      %1503 = vrot.lane.b32.xlu0 %v1502, 32
      %v1504 = vpop.permute.xlu0 %1503
      %v1506 = vunpack.c.l.b16 %v1425
      %v1507 = vpack.c.b16 %v1506, %v1506
      %1508 = vrot.lane.b32.xlu0 %v1507, 48
      %v1509 = vpop.permute.xlu0 %1508
      %v1511 = vunpack.c.l.b16 %v1390
      %v1512 = vpack.c.b16 %v1511, %v1511
      %1513 = vrot.lane.b32.xlu0 %v1512, 64
      %v1514 = vpop.permute.xlu0 %1513
      %v1516 = vunpack.c.l.b16 %v1424
      %v1517 = vpack.c.b16 %v1516, %v1516
      %1518 = vrot.lane.b32.xlu0 %v1517, 80
      %v1519 = vpop.permute.xlu0 %1518
      %v1521 = vunpack.c.l.b16 %v1392
      %v1522 = vpack.c.b16 %v1521, %v1521
      %1523 = vrot.lane.b32.xlu0 %v1522, 96
      %v1524 = vpop.permute.xlu0 %1523
      %v1526 = vunpack.c.l.b16 %v1426
      %v1527 = vpack.c.b16 %v1526, %v1526
      %1528 = vrot.lane.b32.xlu0 %v1527, 112
      %v1529 = vpop.permute.xlu0 %1528
      %v1531 = vunpack.c.l.b16 %v1485
      %v1532 = vpack.c.b16 %v1531, %v1531
      %1533 = vrot.lane.b32.xlu0 %v1532, 16
      %v1534 = vpop.permute.xlu0 %1533
      %v1536 = vunpack.c.l.b16 %v1459
      %v1537 = vpack.c.b16 %v1536, %v1536
      %1538 = vrot.lane.b32.xlu0 %v1537, 32
      %v1539 = vpop.permute.xlu0 %1538
      %v1541 = vunpack.c.l.b16 %v1493
      %v1542 = vpack.c.b16 %v1541, %v1541
      %1543 = vrot.lane.b32.xlu0 %v1542, 48
      %v1544 = vpop.permute.xlu0 %1543
      %v1546 = vunpack.c.l.b16 %v1458
      %v1547 = vpack.c.b16 %v1546, %v1546
      %1548 = vrot.lane.b32.xlu0 %v1547, 64
      %v1549 = vpop.permute.xlu0 %1548
      %v1551 = vunpack.c.l.b16 %v1492
      %v1552 = vpack.c.b16 %v1551, %v1551
      %1553 = vrot.lane.b32.xlu0 %v1552, 80
      %v1554 = vpop.permute.xlu0 %1553
      %v1556 = vunpack.c.l.b16 %v1460
      %v1557 = vpack.c.b16 %v1556, %v1556
      %1558 = vrot.lane.b32.xlu0 %v1557, 96
      %v1559 = vpop.permute.xlu0 %1558
      %v1561 = vunpack.c.l.b16 %v1494
      %v1562 = vpack.c.b16 %v1561, %v1561
      %1563 = vrot.lane.b32.xlu0 %v1562, 112
      %v1564 = vpop.permute.xlu0 %1563
      %v1567 = vsel %vm458, %v1383, %v1499
      %v1569 = vsel %vm462, %v1567, %v1504
      %v1571 = vsel %vm465, %v1569, %v1509
      %v1573 = vsel %vm468, %v1571, %v1514
      %v1575 = vsel %vm471, %v1573, %v1519
      %v1577 = vsel %vm474, %v1575, %v1524
      %v1579 = vsel %vm477, %v1577, %v1529
      %v1582 = vsel %vm458, %v1451, %v1534
      %v1584 = vsel %vm462, %v1582, %v1539
      %v1586 = vsel %vm465, %v1584, %v1544
      %v1588 = vsel %vm468, %v1586, %v1549
      %v1590 = vsel %vm471, %v1588, %v1554
      %v1592 = vsel %vm474, %v1590, %v1559
      %v1594 = vsel %vm477, %v1592, %v1564
      %s1595 = scalar_lea.vmem %s1, 12
      %v1596 = vld [vmem:[%s1595] sm:$0xf]
      %v1598 = vsel %vm782, %v1596, 0
      %v1600 = vsel %vm786, %v1579, 0
      %v1602 = vsel %vm786, %v1594, 0
      %1604 = vmatprep.subr.bf16.mxu0 %v1602
      %1605 = vmatpush1.bf16.msra.mxu0 %v1600
      %1606 = vmatprep.subr.bf16.mxu0 0
      %1607 = vmatpush1.bf16.msra.mxu0 0
      %1608 = vmatprep.subr.bf16.mxu0 0
      %1609 = vmatpush1.bf16.msra.mxu0 0
      %1610 = vmatprep.subr.bf16.mxu0 0
      %1611 = vmatpush1.bf16.msra.mxu0 0
      %1612 = vmatprep.subr.bf16.mxu0 0
      %1613 = vmatpush1.bf16.msra.mxu0 0
      %1614 = vmatprep.subr.bf16.mxu0 0
      %1615 = vmatpush1.bf16.msra.mxu0 0
      %1616 = vmatprep.subr.bf16.mxu0 0
      %1617 = vmatpush1.bf16.msra.mxu0 0
      %1618 = vmatprep.subr.bf16.mxu0 0
      %1619 = vmatpush1.bf16.msra.mxu0 0
      %1620 = vmatprep.subr.bf16.mxu0 0
      %1621 = vmatpush1.bf16.msra.mxu0 0
      %1622 = vmatprep.subr.bf16.mxu0 0
      %1623 = vmatpush1.bf16.msra.mxu0 0
      %1624 = vmatprep.subr.bf16.mxu0 0
      %1625 = vmatpush1.bf16.msra.mxu0 0
      %1626 = vmatprep.subr.bf16.mxu0 0
      %1627 = vmatpush1.bf16.msra.mxu0 0
      %1628 = vmatprep.subr.bf16.mxu0 0
      %1629 = vmatpush1.bf16.msra.mxu0 0
      %1630 = vmatprep.subr.bf16.mxu0 0
      %1631 = vmatpush1.bf16.msra.mxu0 0
      %1632 = vmatprep.subr.bf16.mxu0 0
      %1633 = vmatpush1.bf16.msra.mxu0 0
      %1634 = vmatprep.subr.bf16.mxu0 0
      %1635 = vmatpush1.bf16.msra.mxu0 0
      %1636 = vmatprep.mubr.bf16.mxu0 0
      %1637 = vmatmul.mubr.bf16.gmra.mrb[0].mxu0 %v1598
      %v1638 = vpop.f32.mrb[0].mxu0
      %v1639 = vadd.f32 0.0, %v1638
      %v1640 = vpop.f32.mrb[0].mxu0
      %v1641 = vadd.f32 0.0, %v1640
      %v1642 = vpop.f32.mrb[0].mxu0
      %v1643 = vpop.f32.mrb[0].mxu0
      %1644 = vdwg.mxu0
      %v1645 = vadd.f32 %v1222, %v1639
      %v1646 = vadd.f32 %v1223, %v1641
      %v1647 = vld [vmem:[%s205] sm:$0xf]
      %v1648 = vld [vmem:[%s205 + $0x4] sm:$0xf]
      %v1649 = vld [vmem:[%s205 + $0x8] sm:$0x1]
      %v1650 = vld [vmem:[%s205 + $0xc] sm:$0xf]
      %v1651 = vld [vmem:[%s205 + $0x10] sm:$0xf]
      %v1652 = vld [vmem:[%s205 + $0x14] sm:$0x1]
      %v1653 = vld [vmem:[%s205 + $0x18] sm:$0xf]
      %v1654 = vld [vmem:[%s205 + $0x1c] sm:$0xf]
      %v1655 = vld [vmem:[%s205 + $0x20] sm:$0x1]
      %v1656 = vld [vmem:[%s205 + $0x24] sm:$0xf]
      %v1657 = vld [vmem:[%s205 + $0x28] sm:$0xf]
      %v1658 = vld [vmem:[%s205 + $0x2c] sm:$0x1]
      %v1660 = vshrl.u32 %v1647, 16
      %v1662 = vrot.slane %v1660, 4
      %v1663 = vshll.u32 %v1647, 16
      %v1665 = vrot.slane %v1663, 5
      %v1666 = vor.u32 %v1662, %v1665
      %v1667 = vrot.slane %v1666, 4
      %v1669 = vshll.u32 %v1648, 16
      %v1671 = vrot.slane %v1669, 5
      %v1672 = vsel %vm1238, %v1667, %v1671
      %v1673 = vshrl.u32 %v1648, 16
      %v1675 = vrot.slane %v1673, 4
      %v1676 = vor.u32 %v1675, %v1671
      %v1677 = vrot.slane %v1676, 4
      %v1679 = vshll.u32 %v1649, 16
      %v1681 = vrot.slane %v1679, 5
      %v1682 = vsel %vm1238, %v1677, %v1681
      %v1684 = vshrl.u32 %v1650, 16
      %v1686 = vrot.slane %v1684, 4
      %v1687 = vshll.u32 %v1650, 16
      %v1689 = vrot.slane %v1687, 5
      %v1690 = vor.u32 %v1686, %v1689
      %v1691 = vrot.slane %v1690, 4
      %v1693 = vshll.u32 %v1651, 16
      %v1695 = vrot.slane %v1693, 5
      %v1696 = vsel %vm1238, %v1691, %v1695
      %v1697 = vshrl.u32 %v1651, 16
      %v1699 = vrot.slane %v1697, 4
      %v1700 = vor.u32 %v1699, %v1695
      %v1701 = vrot.slane %v1700, 4
      %v1703 = vshll.u32 %v1652, 16
      %v1705 = vrot.slane %v1703, 5
      %v1706 = vsel %vm1238, %v1701, %v1705
      %v1708 = vshrl.u32 %v1653, 16
      %v1710 = vrot.slane %v1708, 4
      %v1711 = vshll.u32 %v1653, 16
      %v1713 = vrot.slane %v1711, 5
      %v1714 = vor.u32 %v1710, %v1713
      %v1715 = vrot.slane %v1714, 4
      %v1717 = vshll.u32 %v1654, 16
      %v1719 = vrot.slane %v1717, 5
      %v1720 = vsel %vm1238, %v1715, %v1719
      %v1721 = vshrl.u32 %v1654, 16
      %v1723 = vrot.slane %v1721, 4
      %v1724 = vor.u32 %v1723, %v1719
      %v1725 = vrot.slane %v1724, 4
      %v1727 = vshll.u32 %v1655, 16
      %v1729 = vrot.slane %v1727, 5
      %v1730 = vsel %vm1238, %v1725, %v1729
      %v1732 = vshrl.u32 %v1656, 16
      %v1734 = vrot.slane %v1732, 4
      %v1735 = vshll.u32 %v1656, 16
      %v1737 = vrot.slane %v1735, 5
      %v1738 = vor.u32 %v1734, %v1737
      %v1739 = vrot.slane %v1738, 4
      %v1741 = vshll.u32 %v1657, 16
      %v1743 = vrot.slane %v1741, 5
      %v1744 = vsel %vm1238, %v1739, %v1743
      %v1745 = vshrl.u32 %v1657, 16
      %v1747 = vrot.slane %v1745, 4
      %v1748 = vor.u32 %v1747, %v1743
      %v1749 = vrot.slane %v1748, 4
      %v1751 = vshll.u32 %v1658, 16
      %v1753 = vrot.slane %v1751, 5
      %v1754 = vsel %vm1238, %v1749, %v1753
      %1755 = vrot.lane.b32.xlu0 %v1672, 127
      %v1756 = vpop.permute.xlu0 %1755
      %1757 = vrot.lane.b32.xlu0 %v1682, 127
      %v1758 = vpop.permute.xlu0 %1757
      %1759 = vrot.lane.b32.xlu0 %v1696, 127
      %v1760 = vpop.permute.xlu0 %1759
      %1761 = vrot.lane.b32.xlu0 %v1706, 127
      %v1762 = vpop.permute.xlu0 %1761
      %1763 = vrot.lane.b32.xlu0 %v1720, 127
      %v1764 = vpop.permute.xlu0 %1763
      %1765 = vrot.lane.b32.xlu0 %v1730, 127
      %v1766 = vpop.permute.xlu0 %1765
      %1767 = vrot.lane.b32.xlu0 %v1744, 127
      %v1768 = vpop.permute.xlu0 %1767
      %1769 = vrot.lane.b32.xlu0 %v1754, 127
      %v1770 = vpop.permute.xlu0 %1769
      %v1773 = vpack.i.b16 %v1760, %v1756
      %v1774 = vshrl.u32 %v1756, 16
      %v1775 = vshrl.u32 %v1760, 16
      %v1776 = vpack.i.b16 %v1775, %v1774
      %v1779 = vpack.i.b16 %v1768, %v1764
      %v1780 = vshrl.u32 %v1764, 16
      %v1781 = vshrl.u32 %v1768, 16
      %v1782 = vpack.i.b16 %v1781, %v1780
      %v1785 = vpack.i.b16 %v1762, %v1758
      %v1786 = vshrl.u32 %v1758, 16
      %v1787 = vshrl.u32 %v1762, 16
      %v1788 = vpack.i.b16 %v1787, %v1786
      %v1791 = vpack.i.b16 %v1770, %v1766
      %v1792 = vshrl.u32 %v1766, 16
      %v1793 = vshrl.u32 %v1770, 16
      %v1794 = vpack.i.b16 %v1793, %v1792
      %v1797 = vunpack.c.l.s4 1983009808
      %v1798 = vunpack.c.0.s8 %v1797
      %v1799 = vlaneseq
      %v1800 = vshrl.u32 %v1799, 7
      %v1801 = vsub.s32 %v1798, %v1800
      %v1802 = vrot.slane %v1773, %v1801
      %v1805 = vunpack.c.l.s4 1983009808
      %v1806 = vunpack.c.0.s8 %v1805
      %v1807 = vlaneseq
      %v1808 = vshrl.u32 %v1807, 7
      %v1809 = vsub.s32 %v1806, %v1808
      %v1810 = vrot.slane %v1779, %v1809
      %v1811 = vcombine.low %v1802, %v1810
      %v1812 = vcombine.high %v1802, %v1810
      %v1814 = vunpack.c.l.s4 1934713408
      %v1815 = vunpack.c.0.s8 %v1814
      %v1816 = vlaneseq
      %v1817 = vshrl.u32 %v1816, 7
      %v1818 = vsub.s32 %v1815, %v1817
      %v1819 = vrot.slane %v1811, %v1818
      %v1821 = vunpack.c.l.s4 1934713408
      %v1822 = vunpack.c.0.s8 %v1821
      %v1823 = vlaneseq
      %v1824 = vshrl.u32 %v1823, 7
      %v1825 = vsub.s32 %v1822, %v1824
      %v1826 = vrot.slane %v1812, %v1825
      %v1827 = vcombine.high %v1819, 0
      %v1828 = vcombine.high %v1826, 0
      %v1831 = vunpack.c.l.s4 1983009808
      %v1832 = vunpack.c.0.s8 %v1831
      %v1833 = vlaneseq
      %v1834 = vshrl.u32 %v1833, 7
      %v1835 = vsub.s32 %v1832, %v1834
      %v1836 = vrot.slane %v1776, %v1835
      %v1839 = vunpack.c.l.s4 1983009808
      %v1840 = vunpack.c.0.s8 %v1839
      %v1841 = vlaneseq
      %v1842 = vshrl.u32 %v1841, 7
      %v1843 = vsub.s32 %v1840, %v1842
      %v1844 = vrot.slane %v1782, %v1843
      %v1845 = vcombine.low %v1836, %v1844
      %v1846 = vcombine.high %v1836, %v1844
      %v1848 = vunpack.c.l.s4 1934713408
      %v1849 = vunpack.c.0.s8 %v1848
      %v1850 = vlaneseq
      %v1851 = vshrl.u32 %v1850, 7
      %v1852 = vsub.s32 %v1849, %v1851
      %v1853 = vrot.slane %v1845, %v1852
      %v1855 = vunpack.c.l.s4 1934713408
      %v1856 = vunpack.c.0.s8 %v1855
      %v1857 = vlaneseq
      %v1858 = vshrl.u32 %v1857, 7
      %v1859 = vsub.s32 %v1856, %v1858
      %v1860 = vrot.slane %v1846, %v1859
      %v1861 = vcombine.high %v1853, 0
      %v1862 = vcombine.high %v1860, 0
      %v1865 = vunpack.c.l.s4 1983009808
      %v1866 = vunpack.c.0.s8 %v1865
      %v1867 = vlaneseq
      %v1868 = vshrl.u32 %v1867, 7
      %v1869 = vsub.s32 %v1866, %v1868
      %v1870 = vrot.slane %v1785, %v1869
      %v1873 = vunpack.c.l.s4 1983009808
      %v1874 = vunpack.c.0.s8 %v1873
      %v1875 = vlaneseq
      %v1876 = vshrl.u32 %v1875, 7
      %v1877 = vsub.s32 %v1874, %v1876
      %v1878 = vrot.slane %v1791, %v1877
      %v1879 = vcombine.low %v1870, %v1878
      %v1880 = vcombine.high %v1870, %v1878
      %v1882 = vunpack.c.l.s4 1934713408
      %v1883 = vunpack.c.0.s8 %v1882
      %v1884 = vlaneseq
      %v1885 = vshrl.u32 %v1884, 7
      %v1886 = vsub.s32 %v1883, %v1885
      %v1887 = vrot.slane %v1879, %v1886
      %v1889 = vunpack.c.l.s4 1934713408
      %v1890 = vunpack.c.0.s8 %v1889
      %v1891 = vlaneseq
      %v1892 = vshrl.u32 %v1891, 7
      %v1893 = vsub.s32 %v1890, %v1892
      %v1894 = vrot.slane %v1880, %v1893
      %v1895 = vcombine.high %v1887, 0
      %v1896 = vcombine.high %v1894, 0
      %v1899 = vunpack.c.l.s4 1983009808
      %v1900 = vunpack.c.0.s8 %v1899
      %v1901 = vlaneseq
      %v1902 = vshrl.u32 %v1901, 7
      %v1903 = vsub.s32 %v1900, %v1902
      %v1904 = vrot.slane %v1788, %v1903
      %v1907 = vunpack.c.l.s4 1983009808
      %v1908 = vunpack.c.0.s8 %v1907
      %v1909 = vlaneseq
      %v1910 = vshrl.u32 %v1909, 7
      %v1911 = vsub.s32 %v1908, %v1910
      %v1912 = vrot.slane %v1794, %v1911
      %v1913 = vcombine.low %v1904, %v1912
      %v1914 = vcombine.high %v1904, %v1912
      %v1916 = vunpack.c.l.s4 1934713408
      %v1917 = vunpack.c.0.s8 %v1916
      %v1918 = vlaneseq
      %v1919 = vshrl.u32 %v1918, 7
      %v1920 = vsub.s32 %v1917, %v1919
      %v1921 = vrot.slane %v1913, %v1920
      %v1923 = vunpack.c.l.s4 1934713408
      %v1924 = vunpack.c.0.s8 %v1923
      %v1925 = vlaneseq
      %v1926 = vshrl.u32 %v1925, 7
      %v1927 = vsub.s32 %v1924, %v1926
      %v1928 = vrot.slane %v1914, %v1927
      %v1929 = vcombine.high %v1921, 0
      %v1930 = vcombine.high %v1928, 0
      %v1932 = vunpack.c.l.b16 %v1853
      %v1933 = vpack.c.b16 %v1932, %v1932
      %1934 = vrot.lane.b32.xlu0 %v1933, 16
      %v1935 = vpop.permute.xlu0 %1934
      %v1937 = vunpack.c.l.b16 %v1827
      %v1938 = vpack.c.b16 %v1937, %v1937
      %1939 = vrot.lane.b32.xlu0 %v1938, 32
      %v1940 = vpop.permute.xlu0 %1939
      %v1942 = vunpack.c.l.b16 %v1861
      %v1943 = vpack.c.b16 %v1942, %v1942
      %1944 = vrot.lane.b32.xlu0 %v1943, 48
      %v1945 = vpop.permute.xlu0 %1944
      %v1947 = vunpack.c.l.b16 %v1826
      %v1948 = vpack.c.b16 %v1947, %v1947
      %1949 = vrot.lane.b32.xlu0 %v1948, 64
      %v1950 = vpop.permute.xlu0 %1949
      %v1952 = vunpack.c.l.b16 %v1860
      %v1953 = vpack.c.b16 %v1952, %v1952
      %1954 = vrot.lane.b32.xlu0 %v1953, 80
      %v1955 = vpop.permute.xlu0 %1954
      %v1957 = vunpack.c.l.b16 %v1828
      %v1958 = vpack.c.b16 %v1957, %v1957
      %1959 = vrot.lane.b32.xlu0 %v1958, 96
      %v1960 = vpop.permute.xlu0 %1959
      %v1962 = vunpack.c.l.b16 %v1862
      %v1963 = vpack.c.b16 %v1962, %v1962
      %1964 = vrot.lane.b32.xlu0 %v1963, 112
      %v1965 = vpop.permute.xlu0 %1964
      %v1967 = vunpack.c.l.b16 %v1921
      %v1968 = vpack.c.b16 %v1967, %v1967
      %1969 = vrot.lane.b32.xlu0 %v1968, 16
      %v1970 = vpop.permute.xlu0 %1969
      %v1972 = vunpack.c.l.b16 %v1895
      %v1973 = vpack.c.b16 %v1972, %v1972
      %1974 = vrot.lane.b32.xlu0 %v1973, 32
      %v1975 = vpop.permute.xlu0 %1974
      %v1977 = vunpack.c.l.b16 %v1929
      %v1978 = vpack.c.b16 %v1977, %v1977
      %1979 = vrot.lane.b32.xlu0 %v1978, 48
      %v1980 = vpop.permute.xlu0 %1979
      %v1982 = vunpack.c.l.b16 %v1894
      %v1983 = vpack.c.b16 %v1982, %v1982
      %1984 = vrot.lane.b32.xlu0 %v1983, 64
      %v1985 = vpop.permute.xlu0 %1984
      %v1987 = vunpack.c.l.b16 %v1928
      %v1988 = vpack.c.b16 %v1987, %v1987
      %1989 = vrot.lane.b32.xlu0 %v1988, 80
      %v1990 = vpop.permute.xlu0 %1989
      %v1992 = vunpack.c.l.b16 %v1896
      %v1993 = vpack.c.b16 %v1992, %v1992
      %1994 = vrot.lane.b32.xlu0 %v1993, 96
      %v1995 = vpop.permute.xlu0 %1994
      %v1997 = vunpack.c.l.b16 %v1930
      %v1998 = vpack.c.b16 %v1997, %v1997
      %1999 = vrot.lane.b32.xlu0 %v1998, 112
      %v2000 = vpop.permute.xlu0 %1999
      %v2003 = vsel %vm458, %v1819, %v1935
      %v2005 = vsel %vm462, %v2003, %v1940
      %v2007 = vsel %vm465, %v2005, %v1945
      %v2009 = vsel %vm468, %v2007, %v1950
      %v2011 = vsel %vm471, %v2009, %v1955
      %v2013 = vsel %vm474, %v2011, %v1960
      %v2015 = vsel %vm477, %v2013, %v1965
      %v2018 = vsel %vm458, %v1887, %v1970
      %v2020 = vsel %vm462, %v2018, %v1975
      %v2022 = vsel %vm465, %v2020, %v1980
      %v2024 = vsel %vm468, %v2022, %v1985
      %v2026 = vsel %vm471, %v2024, %v1990
      %v2028 = vsel %vm474, %v2026, %v1995
      %v2030 = vsel %vm477, %v2028, %v2000
      %s2031 = scalar_lea.vmem %s1, 16
      %v2032 = vld [vmem:[%s2031] sm:$0xf]
      %v2034 = vsel %vm782, %v2032, 0
      %v2036 = vsel %vm786, %v2015, 0
      %v2038 = vsel %vm786, %v2030, 0
      %2040 = vmatprep.subr.bf16.mxu0 %v2038
      %2041 = vmatpush1.bf16.msra.mxu0 %v2036
      %2042 = vmatprep.subr.bf16.mxu0 0
      %2043 = vmatpush1.bf16.msra.mxu0 0
      %2044 = vmatprep.subr.bf16.mxu0 0
      %2045 = vmatpush1.bf16.msra.mxu0 0
      %2046 = vmatprep.subr.bf16.mxu0 0
      %2047 = vmatpush1.bf16.msra.mxu0 0
      %2048 = vmatprep.subr.bf16.mxu0 0
      %2049 = vmatpush1.bf16.msra.mxu0 0
      %2050 = vmatprep.subr.bf16.mxu0 0
      %2051 = vmatpush1.bf16.msra.mxu0 0
      %2052 = vmatprep.subr.bf16.mxu0 0
      %2053 = vmatpush1.bf16.msra.mxu0 0
      %2054 = vmatprep.subr.bf16.mxu0 0
      %2055 = vmatpush1.bf16.msra.mxu0 0
      %2056 = vmatprep.subr.bf16.mxu0 0
      %2057 = vmatpush1.bf16.msra.mxu0 0
      %2058 = vmatprep.subr.bf16.mxu0 0
      %2059 = vmatpush1.bf16.msra.mxu0 0
      %2060 = vmatprep.subr.bf16.mxu0 0
      %2061 = vmatpush1.bf16.msra.mxu0 0
      %2062 = vmatprep.subr.bf16.mxu0 0
      %2063 = vmatpush1.bf16.msra.mxu0 0
      %2064 = vmatprep.subr.bf16.mxu0 0
      %2065 = vmatpush1.bf16.msra.mxu0 0
      %2066 = vmatprep.subr.bf16.mxu0 0
      %2067 = vmatpush1.bf16.msra.mxu0 0
      %2068 = vmatprep.subr.bf16.mxu0 0
      %2069 = vmatpush1.bf16.msra.mxu0 0
      %2070 = vmatprep.subr.bf16.mxu0 0
      %2071 = vmatpush1.bf16.msra.mxu0 0
      %2072 = vmatprep.mubr.bf16.mxu0 0
      %2073 = vmatmul.mubr.bf16.gmra.mrb[0].mxu0 %v2034
      %v2074 = vpop.f32.mrb[0].mxu0
      %v2075 = vadd.f32 0.0, %v2074
      %v2076 = vpop.f32.mrb[0].mxu0
      %v2077 = vadd.f32 0.0, %v2076
      %v2078 = vpop.f32.mrb[0].mxu0
      %v2079 = vpop.f32.mrb[0].mxu0
      %2080 = vdwg.mxu0
      %v2081 = vadd.f32 %v1645, %v2075
      %v2082 = vadd.f32 %v1646, %v2077
      %v2083 = vld [vmem:[%s205] sm:$0xf]
      %v2084 = vld [vmem:[%s205 + $0x4] sm:$0xf]
      %v2085 = vld [vmem:[%s205 + $0x8] sm:$0x1]
      %v2086 = vld [vmem:[%s205 + $0xc] sm:$0xf]
      %v2087 = vld [vmem:[%s205 + $0x10] sm:$0xf]
      %v2088 = vld [vmem:[%s205 + $0x14] sm:$0x1]
      %v2089 = vld [vmem:[%s205 + $0x18] sm:$0xf]
      %v2090 = vld [vmem:[%s205 + $0x1c] sm:$0xf]
      %v2091 = vld [vmem:[%s205 + $0x20] sm:$0x1]
      %v2092 = vld [vmem:[%s205 + $0x24] sm:$0xf]
      %v2093 = vld [vmem:[%s205 + $0x28] sm:$0xf]
      %v2094 = vld [vmem:[%s205 + $0x2c] sm:$0x1]
      %v2096 = vshrl.u32 %v2083, 16
      %v2098 = vrot.slane %v2096, 4
      %v2099 = vshll.u32 %v2083, 16
      %v2101 = vrot.slane %v2099, 5
      %v2102 = vor.u32 %v2098, %v2101
      %v2103 = vrot.slane %v2102, 4
      %v2105 = vshll.u32 %v2084, 16
      %v2107 = vrot.slane %v2105, 5
      %v2108 = vsel %vm1238, %v2103, %v2107
      %v2109 = vshrl.u32 %v2084, 16
      %v2111 = vrot.slane %v2109, 4
      %v2112 = vor.u32 %v2111, %v2107
      %v2113 = vrot.slane %v2112, 4
      %v2115 = vshll.u32 %v2085, 16
      %v2117 = vrot.slane %v2115, 5
      %v2118 = vsel %vm1238, %v2113, %v2117
      %v2120 = vshrl.u32 %v2086, 16
      %v2122 = vrot.slane %v2120, 4
      %v2123 = vshll.u32 %v2086, 16
      %v2125 = vrot.slane %v2123, 5
      %v2126 = vor.u32 %v2122, %v2125
      %v2127 = vrot.slane %v2126, 4
      %v2129 = vshll.u32 %v2087, 16
      %v2131 = vrot.slane %v2129, 5
      %v2132 = vsel %vm1238, %v2127, %v2131
      %v2133 = vshrl.u32 %v2087, 16
      %v2135 = vrot.slane %v2133, 4
      %v2136 = vor.u32 %v2135, %v2131
      %v2137 = vrot.slane %v2136, 4
      %v2139 = vshll.u32 %v2088, 16
      %v2141 = vrot.slane %v2139, 5
      %v2142 = vsel %vm1238, %v2137, %v2141
      %v2144 = vshrl.u32 %v2089, 16
      %v2146 = vrot.slane %v2144, 4
      %v2147 = vshll.u32 %v2089, 16
      %v2149 = vrot.slane %v2147, 5
      %v2150 = vor.u32 %v2146, %v2149
      %v2151 = vrot.slane %v2150, 4
      %v2153 = vshll.u32 %v2090, 16
      %v2155 = vrot.slane %v2153, 5
      %v2156 = vsel %vm1238, %v2151, %v2155
      %v2157 = vshrl.u32 %v2090, 16
      %v2159 = vrot.slane %v2157, 4
      %v2160 = vor.u32 %v2159, %v2155
      %v2161 = vrot.slane %v2160, 4
      %v2163 = vshll.u32 %v2091, 16
      %v2165 = vrot.slane %v2163, 5
      %v2166 = vsel %vm1238, %v2161, %v2165
      %v2168 = vshrl.u32 %v2092, 16
      %v2170 = vrot.slane %v2168, 4
      %v2171 = vshll.u32 %v2092, 16
      %v2173 = vrot.slane %v2171, 5
      %v2174 = vor.u32 %v2170, %v2173
      %v2175 = vrot.slane %v2174, 4
      %v2177 = vshll.u32 %v2093, 16
      %v2179 = vrot.slane %v2177, 5
      %v2180 = vsel %vm1238, %v2175, %v2179
      %v2181 = vshrl.u32 %v2093, 16
      %v2183 = vrot.slane %v2181, 4
      %v2184 = vor.u32 %v2183, %v2179
      %v2185 = vrot.slane %v2184, 4
      %v2187 = vshll.u32 %v2094, 16
      %v2189 = vrot.slane %v2187, 5
      %v2190 = vsel %vm1238, %v2185, %v2189
      %2191 = vrot.lane.b32.xlu0 %v2108, 126
      %v2192 = vpop.permute.xlu0 %2191
      %2193 = vrot.lane.b32.xlu0 %v2118, 126
      %v2194 = vpop.permute.xlu0 %2193
      %2195 = vrot.lane.b32.xlu0 %v2132, 126
      %v2196 = vpop.permute.xlu0 %2195
      %2197 = vrot.lane.b32.xlu0 %v2142, 126
      %v2198 = vpop.permute.xlu0 %2197
      %2199 = vrot.lane.b32.xlu0 %v2156, 126
      %v2200 = vpop.permute.xlu0 %2199
      %2201 = vrot.lane.b32.xlu0 %v2166, 126
      %v2202 = vpop.permute.xlu0 %2201
      %2203 = vrot.lane.b32.xlu0 %v2180, 126
      %v2204 = vpop.permute.xlu0 %2203
      %2205 = vrot.lane.b32.xlu0 %v2190, 126
      %v2206 = vpop.permute.xlu0 %2205
      %v2209 = vpack.i.b16 %v2196, %v2192
      %v2210 = vshrl.u32 %v2192, 16
      %v2211 = vshrl.u32 %v2196, 16
      %v2212 = vpack.i.b16 %v2211, %v2210
      %v2215 = vpack.i.b16 %v2204, %v2200
      %v2216 = vshrl.u32 %v2200, 16
      %v2217 = vshrl.u32 %v2204, 16
      %v2218 = vpack.i.b16 %v2217, %v2216
      %v2221 = vpack.i.b16 %v2198, %v2194
      %v2222 = vshrl.u32 %v2194, 16
      %v2223 = vshrl.u32 %v2198, 16
      %v2224 = vpack.i.b16 %v2223, %v2222
      %v2227 = vpack.i.b16 %v2206, %v2202
      %v2228 = vshrl.u32 %v2202, 16
      %v2229 = vshrl.u32 %v2206, 16
      %v2230 = vpack.i.b16 %v2229, %v2228
      %v2233 = vunpack.c.l.s4 1983009808
      %v2234 = vunpack.c.0.s8 %v2233
      %v2235 = vlaneseq
      %v2236 = vshrl.u32 %v2235, 7
      %v2237 = vsub.s32 %v2234, %v2236
      %v2238 = vrot.slane %v2209, %v2237
      %v2241 = vunpack.c.l.s4 1983009808
      %v2242 = vunpack.c.0.s8 %v2241
      %v2243 = vlaneseq
      %v2244 = vshrl.u32 %v2243, 7
      %v2245 = vsub.s32 %v2242, %v2244
      %v2246 = vrot.slane %v2215, %v2245
      %v2247 = vcombine.low %v2238, %v2246
      %v2248 = vcombine.high %v2238, %v2246
      %v2250 = vunpack.c.l.s4 1934713408
      %v2251 = vunpack.c.0.s8 %v2250
      %v2252 = vlaneseq
      %v2253 = vshrl.u32 %v2252, 7
      %v2254 = vsub.s32 %v2251, %v2253
      %v2255 = vrot.slane %v2247, %v2254
      %v2257 = vunpack.c.l.s4 1934713408
      %v2258 = vunpack.c.0.s8 %v2257
      %v2259 = vlaneseq
      %v2260 = vshrl.u32 %v2259, 7
      %v2261 = vsub.s32 %v2258, %v2260
      %v2262 = vrot.slane %v2248, %v2261
      %v2263 = vcombine.high %v2255, 0
      %v2264 = vcombine.high %v2262, 0
      %v2267 = vunpack.c.l.s4 1983009808
      %v2268 = vunpack.c.0.s8 %v2267
      %v2269 = vlaneseq
      %v2270 = vshrl.u32 %v2269, 7
      %v2271 = vsub.s32 %v2268, %v2270
      %v2272 = vrot.slane %v2212, %v2271
      %v2275 = vunpack.c.l.s4 1983009808
      %v2276 = vunpack.c.0.s8 %v2275
      %v2277 = vlaneseq
      %v2278 = vshrl.u32 %v2277, 7
      %v2279 = vsub.s32 %v2276, %v2278
      %v2280 = vrot.slane %v2218, %v2279
      %v2281 = vcombine.low %v2272, %v2280
      %v2282 = vcombine.high %v2272, %v2280
      %v2284 = vunpack.c.l.s4 1934713408
      %v2285 = vunpack.c.0.s8 %v2284
      %v2286 = vlaneseq
      %v2287 = vshrl.u32 %v2286, 7
      %v2288 = vsub.s32 %v2285, %v2287
      %v2289 = vrot.slane %v2281, %v2288
      %v2291 = vunpack.c.l.s4 1934713408
      %v2292 = vunpack.c.0.s8 %v2291
      %v2293 = vlaneseq
      %v2294 = vshrl.u32 %v2293, 7
      %v2295 = vsub.s32 %v2292, %v2294
      %v2296 = vrot.slane %v2282, %v2295
      %v2297 = vcombine.high %v2289, 0
      %v2298 = vcombine.high %v2296, 0
      %v2301 = vunpack.c.l.s4 1983009808
      %v2302 = vunpack.c.0.s8 %v2301
      %v2303 = vlaneseq
      %v2304 = vshrl.u32 %v2303, 7
      %v2305 = vsub.s32 %v2302, %v2304
      %v2306 = vrot.slane %v2221, %v2305
      %v2309 = vunpack.c.l.s4 1983009808
      %v2310 = vunpack.c.0.s8 %v2309
      %v2311 = vlaneseq
      %v2312 = vshrl.u32 %v2311, 7
      %v2313 = vsub.s32 %v2310, %v2312
      %v2314 = vrot.slane %v2227, %v2313
      %v2315 = vcombine.low %v2306, %v2314
      %v2316 = vcombine.high %v2306, %v2314
      %v2318 = vunpack.c.l.s4 1934713408
      %v2319 = vunpack.c.0.s8 %v2318
      %v2320 = vlaneseq
      %v2321 = vshrl.u32 %v2320, 7
      %v2322 = vsub.s32 %v2319, %v2321
      %v2323 = vrot.slane %v2315, %v2322
      %v2325 = vunpack.c.l.s4 1934713408
      %v2326 = vunpack.c.0.s8 %v2325
      %v2327 = vlaneseq
      %v2328 = vshrl.u32 %v2327, 7
      %v2329 = vsub.s32 %v2326, %v2328
      %v2330 = vrot.slane %v2316, %v2329
      %v2331 = vcombine.high %v2323, 0
      %v2332 = vcombine.high %v2330, 0
      %v2335 = vunpack.c.l.s4 1983009808
      %v2336 = vunpack.c.0.s8 %v2335
      %v2337 = vlaneseq
      %v2338 = vshrl.u32 %v2337, 7
      %v2339 = vsub.s32 %v2336, %v2338
      %v2340 = vrot.slane %v2224, %v2339
      %v2343 = vunpack.c.l.s4 1983009808
      %v2344 = vunpack.c.0.s8 %v2343
      %v2345 = vlaneseq
      %v2346 = vshrl.u32 %v2345, 7
      %v2347 = vsub.s32 %v2344, %v2346
      %v2348 = vrot.slane %v2230, %v2347
      %v2349 = vcombine.low %v2340, %v2348
      %v2350 = vcombine.high %v2340, %v2348
      %v2352 = vunpack.c.l.s4 1934713408
      %v2353 = vunpack.c.0.s8 %v2352
      %v2354 = vlaneseq
      %v2355 = vshrl.u32 %v2354, 7
      %v2356 = vsub.s32 %v2353, %v2355
      %v2357 = vrot.slane %v2349, %v2356
      %v2359 = vunpack.c.l.s4 1934713408
      %v2360 = vunpack.c.0.s8 %v2359
      %v2361 = vlaneseq
      %v2362 = vshrl.u32 %v2361, 7
      %v2363 = vsub.s32 %v2360, %v2362
      %v2364 = vrot.slane %v2350, %v2363
      %v2365 = vcombine.high %v2357, 0
      %v2366 = vcombine.high %v2364, 0
      %v2368 = vunpack.c.l.b16 %v2289
      %v2369 = vpack.c.b16 %v2368, %v2368
      %2370 = vrot.lane.b32.xlu0 %v2369, 16
      %v2371 = vpop.permute.xlu0 %2370
      %v2373 = vunpack.c.l.b16 %v2263
      %v2374 = vpack.c.b16 %v2373, %v2373
      %2375 = vrot.lane.b32.xlu0 %v2374, 32
      %v2376 = vpop.permute.xlu0 %2375
      %v2378 = vunpack.c.l.b16 %v2297
      %v2379 = vpack.c.b16 %v2378, %v2378
      %2380 = vrot.lane.b32.xlu0 %v2379, 48
      %v2381 = vpop.permute.xlu0 %2380
      %v2383 = vunpack.c.l.b16 %v2262
      %v2384 = vpack.c.b16 %v2383, %v2383
      %2385 = vrot.lane.b32.xlu0 %v2384, 64
      %v2386 = vpop.permute.xlu0 %2385
      %v2388 = vunpack.c.l.b16 %v2296
      %v2389 = vpack.c.b16 %v2388, %v2388
      %2390 = vrot.lane.b32.xlu0 %v2389, 80
      %v2391 = vpop.permute.xlu0 %2390
      %v2393 = vunpack.c.l.b16 %v2264
      %v2394 = vpack.c.b16 %v2393, %v2393
      %2395 = vrot.lane.b32.xlu0 %v2394, 96
      %v2396 = vpop.permute.xlu0 %2395
      %v2398 = vunpack.c.l.b16 %v2298
      %v2399 = vpack.c.b16 %v2398, %v2398
      %2400 = vrot.lane.b32.xlu0 %v2399, 112
      %v2401 = vpop.permute.xlu0 %2400
      %v2403 = vunpack.c.l.b16 %v2357
      %v2404 = vpack.c.b16 %v2403, %v2403
      %2405 = vrot.lane.b32.xlu0 %v2404, 16
      %v2406 = vpop.permute.xlu0 %2405
      %v2408 = vunpack.c.l.b16 %v2331
      %v2409 = vpack.c.b16 %v2408, %v2408
      %2410 = vrot.lane.b32.xlu0 %v2409, 32
      %v2411 = vpop.permute.xlu0 %2410
      %v2413 = vunpack.c.l.b16 %v2365
      %v2414 = vpack.c.b16 %v2413, %v2413
      %2415 = vrot.lane.b32.xlu0 %v2414, 48
      %v2416 = vpop.permute.xlu0 %2415
      %v2418 = vunpack.c.l.b16 %v2330
      %v2419 = vpack.c.b16 %v2418, %v2418
      %2420 = vrot.lane.b32.xlu0 %v2419, 64
      %v2421 = vpop.permute.xlu0 %2420
      %v2423 = vunpack.c.l.b16 %v2364
      %v2424 = vpack.c.b16 %v2423, %v2423
      %2425 = vrot.lane.b32.xlu0 %v2424, 80
      %v2426 = vpop.permute.xlu0 %2425
      %v2428 = vunpack.c.l.b16 %v2332
      %v2429 = vpack.c.b16 %v2428, %v2428
      %2430 = vrot.lane.b32.xlu0 %v2429, 96
      %v2431 = vpop.permute.xlu0 %2430
      %v2433 = vunpack.c.l.b16 %v2366
      %v2434 = vpack.c.b16 %v2433, %v2433
      %2435 = vrot.lane.b32.xlu0 %v2434, 112
      %v2436 = vpop.permute.xlu0 %2435
      %v2439 = vsel %vm458, %v2255, %v2371
      %v2441 = vsel %vm462, %v2439, %v2376
      %v2443 = vsel %vm465, %v2441, %v2381
      %v2445 = vsel %vm468, %v2443, %v2386
      %v2447 = vsel %vm471, %v2445, %v2391
      %v2449 = vsel %vm474, %v2447, %v2396
      %v2451 = vsel %vm477, %v2449, %v2401
      %v2454 = vsel %vm458, %v2323, %v2406
      %v2456 = vsel %vm462, %v2454, %v2411
      %v2458 = vsel %vm465, %v2456, %v2416
      %v2460 = vsel %vm468, %v2458, %v2421
      %v2462 = vsel %vm471, %v2460, %v2426
      %v2464 = vsel %vm474, %v2462, %v2431
      %v2466 = vsel %vm477, %v2464, %v2436
      %s2467 = scalar_lea.vmem %s1, 20
      %v2468 = vld [vmem:[%s2467] sm:$0xf]
      %v2470 = vsel %vm782, %v2468, 0
      %v2472 = vsel %vm786, %v2451, 0
      %v2474 = vsel %vm786, %v2466, 0
      %2476 = vmatprep.subr.bf16.mxu0 %v2474
      %2477 = vmatpush1.bf16.msra.mxu0 %v2472
      %2478 = vmatprep.subr.bf16.mxu0 0
      %2479 = vmatpush1.bf16.msra.mxu0 0
      %2480 = vmatprep.subr.bf16.mxu0 0
      %2481 = vmatpush1.bf16.msra.mxu0 0
      %2482 = vmatprep.subr.bf16.mxu0 0
      %2483 = vmatpush1.bf16.msra.mxu0 0
      %2484 = vmatprep.subr.bf16.mxu0 0
      %2485 = vmatpush1.bf16.msra.mxu0 0
      %2486 = vmatprep.subr.bf16.mxu0 0
      %2487 = vmatpush1.bf16.msra.mxu0 0
      %2488 = vmatprep.subr.bf16.mxu0 0
      %2489 = vmatpush1.bf16.msra.mxu0 0
      %2490 = vmatprep.subr.bf16.mxu0 0
      %2491 = vmatpush1.bf16.msra.mxu0 0
      %2492 = vmatprep.subr.bf16.mxu0 0
      %2493 = vmatpush1.bf16.msra.mxu0 0
      %2494 = vmatprep.subr.bf16.mxu0 0
      %2495 = vmatpush1.bf16.msra.mxu0 0
      %2496 = vmatprep.subr.bf16.mxu0 0
      %2497 = vmatpush1.bf16.msra.mxu0 0
      %2498 = vmatprep.subr.bf16.mxu0 0
      %2499 = vmatpush1.bf16.msra.mxu0 0
      %2500 = vmatprep.subr.bf16.mxu0 0
      %2501 = vmatpush1.bf16.msra.mxu0 0
      %2502 = vmatprep.subr.bf16.mxu0 0
      %2503 = vmatpush1.bf16.msra.mxu0 0
      %2504 = vmatprep.subr.bf16.mxu0 0
      %2505 = vmatpush1.bf16.msra.mxu0 0
      %2506 = vmatprep.subr.bf16.mxu0 0
      %2507 = vmatpush1.bf16.msra.mxu0 0
      %2508 = vmatprep.mubr.bf16.mxu0 0
      %2509 = vmatmul.mubr.bf16.gmra.mrb[0].mxu0 %v2470
      %v2510 = vpop.f32.mrb[0].mxu0
      %v2511 = vadd.f32 0.0, %v2510
      %v2512 = vpop.f32.mrb[0].mxu0
      %v2513 = vadd.f32 0.0, %v2512
      %v2514 = vpop.f32.mrb[0].mxu0
      %v2515 = vpop.f32.mrb[0].mxu0
      %2516 = vdwg.mxu0
      %v2517 = vadd.f32 %v2081, %v2511
      %v2518 = vadd.f32 %v2082, %v2513
      %v2519 = vld [vmem:[%s205] sm:$0xe]
      %v2520 = vld [vmem:[%s205 + $0x4] sm:$0xf]
      %v2521 = vld [vmem:[%s205 + $0x8] sm:$0x1]
      %v2522 = vld [vmem:[%s205 + $0xc] sm:$0xe]
      %v2523 = vld [vmem:[%s205 + $0x10] sm:$0xf]
      %v2524 = vld [vmem:[%s205 + $0x14] sm:$0x1]
      %v2525 = vld [vmem:[%s205 + $0x18] sm:$0xe]
      %v2526 = vld [vmem:[%s205 + $0x1c] sm:$0xf]
      %v2527 = vld [vmem:[%s205 + $0x20] sm:$0x1]
      %v2528 = vld [vmem:[%s205 + $0x24] sm:$0xe]
      %v2529 = vld [vmem:[%s205 + $0x28] sm:$0xf]
      %v2530 = vld [vmem:[%s205 + $0x2c] sm:$0x1]
      %vm2543 = vcmask 1042432
      %vm2544 = vcmask 1046532
      %vm2545 = vmor %vm2543, %vm2544
      %v2546 = vrot.slane %v2519, 5
      %v2547 = vrot.slane %v2546, 4
      %v2548 = vrot.slane %v2520, 5
      %v2549 = vsel %vm2545, %v2547, %v2548
      %v2550 = vrot.slane %v2548, 4
      %v2551 = vrot.slane %v2521, 5
      %v2552 = vsel %vm2545, %v2550, %v2551
      %v2553 = vrot.slane %v2522, 5
      %v2554 = vrot.slane %v2553, 4
      %v2555 = vrot.slane %v2523, 5
      %v2556 = vsel %vm2545, %v2554, %v2555
      %v2557 = vrot.slane %v2555, 4
      %v2558 = vrot.slane %v2524, 5
      %v2559 = vsel %vm2545, %v2557, %v2558
      %v2560 = vrot.slane %v2525, 5
      %v2561 = vrot.slane %v2560, 4
      %v2562 = vrot.slane %v2526, 5
      %v2563 = vsel %vm2545, %v2561, %v2562
      %v2564 = vrot.slane %v2562, 4
      %v2565 = vrot.slane %v2527, 5
      %v2566 = vsel %vm2545, %v2564, %v2565
      %v2567 = vrot.slane %v2528, 5
      %v2568 = vrot.slane %v2567, 4
      %v2569 = vrot.slane %v2529, 5
      %v2570 = vsel %vm2545, %v2568, %v2569
      %v2571 = vrot.slane %v2569, 4
      %v2572 = vrot.slane %v2530, 5
      %v2573 = vsel %vm2545, %v2571, %v2572
      %v2576 = vpack.i.b16 %v2556, %v2549
      %v2577 = vshrl.u32 %v2549, 16
      %v2578 = vshrl.u32 %v2556, 16
      %v2579 = vpack.i.b16 %v2578, %v2577
      %v2582 = vpack.i.b16 %v2570, %v2563
      %v2583 = vshrl.u32 %v2563, 16
      %v2584 = vshrl.u32 %v2570, 16
      %v2585 = vpack.i.b16 %v2584, %v2583
      %v2588 = vpack.i.b16 %v2559, %v2552
      %v2589 = vshrl.u32 %v2552, 16
      %v2590 = vshrl.u32 %v2559, 16
      %v2591 = vpack.i.b16 %v2590, %v2589
      %v2594 = vpack.i.b16 %v2573, %v2566
      %v2595 = vshrl.u32 %v2566, 16
      %v2596 = vshrl.u32 %v2573, 16
      %v2597 = vpack.i.b16 %v2596, %v2595
      %v2600 = vunpack.c.l.s4 1983009808
      %v2601 = vunpack.c.0.s8 %v2600
      %v2602 = vlaneseq
      %v2603 = vshrl.u32 %v2602, 7
      %v2604 = vsub.s32 %v2601, %v2603
      %v2605 = vrot.slane %v2576, %v2604
      %v2608 = vunpack.c.l.s4 1983009808
      %v2609 = vunpack.c.0.s8 %v2608
      %v2610 = vlaneseq
      %v2611 = vshrl.u32 %v2610, 7
      %v2612 = vsub.s32 %v2609, %v2611
      %v2613 = vrot.slane %v2582, %v2612
      %v2614 = vcombine.low %v2605, %v2613
      %v2615 = vcombine.high %v2605, %v2613
      %v2617 = vunpack.c.l.s4 1934713408
      %v2618 = vunpack.c.0.s8 %v2617
      %v2619 = vlaneseq
      %v2620 = vshrl.u32 %v2619, 7
      %v2621 = vsub.s32 %v2618, %v2620
      %v2622 = vrot.slane %v2614, %v2621
      %v2624 = vunpack.c.l.s4 1934713408
      %v2625 = vunpack.c.0.s8 %v2624
      %v2626 = vlaneseq
      %v2627 = vshrl.u32 %v2626, 7
      %v2628 = vsub.s32 %v2625, %v2627
      %v2629 = vrot.slane %v2615, %v2628
      %v2630 = vcombine.high %v2622, 0
      %v2631 = vcombine.high %v2629, 0
      %v2634 = vunpack.c.l.s4 1983009808
      %v2635 = vunpack.c.0.s8 %v2634
      %v2636 = vlaneseq
      %v2637 = vshrl.u32 %v2636, 7
      %v2638 = vsub.s32 %v2635, %v2637
      %v2639 = vrot.slane %v2579, %v2638
      %v2642 = vunpack.c.l.s4 1983009808
      %v2643 = vunpack.c.0.s8 %v2642
      %v2644 = vlaneseq
      %v2645 = vshrl.u32 %v2644, 7
      %v2646 = vsub.s32 %v2643, %v2645
      %v2647 = vrot.slane %v2585, %v2646
      %v2648 = vcombine.low %v2639, %v2647
      %v2649 = vcombine.high %v2639, %v2647
      %v2651 = vunpack.c.l.s4 1934713408
      %v2652 = vunpack.c.0.s8 %v2651
      %v2653 = vlaneseq
      %v2654 = vshrl.u32 %v2653, 7
      %v2655 = vsub.s32 %v2652, %v2654
      %v2656 = vrot.slane %v2648, %v2655
      %v2658 = vunpack.c.l.s4 1934713408
      %v2659 = vunpack.c.0.s8 %v2658
      %v2660 = vlaneseq
      %v2661 = vshrl.u32 %v2660, 7
      %v2662 = vsub.s32 %v2659, %v2661
      %v2663 = vrot.slane %v2649, %v2662
      %v2664 = vcombine.high %v2656, 0
      %v2665 = vcombine.high %v2663, 0
      %v2668 = vunpack.c.l.s4 1983009808
      %v2669 = vunpack.c.0.s8 %v2668
      %v2670 = vlaneseq
      %v2671 = vshrl.u32 %v2670, 7
      %v2672 = vsub.s32 %v2669, %v2671
      %v2673 = vrot.slane %v2588, %v2672
      %v2676 = vunpack.c.l.s4 1983009808
      %v2677 = vunpack.c.0.s8 %v2676
      %v2678 = vlaneseq
      %v2679 = vshrl.u32 %v2678, 7
      %v2680 = vsub.s32 %v2677, %v2679
      %v2681 = vrot.slane %v2594, %v2680
      %v2682 = vcombine.low %v2673, %v2681
      %v2683 = vcombine.high %v2673, %v2681
      %v2685 = vunpack.c.l.s4 1934713408
      %v2686 = vunpack.c.0.s8 %v2685
      %v2687 = vlaneseq
      %v2688 = vshrl.u32 %v2687, 7
      %v2689 = vsub.s32 %v2686, %v2688
      %v2690 = vrot.slane %v2682, %v2689
      %v2692 = vunpack.c.l.s4 1934713408
      %v2693 = vunpack.c.0.s8 %v2692
      %v2694 = vlaneseq
      %v2695 = vshrl.u32 %v2694, 7
      %v2696 = vsub.s32 %v2693, %v2695
      %v2697 = vrot.slane %v2683, %v2696
      %v2698 = vcombine.high %v2690, 0
      %v2699 = vcombine.high %v2697, 0
      %v2702 = vunpack.c.l.s4 1983009808
      %v2703 = vunpack.c.0.s8 %v2702
      %v2704 = vlaneseq
      %v2705 = vshrl.u32 %v2704, 7
      %v2706 = vsub.s32 %v2703, %v2705
      %v2707 = vrot.slane %v2591, %v2706
      %v2710 = vunpack.c.l.s4 1983009808
      %v2711 = vunpack.c.0.s8 %v2710
      %v2712 = vlaneseq
      %v2713 = vshrl.u32 %v2712, 7
      %v2714 = vsub.s32 %v2711, %v2713
      %v2715 = vrot.slane %v2597, %v2714
      %v2716 = vcombine.low %v2707, %v2715
      %v2717 = vcombine.high %v2707, %v2715
      %v2719 = vunpack.c.l.s4 1934713408
      %v2720 = vunpack.c.0.s8 %v2719
      %v2721 = vlaneseq
      %v2722 = vshrl.u32 %v2721, 7
      %v2723 = vsub.s32 %v2720, %v2722
      %v2724 = vrot.slane %v2716, %v2723
      %v2726 = vunpack.c.l.s4 1934713408
      %v2727 = vunpack.c.0.s8 %v2726
      %v2728 = vlaneseq
      %v2729 = vshrl.u32 %v2728, 7
      %v2730 = vsub.s32 %v2727, %v2729
      %v2731 = vrot.slane %v2717, %v2730
      %v2732 = vcombine.high %v2724, 0
      %v2733 = vcombine.high %v2731, 0
      %v2735 = vunpack.c.l.b16 %v2656
      %v2736 = vpack.c.b16 %v2735, %v2735
      %2737 = vrot.lane.b32.xlu0 %v2736, 16
      %v2738 = vpop.permute.xlu0 %2737
      %v2740 = vunpack.c.l.b16 %v2630
      %v2741 = vpack.c.b16 %v2740, %v2740
      %2742 = vrot.lane.b32.xlu0 %v2741, 32
      %v2743 = vpop.permute.xlu0 %2742
      %v2745 = vunpack.c.l.b16 %v2664
      %v2746 = vpack.c.b16 %v2745, %v2745
      %2747 = vrot.lane.b32.xlu0 %v2746, 48
      %v2748 = vpop.permute.xlu0 %2747
      %v2750 = vunpack.c.l.b16 %v2629
      %v2751 = vpack.c.b16 %v2750, %v2750
      %2752 = vrot.lane.b32.xlu0 %v2751, 64
      %v2753 = vpop.permute.xlu0 %2752
      %v2755 = vunpack.c.l.b16 %v2663
      %v2756 = vpack.c.b16 %v2755, %v2755
      %2757 = vrot.lane.b32.xlu0 %v2756, 80
      %v2758 = vpop.permute.xlu0 %2757
      %v2760 = vunpack.c.l.b16 %v2631
      %v2761 = vpack.c.b16 %v2760, %v2760
      %2762 = vrot.lane.b32.xlu0 %v2761, 96
      %v2763 = vpop.permute.xlu0 %2762
      %v2765 = vunpack.c.l.b16 %v2665
      %v2766 = vpack.c.b16 %v2765, %v2765
      %2767 = vrot.lane.b32.xlu0 %v2766, 112
      %v2768 = vpop.permute.xlu0 %2767
      %v2770 = vunpack.c.l.b16 %v2724
      %v2771 = vpack.c.b16 %v2770, %v2770
      %2772 = vrot.lane.b32.xlu0 %v2771, 16
      %v2773 = vpop.permute.xlu0 %2772
      %v2775 = vunpack.c.l.b16 %v2698
      %v2776 = vpack.c.b16 %v2775, %v2775
      %2777 = vrot.lane.b32.xlu0 %v2776, 32
      %v2778 = vpop.permute.xlu0 %2777
      %v2780 = vunpack.c.l.b16 %v2732
      %v2781 = vpack.c.b16 %v2780, %v2780
      %2782 = vrot.lane.b32.xlu0 %v2781, 48
      %v2783 = vpop.permute.xlu0 %2782
      %v2785 = vunpack.c.l.b16 %v2697
      %v2786 = vpack.c.b16 %v2785, %v2785
      %2787 = vrot.lane.b32.xlu0 %v2786, 64
      %v2788 = vpop.permute.xlu0 %2787
      %v2790 = vunpack.c.l.b16 %v2731
      %v2791 = vpack.c.b16 %v2790, %v2790
      %2792 = vrot.lane.b32.xlu0 %v2791, 80
      %v2793 = vpop.permute.xlu0 %2792
      %v2795 = vunpack.c.l.b16 %v2699
      %v2796 = vpack.c.b16 %v2795, %v2795
      %2797 = vrot.lane.b32.xlu0 %v2796, 96
      %v2798 = vpop.permute.xlu0 %2797
      %v2800 = vunpack.c.l.b16 %v2733
      %v2801 = vpack.c.b16 %v2800, %v2800
      %2802 = vrot.lane.b32.xlu0 %v2801, 112
      %v2803 = vpop.permute.xlu0 %2802
      %v2806 = vsel %vm458, %v2622, %v2738
      %v2808 = vsel %vm462, %v2806, %v2743
      %v2810 = vsel %vm465, %v2808, %v2748
      %v2812 = vsel %vm468, %v2810, %v2753
      %v2814 = vsel %vm471, %v2812, %v2758
      %v2816 = vsel %vm474, %v2814, %v2763
      %v2818 = vsel %vm477, %v2816, %v2768
      %v2821 = vsel %vm458, %v2690, %v2773
      %v2823 = vsel %vm462, %v2821, %v2778
      %v2825 = vsel %vm465, %v2823, %v2783
      %v2827 = vsel %vm468, %v2825, %v2788
      %v2829 = vsel %vm471, %v2827, %v2793
      %v2831 = vsel %vm474, %v2829, %v2798
      %v2833 = vsel %vm477, %v2831, %v2803
      %s2834 = scalar_lea.vmem %s1, 24
      %v2835 = vld [vmem:[%s2834] sm:$0xf]
      %v2837 = vsel %vm782, %v2835, 0
      %v2839 = vsel %vm786, %v2818, 0
      %v2841 = vsel %vm786, %v2833, 0
      %2843 = vmatprep.subr.bf16.mxu0 %v2841
      %2844 = vmatpush1.bf16.msra.mxu0 %v2839
      %2845 = vmatprep.subr.bf16.mxu0 0
      %2846 = vmatpush1.bf16.msra.mxu0 0
      %2847 = vmatprep.subr.bf16.mxu0 0
      %2848 = vmatpush1.bf16.msra.mxu0 0
      %2849 = vmatprep.subr.bf16.mxu0 0
      %2850 = vmatpush1.bf16.msra.mxu0 0
      %2851 = vmatprep.subr.bf16.mxu0 0
      %2852 = vmatpush1.bf16.msra.mxu0 0
      %2853 = vmatprep.subr.bf16.mxu0 0
      %2854 = vmatpush1.bf16.msra.mxu0 0
      %2855 = vmatprep.subr.bf16.mxu0 0
      %2856 = vmatpush1.bf16.msra.mxu0 0
      %2857 = vmatprep.subr.bf16.mxu0 0
      %2858 = vmatpush1.bf16.msra.mxu0 0
      %2859 = vmatprep.subr.bf16.mxu0 0
      %2860 = vmatpush1.bf16.msra.mxu0 0
      %2861 = vmatprep.subr.bf16.mxu0 0
      %2862 = vmatpush1.bf16.msra.mxu0 0
      %2863 = vmatprep.subr.bf16.mxu0 0
      %2864 = vmatpush1.bf16.msra.mxu0 0
      %2865 = vmatprep.subr.bf16.mxu0 0
      %2866 = vmatpush1.bf16.msra.mxu0 0
      %2867 = vmatprep.subr.bf16.mxu0 0
      %2868 = vmatpush1.bf16.msra.mxu0 0
      %2869 = vmatprep.subr.bf16.mxu0 0
      %2870 = vmatpush1.bf16.msra.mxu0 0
      %2871 = vmatprep.subr.bf16.mxu0 0
      %2872 = vmatpush1.bf16.msra.mxu0 0
      %2873 = vmatprep.subr.bf16.mxu0 0
      %2874 = vmatpush1.bf16.msra.mxu0 0
      %2875 = vmatprep.mubr.bf16.mxu0 0
      %2876 = vmatmul.mubr.bf16.gmra.mrb[0].mxu0 %v2837
      %v2877 = vpop.f32.mrb[0].mxu0
      %v2878 = vadd.f32 0.0, %v2877
      %v2879 = vpop.f32.mrb[0].mxu0
      %v2880 = vadd.f32 0.0, %v2879
      %v2881 = vpop.f32.mrb[0].mxu0
      %v2882 = vpop.f32.mrb[0].mxu0
      %2883 = vdwg.mxu0
      %v2884 = vadd.f32 %v2517, %v2878
      %v2885 = vadd.f32 %v2518, %v2880
      %v2886 = vld [vmem:[%s205] sm:$0xe]
      %v2887 = vld [vmem:[%s205 + $0x4] sm:$0xf]
      %v2888 = vld [vmem:[%s205 + $0x8] sm:$0x1]
      %v2889 = vld [vmem:[%s205 + $0xc] sm:$0xe]
      %v2890 = vld [vmem:[%s205 + $0x10] sm:$0xf]
      %v2891 = vld [vmem:[%s205 + $0x14] sm:$0x1]
      %v2892 = vld [vmem:[%s205 + $0x18] sm:$0xe]
      %v2893 = vld [vmem:[%s205 + $0x1c] sm:$0xf]
      %v2894 = vld [vmem:[%s205 + $0x20] sm:$0x1]
      %v2895 = vld [vmem:[%s205 + $0x24] sm:$0xe]
      %v2896 = vld [vmem:[%s205 + $0x28] sm:$0xf]
      %v2897 = vld [vmem:[%s205 + $0x2c] sm:$0x1]
      %v2910 = vrot.slane %v2886, 5
      %v2911 = vrot.slane %v2910, 4
      %v2912 = vrot.slane %v2887, 5
      %v2913 = vsel %vm2545, %v2911, %v2912
      %v2914 = vrot.slane %v2912, 4
      %v2915 = vrot.slane %v2888, 5
      %v2916 = vsel %vm2545, %v2914, %v2915
      %v2917 = vrot.slane %v2889, 5
      %v2918 = vrot.slane %v2917, 4
      %v2919 = vrot.slane %v2890, 5
      %v2920 = vsel %vm2545, %v2918, %v2919
      %v2921 = vrot.slane %v2919, 4
      %v2922 = vrot.slane %v2891, 5
      %v2923 = vsel %vm2545, %v2921, %v2922
      %v2924 = vrot.slane %v2892, 5
      %v2925 = vrot.slane %v2924, 4
      %v2926 = vrot.slane %v2893, 5
      %v2927 = vsel %vm2545, %v2925, %v2926
      %v2928 = vrot.slane %v2926, 4
      %v2929 = vrot.slane %v2894, 5
      %v2930 = vsel %vm2545, %v2928, %v2929
      %v2931 = vrot.slane %v2895, 5
      %v2932 = vrot.slane %v2931, 4
      %v2933 = vrot.slane %v2896, 5
      %v2934 = vsel %vm2545, %v2932, %v2933
      %v2935 = vrot.slane %v2933, 4
      %v2936 = vrot.slane %v2897, 5
      %v2937 = vsel %vm2545, %v2935, %v2936
      %2938 = vrot.lane.b32.xlu0 %v2913, 127
      %v2939 = vpop.permute.xlu0 %2938
      %2940 = vrot.lane.b32.xlu0 %v2916, 127
      %v2941 = vpop.permute.xlu0 %2940
      %2942 = vrot.lane.b32.xlu0 %v2920, 127
      %v2943 = vpop.permute.xlu0 %2942
      %2944 = vrot.lane.b32.xlu0 %v2923, 127
      %v2945 = vpop.permute.xlu0 %2944
      %2946 = vrot.lane.b32.xlu0 %v2927, 127
      %v2947 = vpop.permute.xlu0 %2946
      %2948 = vrot.lane.b32.xlu0 %v2930, 127
      %v2949 = vpop.permute.xlu0 %2948
      %2950 = vrot.lane.b32.xlu0 %v2934, 127
      %v2951 = vpop.permute.xlu0 %2950
      %2952 = vrot.lane.b32.xlu0 %v2937, 127
      %v2953 = vpop.permute.xlu0 %2952
      %v2956 = vpack.i.b16 %v2943, %v2939
      %v2957 = vshrl.u32 %v2939, 16
      %v2958 = vshrl.u32 %v2943, 16
      %v2959 = vpack.i.b16 %v2958, %v2957
      %v2962 = vpack.i.b16 %v2951, %v2947
      %v2963 = vshrl.u32 %v2947, 16
      %v2964 = vshrl.u32 %v2951, 16
      %v2965 = vpack.i.b16 %v2964, %v2963
      %v2968 = vpack.i.b16 %v2945, %v2941
      %v2969 = vshrl.u32 %v2941, 16
      %v2970 = vshrl.u32 %v2945, 16
      %v2971 = vpack.i.b16 %v2970, %v2969
      %v2974 = vpack.i.b16 %v2953, %v2949
      %v2975 = vshrl.u32 %v2949, 16
      %v2976 = vshrl.u32 %v2953, 16
      %v2977 = vpack.i.b16 %v2976, %v2975
      %v2980 = vunpack.c.l.s4 1983009808
      %v2981 = vunpack.c.0.s8 %v2980
      %v2982 = vlaneseq
      %v2983 = vshrl.u32 %v2982, 7
      %v2984 = vsub.s32 %v2981, %v2983
      %v2985 = vrot.slane %v2956, %v2984
      %v2988 = vunpack.c.l.s4 1983009808
      %v2989 = vunpack.c.0.s8 %v2988
      %v2990 = vlaneseq
      %v2991 = vshrl.u32 %v2990, 7
      %v2992 = vsub.s32 %v2989, %v2991
      %v2993 = vrot.slane %v2962, %v2992
      %v2994 = vcombine.low %v2985, %v2993
      %v2995 = vcombine.high %v2985, %v2993
      %v2997 = vunpack.c.l.s4 1934713408
      %v2998 = vunpack.c.0.s8 %v2997
      %v2999 = vlaneseq
      %v3000 = vshrl.u32 %v2999, 7
      %v3001 = vsub.s32 %v2998, %v3000
      %v3002 = vrot.slane %v2994, %v3001
      %v3004 = vunpack.c.l.s4 1934713408
      %v3005 = vunpack.c.0.s8 %v3004
      %v3006 = vlaneseq
      %v3007 = vshrl.u32 %v3006, 7
      %v3008 = vsub.s32 %v3005, %v3007
      %v3009 = vrot.slane %v2995, %v3008
      %v3010 = vcombine.high %v3002, 0
      %v3011 = vcombine.high %v3009, 0
      %v3014 = vunpack.c.l.s4 1983009808
      %v3015 = vunpack.c.0.s8 %v3014
      %v3016 = vlaneseq
      %v3017 = vshrl.u32 %v3016, 7
      %v3018 = vsub.s32 %v3015, %v3017
      %v3019 = vrot.slane %v2959, %v3018
      %v3022 = vunpack.c.l.s4 1983009808
      %v3023 = vunpack.c.0.s8 %v3022
      %v3024 = vlaneseq
      %v3025 = vshrl.u32 %v3024, 7
      %v3026 = vsub.s32 %v3023, %v3025
      %v3027 = vrot.slane %v2965, %v3026
      %v3028 = vcombine.low %v3019, %v3027
      %v3029 = vcombine.high %v3019, %v3027
      %v3031 = vunpack.c.l.s4 1934713408
      %v3032 = vunpack.c.0.s8 %v3031
      %v3033 = vlaneseq
      %v3034 = vshrl.u32 %v3033, 7
      %v3035 = vsub.s32 %v3032, %v3034
      %v3036 = vrot.slane %v3028, %v3035
      %v3038 = vunpack.c.l.s4 1934713408
      %v3039 = vunpack.c.0.s8 %v3038
      %v3040 = vlaneseq
      %v3041 = vshrl.u32 %v3040, 7
      %v3042 = vsub.s32 %v3039, %v3041
      %v3043 = vrot.slane %v3029, %v3042
      %v3044 = vcombine.high %v3036, 0
      %v3045 = vcombine.high %v3043, 0
      %v3048 = vunpack.c.l.s4 1983009808
      %v3049 = vunpack.c.0.s8 %v3048
      %v3050 = vlaneseq
      %v3051 = vshrl.u32 %v3050, 7
      %v3052 = vsub.s32 %v3049, %v3051
      %v3053 = vrot.slane %v2968, %v3052
      %v3056 = vunpack.c.l.s4 1983009808
      %v3057 = vunpack.c.0.s8 %v3056
      %v3058 = vlaneseq
      %v3059 = vshrl.u32 %v3058, 7
      %v3060 = vsub.s32 %v3057, %v3059
      %v3061 = vrot.slane %v2974, %v3060
      %v3062 = vcombine.low %v3053, %v3061
      %v3063 = vcombine.high %v3053, %v3061
      %v3065 = vunpack.c.l.s4 1934713408
      %v3066 = vunpack.c.0.s8 %v3065
      %v3067 = vlaneseq
      %v3068 = vshrl.u32 %v3067, 7
      %v3069 = vsub.s32 %v3066, %v3068
      %v3070 = vrot.slane %v3062, %v3069
      %v3072 = vunpack.c.l.s4 1934713408
      %v3073 = vunpack.c.0.s8 %v3072
      %v3074 = vlaneseq
      %v3075 = vshrl.u32 %v3074, 7
      %v3076 = vsub.s32 %v3073, %v3075
      %v3077 = vrot.slane %v3063, %v3076
      %v3078 = vcombine.high %v3070, 0
      %v3079 = vcombine.high %v3077, 0
      %v3082 = vunpack.c.l.s4 1983009808
      %v3083 = vunpack.c.0.s8 %v3082
      %v3084 = vlaneseq
      %v3085 = vshrl.u32 %v3084, 7
      %v3086 = vsub.s32 %v3083, %v3085
      %v3087 = vrot.slane %v2971, %v3086
      %v3090 = vunpack.c.l.s4 1983009808
      %v3091 = vunpack.c.0.s8 %v3090
      %v3092 = vlaneseq
      %v3093 = vshrl.u32 %v3092, 7
      %v3094 = vsub.s32 %v3091, %v3093
      %v3095 = vrot.slane %v2977, %v3094
      %v3096 = vcombine.low %v3087, %v3095
      %v3097 = vcombine.high %v3087, %v3095
      %v3099 = vunpack.c.l.s4 1934713408
      %v3100 = vunpack.c.0.s8 %v3099
      %v3101 = vlaneseq
      %v3102 = vshrl.u32 %v3101, 7
      %v3103 = vsub.s32 %v3100, %v3102
      %v3104 = vrot.slane %v3096, %v3103
      %v3106 = vunpack.c.l.s4 1934713408
      %v3107 = vunpack.c.0.s8 %v3106
      %v3108 = vlaneseq
      %v3109 = vshrl.u32 %v3108, 7
      %v3110 = vsub.s32 %v3107, %v3109
      %v3111 = vrot.slane %v3097, %v3110
      %v3112 = vcombine.high %v3104, 0
      %v3113 = vcombine.high %v3111, 0
      %v3115 = vunpack.c.l.b16 %v3036
      %v3116 = vpack.c.b16 %v3115, %v3115
      %3117 = vrot.lane.b32.xlu0 %v3116, 16
      %v3118 = vpop.permute.xlu0 %3117
      %v3120 = vunpack.c.l.b16 %v3010
      %v3121 = vpack.c.b16 %v3120, %v3120
      %3122 = vrot.lane.b32.xlu0 %v3121, 32
      %v3123 = vpop.permute.xlu0 %3122
      %v3125 = vunpack.c.l.b16 %v3044
      %v3126 = vpack.c.b16 %v3125, %v3125
      %3127 = vrot.lane.b32.xlu0 %v3126, 48
      %v3128 = vpop.permute.xlu0 %3127
      %v3130 = vunpack.c.l.b16 %v3009
      %v3131 = vpack.c.b16 %v3130, %v3130
      %3132 = vrot.lane.b32.xlu0 %v3131, 64
      %v3133 = vpop.permute.xlu0 %3132
      %v3135 = vunpack.c.l.b16 %v3043
      %v3136 = vpack.c.b16 %v3135, %v3135
      %3137 = vrot.lane.b32.xlu0 %v3136, 80
      %v3138 = vpop.permute.xlu0 %3137
      %v3140 = vunpack.c.l.b16 %v3011
      %v3141 = vpack.c.b16 %v3140, %v3140
      %3142 = vrot.lane.b32.xlu0 %v3141, 96
      %v3143 = vpop.permute.xlu0 %3142
      %v3145 = vunpack.c.l.b16 %v3045
      %v3146 = vpack.c.b16 %v3145, %v3145
      %3147 = vrot.lane.b32.xlu0 %v3146, 112
      %v3148 = vpop.permute.xlu0 %3147
      %v3150 = vunpack.c.l.b16 %v3104
      %v3151 = vpack.c.b16 %v3150, %v3150
      %3152 = vrot.lane.b32.xlu0 %v3151, 16
      %v3153 = vpop.permute.xlu0 %3152
      %v3155 = vunpack.c.l.b16 %v3078
      %v3156 = vpack.c.b16 %v3155, %v3155
      %3157 = vrot.lane.b32.xlu0 %v3156, 32
      %v3158 = vpop.permute.xlu0 %3157
      %v3160 = vunpack.c.l.b16 %v3112
      %v3161 = vpack.c.b16 %v3160, %v3160
      %3162 = vrot.lane.b32.xlu0 %v3161, 48
      %v3163 = vpop.permute.xlu0 %3162
      %v3165 = vunpack.c.l.b16 %v3077
      %v3166 = vpack.c.b16 %v3165, %v3165
      %3167 = vrot.lane.b32.xlu0 %v3166, 64
      %v3168 = vpop.permute.xlu0 %3167
      %v3170 = vunpack.c.l.b16 %v3111
      %v3171 = vpack.c.b16 %v3170, %v3170
      %3172 = vrot.lane.b32.xlu0 %v3171, 80
      %v3173 = vpop.permute.xlu0 %3172
      %v3175 = vunpack.c.l.b16 %v3079
      %v3176 = vpack.c.b16 %v3175, %v3175
      %3177 = vrot.lane.b32.xlu0 %v3176, 96
      %v3178 = vpop.permute.xlu0 %3177
      %v3180 = vunpack.c.l.b16 %v3113
      %v3181 = vpack.c.b16 %v3180, %v3180
      %3182 = vrot.lane.b32.xlu0 %v3181, 112
      %v3183 = vpop.permute.xlu0 %3182
      %v3186 = vsel %vm458, %v3002, %v3118
      %v3188 = vsel %vm462, %v3186, %v3123
      %v3190 = vsel %vm465, %v3188, %v3128
      %v3192 = vsel %vm468, %v3190, %v3133
      %v3194 = vsel %vm471, %v3192, %v3138
      %v3196 = vsel %vm474, %v3194, %v3143
      %v3198 = vsel %vm477, %v3196, %v3148
      %v3201 = vsel %vm458, %v3070, %v3153
      %v3203 = vsel %vm462, %v3201, %v3158
      %v3205 = vsel %vm465, %v3203, %v3163
      %v3207 = vsel %vm468, %v3205, %v3168
      %v3209 = vsel %vm471, %v3207, %v3173
      %v3211 = vsel %vm474, %v3209, %v3178
      %v3213 = vsel %vm477, %v3211, %v3183
      %s3214 = scalar_lea.vmem %s1, 28
      %v3215 = vld [vmem:[%s3214] sm:$0xf]
      %v3217 = vsel %vm782, %v3215, 0
      %v3219 = vsel %vm786, %v3198, 0
      %v3221 = vsel %vm786, %v3213, 0
      %3223 = vmatprep.subr.bf16.mxu0 %v3221
      %3224 = vmatpush1.bf16.msra.mxu0 %v3219
      %3225 = vmatprep.subr.bf16.mxu0 0
      %3226 = vmatpush1.bf16.msra.mxu0 0
      %3227 = vmatprep.subr.bf16.mxu0 0
      %3228 = vmatpush1.bf16.msra.mxu0 0
      %3229 = vmatprep.subr.bf16.mxu0 0
      %3230 = vmatpush1.bf16.msra.mxu0 0
      %3231 = vmatprep.subr.bf16.mxu0 0
      %3232 = vmatpush1.bf16.msra.mxu0 0
      %3233 = vmatprep.subr.bf16.mxu0 0
      %3234 = vmatpush1.bf16.msra.mxu0 0
      %3235 = vmatprep.subr.bf16.mxu0 0
      %3236 = vmatpush1.bf16.msra.mxu0 0
      %3237 = vmatprep.subr.bf16.mxu0 0
      %3238 = vmatpush1.bf16.msra.mxu0 0
      %3239 = vmatprep.subr.bf16.mxu0 0
      %3240 = vmatpush1.bf16.msra.mxu0 0
      %3241 = vmatprep.subr.bf16.mxu0 0
      %3242 = vmatpush1.bf16.msra.mxu0 0
      %3243 = vmatprep.subr.bf16.mxu0 0
      %3244 = vmatpush1.bf16.msra.mxu0 0
      %3245 = vmatprep.subr.bf16.mxu0 0
      %3246 = vmatpush1.bf16.msra.mxu0 0
      %3247 = vmatprep.subr.bf16.mxu0 0
      %3248 = vmatpush1.bf16.msra.mxu0 0
      %3249 = vmatprep.subr.bf16.mxu0 0
      %3250 = vmatpush1.bf16.msra.mxu0 0
      %3251 = vmatprep.subr.bf16.mxu0 0
      %3252 = vmatpush1.bf16.msra.mxu0 0
      %3253 = vmatprep.subr.bf16.mxu0 0
      %3254 = vmatpush1.bf16.msra.mxu0 0
      %3255 = vmatprep.mubr.bf16.mxu0 0
      %3256 = vmatmul.mubr.bf16.gmra.mrb[0].mxu0 %v3217
      %v3257 = vpop.f32.mrb[0].mxu0
      %v3258 = vadd.f32 0.0, %v3257
      %v3259 = vpop.f32.mrb[0].mxu0
      %v3260 = vadd.f32 0.0, %v3259
      %v3261 = vpop.f32.mrb[0].mxu0
      %v3262 = vpop.f32.mrb[0].mxu0
      %3263 = vdwg.mxu0
      %v3264 = vadd.f32 %v2884, %v3258
      %v3265 = vadd.f32 %v2885, %v3260
      %v3266 = vld [vmem:[%s205] sm:$0xe]
      %v3267 = vld [vmem:[%s205 + $0x4] sm:$0xf]
      %v3268 = vld [vmem:[%s205 + $0x8] sm:$0x1]
      %v3269 = vld [vmem:[%s205 + $0xc] sm:$0xe]
      %v3270 = vld [vmem:[%s205 + $0x10] sm:$0xf]
      %v3271 = vld [vmem:[%s205 + $0x14] sm:$0x1]
      %v3272 = vld [vmem:[%s205 + $0x18] sm:$0xe]
      %v3273 = vld [vmem:[%s205 + $0x1c] sm:$0xf]
      %v3274 = vld [vmem:[%s205 + $0x20] sm:$0x1]
      %v3275 = vld [vmem:[%s205 + $0x24] sm:$0xe]
      %v3276 = vld [vmem:[%s205 + $0x28] sm:$0xf]
      %v3277 = vld [vmem:[%s205 + $0x2c] sm:$0x1]
      %v3290 = vrot.slane %v3266, 5
      %v3291 = vrot.slane %v3290, 4
      %v3292 = vrot.slane %v3267, 5
      %v3293 = vsel %vm2545, %v3291, %v3292
      %v3294 = vrot.slane %v3292, 4
      %v3295 = vrot.slane %v3268, 5
      %v3296 = vsel %vm2545, %v3294, %v3295
      %v3297 = vrot.slane %v3269, 5
      %v3298 = vrot.slane %v3297, 4
      %v3299 = vrot.slane %v3270, 5
      %v3300 = vsel %vm2545, %v3298, %v3299
      %v3301 = vrot.slane %v3299, 4
      %v3302 = vrot.slane %v3271, 5
      %v3303 = vsel %vm2545, %v3301, %v3302
      %v3304 = vrot.slane %v3272, 5
      %v3305 = vrot.slane %v3304, 4
      %v3306 = vrot.slane %v3273, 5
      %v3307 = vsel %vm2545, %v3305, %v3306
      %v3308 = vrot.slane %v3306, 4
      %v3309 = vrot.slane %v3274, 5
      %v3310 = vsel %vm2545, %v3308, %v3309
      %v3311 = vrot.slane %v3275, 5
      %v3312 = vrot.slane %v3311, 4
      %v3313 = vrot.slane %v3276, 5
      %v3314 = vsel %vm2545, %v3312, %v3313
      %v3315 = vrot.slane %v3313, 4
      %v3316 = vrot.slane %v3277, 5
      %v3317 = vsel %vm2545, %v3315, %v3316
      %3318 = vrot.lane.b32.xlu0 %v3293, 126
      %v3319 = vpop.permute.xlu0 %3318
      %3320 = vrot.lane.b32.xlu0 %v3296, 126
      %v3321 = vpop.permute.xlu0 %3320
      %3322 = vrot.lane.b32.xlu0 %v3300, 126
      %v3323 = vpop.permute.xlu0 %3322
      %3324 = vrot.lane.b32.xlu0 %v3303, 126
      %v3325 = vpop.permute.xlu0 %3324
      %3326 = vrot.lane.b32.xlu0 %v3307, 126
      %v3327 = vpop.permute.xlu0 %3326
      %3328 = vrot.lane.b32.xlu0 %v3310, 126
      %v3329 = vpop.permute.xlu0 %3328
      %3330 = vrot.lane.b32.xlu0 %v3314, 126
      %v3331 = vpop.permute.xlu0 %3330
      %3332 = vrot.lane.b32.xlu0 %v3317, 126
      %v3333 = vpop.permute.xlu0 %3332
      %v3336 = vpack.i.b16 %v3323, %v3319
      %v3337 = vshrl.u32 %v3319, 16
      %v3338 = vshrl.u32 %v3323, 16
      %v3339 = vpack.i.b16 %v3338, %v3337
      %v3342 = vpack.i.b16 %v3331, %v3327
      %v3343 = vshrl.u32 %v3327, 16
      %v3344 = vshrl.u32 %v3331, 16
      %v3345 = vpack.i.b16 %v3344, %v3343
      %v3348 = vpack.i.b16 %v3325, %v3321
      %v3349 = vshrl.u32 %v3321, 16
      %v3350 = vshrl.u32 %v3325, 16
      %v3351 = vpack.i.b16 %v3350, %v3349
      %v3354 = vpack.i.b16 %v3333, %v3329
      %v3355 = vshrl.u32 %v3329, 16
      %v3356 = vshrl.u32 %v3333, 16
      %v3357 = vpack.i.b16 %v3356, %v3355
      %v3360 = vunpack.c.l.s4 1983009808
      %v3361 = vunpack.c.0.s8 %v3360
      %v3362 = vlaneseq
      %v3363 = vshrl.u32 %v3362, 7
      %v3364 = vsub.s32 %v3361, %v3363
      %v3365 = vrot.slane %v3336, %v3364
      %v3368 = vunpack.c.l.s4 1983009808
      %v3369 = vunpack.c.0.s8 %v3368
      %v3370 = vlaneseq
      %v3371 = vshrl.u32 %v3370, 7
      %v3372 = vsub.s32 %v3369, %v3371
      %v3373 = vrot.slane %v3342, %v3372
      %v3374 = vcombine.low %v3365, %v3373
      %v3375 = vcombine.high %v3365, %v3373
      %v3377 = vunpack.c.l.s4 1934713408
      %v3378 = vunpack.c.0.s8 %v3377
      %v3379 = vlaneseq
      %v3380 = vshrl.u32 %v3379, 7
      %v3381 = vsub.s32 %v3378, %v3380
      %v3382 = vrot.slane %v3374, %v3381
      %v3384 = vunpack.c.l.s4 1934713408
      %v3385 = vunpack.c.0.s8 %v3384
      %v3386 = vlaneseq
      %v3387 = vshrl.u32 %v3386, 7
      %v3388 = vsub.s32 %v3385, %v3387
      %v3389 = vrot.slane %v3375, %v3388
      %v3390 = vcombine.high %v3382, 0
      %v3391 = vcombine.high %v3389, 0
      %v3394 = vunpack.c.l.s4 1983009808
      %v3395 = vunpack.c.0.s8 %v3394
      %v3396 = vlaneseq
      %v3397 = vshrl.u32 %v3396, 7
      %v3398 = vsub.s32 %v3395, %v3397
      %v3399 = vrot.slane %v3339, %v3398
      %v3402 = vunpack.c.l.s4 1983009808
      %v3403 = vunpack.c.0.s8 %v3402
      %v3404 = vlaneseq
      %v3405 = vshrl.u32 %v3404, 7
      %v3406 = vsub.s32 %v3403, %v3405
      %v3407 = vrot.slane %v3345, %v3406
      %v3408 = vcombine.low %v3399, %v3407
      %v3409 = vcombine.high %v3399, %v3407
      %v3411 = vunpack.c.l.s4 1934713408
      %v3412 = vunpack.c.0.s8 %v3411
      %v3413 = vlaneseq
      %v3414 = vshrl.u32 %v3413, 7
      %v3415 = vsub.s32 %v3412, %v3414
      %v3416 = vrot.slane %v3408, %v3415
      %v3418 = vunpack.c.l.s4 1934713408
      %v3419 = vunpack.c.0.s8 %v3418
      %v3420 = vlaneseq
      %v3421 = vshrl.u32 %v3420, 7
      %v3422 = vsub.s32 %v3419, %v3421
      %v3423 = vrot.slane %v3409, %v3422
      %v3424 = vcombine.high %v3416, 0
      %v3425 = vcombine.high %v3423, 0
      %v3428 = vunpack.c.l.s4 1983009808
      %v3429 = vunpack.c.0.s8 %v3428
      %v3430 = vlaneseq
      %v3431 = vshrl.u32 %v3430, 7
      %v3432 = vsub.s32 %v3429, %v3431
      %v3433 = vrot.slane %v3348, %v3432
      %v3436 = vunpack.c.l.s4 1983009808
      %v3437 = vunpack.c.0.s8 %v3436
      %v3438 = vlaneseq
      %v3439 = vshrl.u32 %v3438, 7
      %v3440 = vsub.s32 %v3437, %v3439
      %v3441 = vrot.slane %v3354, %v3440
      %v3442 = vcombine.low %v3433, %v3441
      %v3443 = vcombine.high %v3433, %v3441
      %v3445 = vunpack.c.l.s4 1934713408
      %v3446 = vunpack.c.0.s8 %v3445
      %v3447 = vlaneseq
      %v3448 = vshrl.u32 %v3447, 7
      %v3449 = vsub.s32 %v3446, %v3448
      %v3450 = vrot.slane %v3442, %v3449
      %v3452 = vunpack.c.l.s4 1934713408
      %v3453 = vunpack.c.0.s8 %v3452
      %v3454 = vlaneseq
      %v3455 = vshrl.u32 %v3454, 7
      %v3456 = vsub.s32 %v3453, %v3455
      %v3457 = vrot.slane %v3443, %v3456
      %v3458 = vcombine.high %v3450, 0
      %v3459 = vcombine.high %v3457, 0
      %v3462 = vunpack.c.l.s4 1983009808
      %v3463 = vunpack.c.0.s8 %v3462
      %v3464 = vlaneseq
      %v3465 = vshrl.u32 %v3464, 7
      %v3466 = vsub.s32 %v3463, %v3465
      %v3467 = vrot.slane %v3351, %v3466
      %v3470 = vunpack.c.l.s4 1983009808
      %v3471 = vunpack.c.0.s8 %v3470
      %v3472 = vlaneseq
      %v3473 = vshrl.u32 %v3472, 7
      %v3474 = vsub.s32 %v3471, %v3473
      %v3475 = vrot.slane %v3357, %v3474
      %v3476 = vcombine.low %v3467, %v3475
      %v3477 = vcombine.high %v3467, %v3475
      %v3479 = vunpack.c.l.s4 1934713408
      %v3480 = vunpack.c.0.s8 %v3479
      %v3481 = vlaneseq
      %v3482 = vshrl.u32 %v3481, 7
      %v3483 = vsub.s32 %v3480, %v3482
      %v3484 = vrot.slane %v3476, %v3483
      %v3486 = vunpack.c.l.s4 1934713408
      %v3487 = vunpack.c.0.s8 %v3486
      %v3488 = vlaneseq
      %v3489 = vshrl.u32 %v3488, 7
      %v3490 = vsub.s32 %v3487, %v3489
      %v3491 = vrot.slane %v3477, %v3490
      %v3492 = vcombine.high %v3484, 0
      %v3493 = vcombine.high %v3491, 0
      %v3495 = vunpack.c.l.b16 %v3416
      %v3496 = vpack.c.b16 %v3495, %v3495
      %3497 = vrot.lane.b32.xlu0 %v3496, 16
      %v3498 = vpop.permute.xlu0 %3497
      %v3500 = vunpack.c.l.b16 %v3390
      %v3501 = vpack.c.b16 %v3500, %v3500
      %3502 = vrot.lane.b32.xlu0 %v3501, 32
      %v3503 = vpop.permute.xlu0 %3502
      %v3505 = vunpack.c.l.b16 %v3424
      %v3506 = vpack.c.b16 %v3505, %v3505
      %3507 = vrot.lane.b32.xlu0 %v3506, 48
      %v3508 = vpop.permute.xlu0 %3507
      %v3510 = vunpack.c.l.b16 %v3389
      %v3511 = vpack.c.b16 %v3510, %v3510
      %3512 = vrot.lane.b32.xlu0 %v3511, 64
      %v3513 = vpop.permute.xlu0 %3512
      %v3515 = vunpack.c.l.b16 %v3423
      %v3516 = vpack.c.b16 %v3515, %v3515
      %3517 = vrot.lane.b32.xlu0 %v3516, 80
      %v3518 = vpop.permute.xlu0 %3517
      %v3520 = vunpack.c.l.b16 %v3391
      %v3521 = vpack.c.b16 %v3520, %v3520
      %3522 = vrot.lane.b32.xlu0 %v3521, 96
      %v3523 = vpop.permute.xlu0 %3522
      %v3525 = vunpack.c.l.b16 %v3425
      %v3526 = vpack.c.b16 %v3525, %v3525
      %3527 = vrot.lane.b32.xlu0 %v3526, 112
      %v3528 = vpop.permute.xlu0 %3527
      %v3530 = vunpack.c.l.b16 %v3484
      %v3531 = vpack.c.b16 %v3530, %v3530
      %3532 = vrot.lane.b32.xlu0 %v3531, 16
      %v3533 = vpop.permute.xlu0 %3532
      %v3535 = vunpack.c.l.b16 %v3458
      %v3536 = vpack.c.b16 %v3535, %v3535
      %3537 = vrot.lane.b32.xlu0 %v3536, 32
      %v3538 = vpop.permute.xlu0 %3537
      %v3540 = vunpack.c.l.b16 %v3492
      %v3541 = vpack.c.b16 %v3540, %v3540
      %3542 = vrot.lane.b32.xlu0 %v3541, 48
      %v3543 = vpop.permute.xlu0 %3542
      %v3545 = vunpack.c.l.b16 %v3457
      %v3546 = vpack.c.b16 %v3545, %v3545
      %3547 = vrot.lane.b32.xlu0 %v3546, 64
      %v3548 = vpop.permute.xlu0 %3547
      %v3550 = vunpack.c.l.b16 %v3491
      %v3551 = vpack.c.b16 %v3550, %v3550
      %3552 = vrot.lane.b32.xlu0 %v3551, 80
      %v3553 = vpop.permute.xlu0 %3552
      %v3555 = vunpack.c.l.b16 %v3459
      %v3556 = vpack.c.b16 %v3555, %v3555
      %3557 = vrot.lane.b32.xlu0 %v3556, 96
      %v3558 = vpop.permute.xlu0 %3557
      %v3560 = vunpack.c.l.b16 %v3493
      %v3561 = vpack.c.b16 %v3560, %v3560
      %3562 = vrot.lane.b32.xlu0 %v3561, 112
      %v3563 = vpop.permute.xlu0 %3562
      %v3566 = vsel %vm458, %v3382, %v3498
      %v3568 = vsel %vm462, %v3566, %v3503
      %v3570 = vsel %vm465, %v3568, %v3508
      %v3572 = vsel %vm468, %v3570, %v3513
      %v3574 = vsel %vm471, %v3572, %v3518
      %v3576 = vsel %vm474, %v3574, %v3523
      %v3578 = vsel %vm477, %v3576, %v3528
      %v3581 = vsel %vm458, %v3450, %v3533
      %v3583 = vsel %vm462, %v3581, %v3538
      %v3585 = vsel %vm465, %v3583, %v3543
      %v3587 = vsel %vm468, %v3585, %v3548
      %v3589 = vsel %vm471, %v3587, %v3553
      %v3591 = vsel %vm474, %v3589, %v3558
      %v3593 = vsel %vm477, %v3591, %v3563
      %s3594 = scalar_lea.vmem %s1, 32
      %v3595 = vld [vmem:[%s3594] sm:$0xf]
      %v3597 = vsel %vm782, %v3595, 0
      %v3599 = vsel %vm786, %v3578, 0
      %v3601 = vsel %vm786, %v3593, 0
      %3603 = vmatprep.subr.bf16.mxu0 %v3601
      %3604 = vmatpush1.bf16.msra.mxu0 %v3599
      %3605 = vmatprep.subr.bf16.mxu0 0
      %3606 = vmatpush1.bf16.msra.mxu0 0
      %3607 = vmatprep.subr.bf16.mxu0 0
      %3608 = vmatpush1.bf16.msra.mxu0 0
      %3609 = vmatprep.subr.bf16.mxu0 0
      %3610 = vmatpush1.bf16.msra.mxu0 0
      %3611 = vmatprep.subr.bf16.mxu0 0
      %3612 = vmatpush1.bf16.msra.mxu0 0
      %3613 = vmatprep.subr.bf16.mxu0 0
      %3614 = vmatpush1.bf16.msra.mxu0 0
      %3615 = vmatprep.subr.bf16.mxu0 0
      %3616 = vmatpush1.bf16.msra.mxu0 0
      %3617 = vmatprep.subr.bf16.mxu0 0
      %3618 = vmatpush1.bf16.msra.mxu0 0
      %3619 = vmatprep.subr.bf16.mxu0 0
      %3620 = vmatpush1.bf16.msra.mxu0 0
      %3621 = vmatprep.subr.bf16.mxu0 0
      %3622 = vmatpush1.bf16.msra.mxu0 0
      %3623 = vmatprep.subr.bf16.mxu0 0
      %3624 = vmatpush1.bf16.msra.mxu0 0
      %3625 = vmatprep.subr.bf16.mxu0 0
      %3626 = vmatpush1.bf16.msra.mxu0 0
      %3627 = vmatprep.subr.bf16.mxu0 0
      %3628 = vmatpush1.bf16.msra.mxu0 0
      %3629 = vmatprep.subr.bf16.mxu0 0
      %3630 = vmatpush1.bf16.msra.mxu0 0
      %3631 = vmatprep.subr.bf16.mxu0 0
      %3632 = vmatpush1.bf16.msra.mxu0 0
      %3633 = vmatprep.subr.bf16.mxu0 0
      %3634 = vmatpush1.bf16.msra.mxu0 0
      %3635 = vmatprep.mubr.bf16.mxu0 0
      %3636 = vmatmul.mubr.bf16.gmra.mrb[0].mxu0 %v3597
      %v3637 = vpop.f32.mrb[0].mxu0
      %v3638 = vadd.f32 0.0, %v3637
      %v3639 = vpop.f32.mrb[0].mxu0
      %v3640 = vadd.f32 0.0, %v3639
      %v3641 = vpop.f32.mrb[0].mxu0
      %v3642 = vpop.f32.mrb[0].mxu0
      %3643 = vdwg.mxu0
      %v3644 = vadd.f32 %v3264, %v3638
      %v3645 = vadd.f32 %v3265, %v3640
      %v3646 = vpack.c.bf16 %v3644, %v3644
      %v3647 = vpack.c.bf16 %v3645, %v3645
      %v3650 = vunpack.c.l.b16 %v3646
      %v3651 = vunpack.c.l.b16 %v3647
      %v3652 = vpack.c.b16 %v3651, %v3650
      %3654 = vst [vmem:[%s210] sm:$0xff] %v3652
      %v3655 = vadd.f32 %v3644, %v3645
      %3656 = vadd.xlane.f32.xlu0 %v3655
      %v3657 = vpop.xlane.xlu0 %3656
      %vm3658 = vcmask 7168
      %3659 = vst.msk [vmem:[%s214] sm:$0xff] %vm3658, %v3657
      %v3660 = vmul.f32 %v3644, %v3644
      %v3661 = vmul.f32 %v3645, %v3645
      %v3662 = vadd.f32 %v3660, %v3661
      %3663 = vadd.xlane.f32.xlu0 %v3662
      %v3664 = vpop.xlane.xlu0 %3663
      %3665 = vst.msk [vmem:[%s218] sm:$0xff] %vm3658, %v3664
      %p3666 = scmp.lt.s32.totalorder %s16, 1
      %s3667 = scalar_select %p3666, %s16, 1
      %s3668 = smul.addr %s3667, 2
      %s3669 = smul.addr %s3668, 4
      %s3670 = scalar_lea.vmem %s2, %s3669
      %p3671 = scmp.lt.s32.totalorder %s16, 1
      %s3672 = scalar_select %p3671, %s16, 1
      %s3673 = smul.addr %s3672, 8
      %s3674 = scalar_lea.vmem %s3, %s3673
      %p3675 = scmp.lt.s32.totalorder %s16, 1
      %s3676 = scalar_select %p3675, %s16, 1
      %s3677 = smul.addr %s3676, 8
      %s3678 = scalar_lea.vmem %s4, %s3677
      // Predicated region
      $region29: #{preprocess_block.2} parent=27 // pred_check
        %p3679 = pneg %p81
      $region30: #{preprocess_block.2} parent=27 // pred_check_branch
        %3681 = sbr.rel (%p3679) target = $region32
      $region31: #{preprocess_block.2} parent=27 // pred_region
        _
      $region32: #{preprocess_block.2} parent=27 // pred_fallthru
        _
      // Predicated region
      $region33: #{preprocess_block.2} parent=27 // pred_check
        %p3682 = pneg %p107
      $region34: #{preprocess_block.2} parent=27 // pred_check_branch
        %3684 = sbr.rel (%p3682) target = $region36
      $region35: #{preprocess_block.2} parent=27 // pred_region
        _
      $region36: #{preprocess_block.2} parent=27 // pred_fallthru
        _
      // Predicated region
      $region37: #{preprocess_block.2} parent=27 // pred_check
        %p3685 = pneg %p133
      $region38: #{preprocess_block.2} parent=27 // pred_check_branch
        %3687 = sbr.rel (%p3685) target = $region40
      $region39: #{preprocess_block.2} parent=27 // pred_region
        _
      $region40: #{preprocess_block.2} parent=27 // pred_fallthru
        _
    $region28: #{preprocess_block.2} parent=5 // pred_fallthru
      _
    %p3688 = scmp.le.s32.totalorder 2, %s11
    // Predicated region
    $region41: #{preprocess_block.2} parent=5 // pred_check
      %p3689 = pneg %p3688
    $region42: #{preprocess_block.2} parent=5 // pred_check_branch
      %3691 = sbr.rel (%p3689) target = $region44
    $region43: #{preprocess_block.2} parent=5 // pred_region
      %s3692 = ssub.s32 %s11, 2
      // Predicated region
      $region45: #{preprocess_block.2} parent=43 // pred_check
        %p3693 = pneg %p87
      $region46: #{preprocess_block.2} parent=43 // pred_check_branch
        %3695 = sbr.rel (%p3693) target = $region48
      $region47: #{preprocess_block.2} parent=43 // pred_region
        %p3696 = scmp.lt.s32.totalorder %s17, 1
        %s3697 = scalar_select %p3696, %s17, 1
        %s3698 = smul.addr %s3697, 2
        %s3699 = smul.addr %s3698, 4
        %s3700 = scalar_lea.vmem %s2, %s3699
      $region48: #{preprocess_block.2} parent=43 // pred_fallthru
        _
      // Predicated region
      $region49: #{preprocess_block.2} parent=43 // pred_check
        %p3701 = pneg %p113
      $region50: #{preprocess_block.2} parent=43 // pred_check_branch
        %3703 = sbr.rel (%p3701) target = $region52
      $region51: #{preprocess_block.2} parent=43 // pred_region
        %p3704 = scmp.lt.s32.totalorder %s17, 1
        %s3705 = scalar_select %p3704, %s17, 1
        %s3706 = smul.addr %s3705, 8
        %s3707 = scalar_lea.vmem %s3, %s3706
      $region52: #{preprocess_block.2} parent=43 // pred_fallthru
        _
      // Predicated region
      $region53: #{preprocess_block.2} parent=43 // pred_check
        %p3708 = pneg %p139
      $region54: #{preprocess_block.2} parent=43 // pred_check_branch
        %3710 = sbr.rel (%p3708) target = $region56
      $region55: #{preprocess_block.2} parent=43 // pred_region
        %p3711 = scmp.lt.s32.totalorder %s17, 1
        %s3712 = scalar_select %p3711, %s17, 1
        %s3713 = smul.addr %s3712, 8
        %s3714 = scalar_lea.vmem %s4, %s3713
      $region56: #{preprocess_block.2} parent=43 // pred_fallthru
        _
    $region44: #{preprocess_block.2} parent=5 // pred_fallthru
      _
  $region6: #{preprocess_block.2} parent=0 // loop_footer
    %s15 = sadd.s32 1, %s11
  $region7: #{preprocess_block.2} parent=0 // loop_footer_branch
    %10 = sbr.rel target = $region3
  $region8: #{preprocess_block.2} parent=0 // loop_exit
    _

</llo_original>
